<compile_context>
chip_gen: v7x
topology: tpu7x:2x2x1
jax: 0.10.0
libtpu: 0.0.40
codegen_flags: <defaults>
</compile_context>

<pallas_src>
import functools

import jax
import jax.numpy as jnp
from jax.experimental import pallas as pl
from jax.experimental.pallas import tpu as pltpu


def _round_up(x, m):
    return (x + m - 1) // m * m


def _device_kind():
    try:
        return jax.devices()[0].device_kind.lower()
    except Exception:
        return ""


def _is_v5():
    # v5e/v5p: no bf16 VPU, 4x128 MXU, 16 MiB default scoped VMEM.
    return "v5" in _device_kind()


# --------------------------------------------------------------------------
# Kernel: fused 4-layer MLP (3x ReLU + final linear) on one batch tile.
# --------------------------------------------------------------------------
def generator_kernel(z_ref,
                     w1_ref, b1_ref,
                     w2_ref, b2_ref,
                     w3_ref, b3_ref,
                     w4_ref, b4_ref,
                     out_ref):
    def hidden_layer(x_bf16, w_ref, b_ref):
        # MXU matmul with f32 accumulation; epilogue (bias + ReLU) in the
        # bias' dtype (bf16 on v6e/v7x, f32 on v5e), then bf16 for the next
        # matmul input.  ReLU commutes exactly with the downcast.
        acc = jnp.dot(x_bf16, w_ref[...], preferred_element_type=jnp.float32)
        h = acc.astype(b_ref.dtype) + b_ref[...]
        return jnp.maximum(h, 0.0).astype(jnp.bfloat16)

    x = z_ref[...].astype(jnp.bfloat16)
    x = hidden_layer(x, w1_ref, b1_ref)
    x = hidden_layer(x, w2_ref, b2_ref)
    x = hidden_layer(x, w3_ref, b3_ref)
    out = jnp.dot(x, w4_ref[...], preferred_element_type=jnp.float32) + b4_ref[...]
    out_ref[...] = out.astype(out_ref.dtype)


# --------------------------------------------------------------------------
# One-time parameter preparation (hoisted out of the per-call path).
# --------------------------------------------------------------------------
def prepare_params(params, *, noise_dim, seq_length, feature_size,
                   hidden_bias_dtype=None):
    """Pad + cast the Linear weights ONCE.  Pass the result to
    generator_forward.  (Doing this per call costs more HBM traffic than the
    kernel's own weight DMA.)"""
    if hidden_bias_dtype is None:
        hidden_bias_dtype = jnp.float32 if _is_v5() else jnp.bfloat16

    w1, b1, w2, b2, w3, b3, w4, b4 = params
    out_dim = seq_length * feature_size
    k_pad = _round_up(noise_dim, 128)      # 100 -> 128: aligned first-K tile
    n_pad = _round_up(out_dim, 128)        # 400 -> 512: lane-dense out stores

    w1_p = jnp.pad(w1, ((0, k_pad - noise_dim), (0, 0))).astype(jnp.bfloat16)
    w2_c = w2.astype(jnp.bfloat16)
    w3_c = w3.astype(jnp.bfloat16)
    w4_p = jnp.pad(w4, ((0, 0), (0, n_pad - out_dim))).astype(jnp.bfloat16)
    b4_p = jnp.pad(b4, ((0, 0), (0, n_pad - out_dim))).astype(jnp.float32)

    return (w1_p, b1.astype(hidden_bias_dtype),
            w2_c, b2.astype(hidden_bias_dtype),
            w3_c, b3.astype(hidden_bias_dtype),
            w4_p, b4_p)


def _pick_batch_tile(batch):
    """Adaptive batch tile: minimal padding for small B, <=256-row tiles
    (128 on v5e) for large B, and >=2 grid points once padded B >= 256 so the
    'parallel' axis shards across both v7x TensorCores."""
    cap = 128 if _is_v5() else 256
    b = _round_up(max(batch, 1), 8)
    if b <= 128:
        return b
    n_tiles = max(2, -(-b // cap))
    return _round_up(-(-b // n_tiles), 8)


# --------------------------------------------------------------------------
# Forward wrapper.
# --------------------------------------------------------------------------
def generator_forward(z, prepared_params, *, seq_length, feature_size,
                      batch_tile=None):
    """Runs the fused MLP Pallas kernel; returns (B, seq_length, feature_size).

    `prepared_params` must come from prepare_params (padded, bf16 weights)."""
    w1, b1, w2, b2, w3, b3, w4, b4 = prepared_params
    B, noise_dim = z.shape
    out_dim = seq_length * feature_size
    k_pad, h1 = w1.shape
    h2 = w2.shape[1]
    h3 = w3.shape[1]
    n_pad = w4.shape[1]
    assert noise_dim <= k_pad and out_dim <= n_pad

    if batch_tile is None:
        batch_tile = _pick_batch_tile(B)
    b_pad = _round_up(B, batch_tile)

    # Only the (tiny) noise tensor is padded per call; padded rows compute
    # relu(bias) garbage and are sliced off below.
    z_p = jnp.pad(z.astype(jnp.float32),
                  ((0, b_pad - B), (0, k_pad - noise_dim)))

    grid = (b_pad // batch_tile,)

    def batch_map(i):
        return (i, 0)

    def fixed_map(i):
        return (0, 0)

    flops = 2 * b_pad * (k_pad * h1 + h1 * h2 + h2 * h3 + h3 * n_pad)
    bytes_accessed = (
        2 * (k_pad * h1 + h1 * h2 + h2 * h3 + h3 * n_pad)        # bf16 weights
        + b1.dtype.itemsize * (h1 + h2 + h3) + 4 * n_pad         # biases
        + 4 * b_pad * (k_pad + n_pad))                           # z in + out

    # All weights stay VMEM-resident (~2.3 MB bf16 + activations), far under
    # the scoped default on every generation, so no vmem_limit_bytes needed.
    flat = pl.pallas_call(
        generator_kernel,
        out_shape=jax.ShapeDtypeStruct((b_pad, n_pad), jnp.float32),
        grid_spec=pltpu.PrefetchScalarGridSpec(
            num_scalar_prefetch=0,
            grid=grid,
            in_specs=[
                pl.BlockSpec((batch_tile, k_pad), batch_map),   # z tile
                pl.BlockSpec(w1.shape, fixed_map),              # w1 (bf16, K-padded)
                pl.BlockSpec(b1.shape, fixed_map),              # b1
                pl.BlockSpec(w2.shape, fixed_map),              # w2 (bf16)
                pl.BlockSpec(b2.shape, fixed_map),              # b2
                pl.BlockSpec(w3.shape, fixed_map),              # w3 (bf16)
                pl.BlockSpec(b3.shape, fixed_map),              # b3
                pl.BlockSpec(w4.shape, fixed_map),              # w4 (bf16, N-padded)
                pl.BlockSpec(b4.shape, fixed_map),              # b4 (f32, N-padded)
            ],
            out_specs=pl.BlockSpec((batch_tile, n_pad), batch_map),
        ),
        compiler_params=pltpu.CompilerParams(
            dimension_semantics=("parallel",),
        ),
        cost_estimate=pl.CostEstimate(
            flops=flops, transcendentals=0, bytes_accessed=bytes_accessed),
    )(z_p, w1, b1, w2, b2, w3, b3, w4, b4)

    return flat[:B, :out_dim].reshape(B, seq_length, feature_size)


# --------------------------------------------------------------------------
# Parameter init (matches nn.Linear shapes, stored as (in, out)) + reference.
# --------------------------------------------------------------------------
def init_params(key, noise_dim, seq_length, feature_size):
    dims = [noise_dim, 256, 512, 1024, seq_length * feature_size]
    params = []
    for i in range(4):
        key, kw, kb = jax.random.split(key, 3)
        fan_in = dims[i]
        bound = 1.0 / jnp.sqrt(fan_in)
        w = jax.random.uniform(kw, (dims[i], dims[i + 1]), jnp.float32, -bound, bound)
        b = jax.random.uniform(kb, (1, dims[i + 1]), jnp.float32, -bound, bound)
        params.extend([w, b])
    return tuple(params)


def reference_forward(z, params, seq_length, feature_size):
    w1, b1, w2, b2, w3, b3, w4, b4 = params
    x = jnp.maximum(z @ w1 + b1, 0.0)
    x = jnp.maximum(x @ w2 + b2, 0.0)
    x = jnp.maximum(x @ w3 + b3, 0.0)
    x = x @ w4 + b4
    return x.reshape(z.shape[0], seq_length, feature_size)


if __name__ == "__main__":
    noise_dim = 100
    feature_size = 4
    seq_length = 100
    batch = 8

    key = jax.random.PRNGKey(0)
    key, kz = jax.random.split(key)
    z = jax.random.normal(kz, (batch, noise_dim), jnp.float32)

    params = init_params(key, noise_dim, seq_length, feature_size)

    # One-time weight preparation (padding + bf16 cast) -- NOT per forward.
    prepared = jax.block_until_ready(
        prepare_params(params, noise_dim=noise_dim, seq_length=seq_length,
                       feature_size=feature_size))

    fwd = jax.jit(functools.partial(
        generator_forward, seq_length=seq_length, feature_size=feature_size))
    out = jax.block_until_ready(fwd(z, prepared))

    # Sanity check against plain-JAX f32 reference (bf16 weights / epilogue on
    # the MXU/VPU give ~1e-3-level deviations -> loose tolerance).
    ref = reference_forward(z, params, seq_length, feature_size)
    assert out.shape == (batch, seq_length, feature_size)
    max_err = float(jnp.max(jnp.abs(out - ref)))
    assert jnp.allclose(out, ref, atol=2e-2, rtol=2e-2), max_err

    print("KERNEL_OK")
</pallas_src>

<mosaic_0001>
module attributes {stable_mosaic.version = 11 : i64} {
  func.func @generator_kernel(%arg0: i32, %arg1: memref<8x128xf32, #tpu.memory_space<vmem>>, %arg2: memref<128x256xbf16, #tpu.memory_space<vmem>>, %arg3: memref<1x256xbf16, #tpu.memory_space<vmem>>, %arg4: memref<256x512xbf16, #tpu.memory_space<vmem>>, %arg5: memref<1x512xbf16, #tpu.memory_space<vmem>>, %arg6: memref<512x1024xbf16, #tpu.memory_space<vmem>>, %arg7: memref<1x1024xbf16, #tpu.memory_space<vmem>>, %arg8: memref<1024x512xbf16, #tpu.memory_space<vmem>>, %arg9: memref<1x512xf32, #tpu.memory_space<vmem>>, %arg10: memref<8x512xf32, #tpu.memory_space<vmem>>) attributes {dimension_semantics = [#tpu.dimension_semantics<parallel>], iteration_bounds = array<i64: 1>, scalar_prefetch = 0 : i64, scratch_operands = 0 : i64, tpu.core_type = #tpu.core_type<tc>, window_params = [{transform_indices = @transform_0, window_bounds = array<i64: 8, 128>}, {pipeline_mode = #tpu.pipeline_mode<synchronous>, transform_indices = @transform_1, window_bounds = array<i64: 128, 256>}, {pipeline_mode = #tpu.pipeline_mode<synchronous>, transform_indices = @transform_2, window_bounds = array<i64: 1, 256>}, {pipeline_mode = #tpu.pipeline_mode<synchronous>, transform_indices = @transform_3, window_bounds = array<i64: 256, 512>}, {pipeline_mode = #tpu.pipeline_mode<synchronous>, transform_indices = @transform_4, window_bounds = array<i64: 1, 512>}, {pipeline_mode = #tpu.pipeline_mode<synchronous>, transform_indices = @transform_5, window_bounds = array<i64: 512, 1024>}, {pipeline_mode = #tpu.pipeline_mode<synchronous>, transform_indices = @transform_6, window_bounds = array<i64: 1, 1024>}, {pipeline_mode = #tpu.pipeline_mode<synchronous>, transform_indices = @transform_7, window_bounds = array<i64: 1024, 512>}, {pipeline_mode = #tpu.pipeline_mode<synchronous>, transform_indices = @transform_8, window_bounds = array<i64: 1, 512>}, {transform_indices = @transform_9, window_bounds = array<i64: 8, 512>}]} {
    %c0 = arith.constant 0 : index
    %c0_0 = arith.constant 0 : index
    %0 = vector.load %arg1[%c0, %c0_0] : memref<8x128xf32, #tpu.memory_space<vmem>>, vector<8x128xf32>
    %1 = arith.truncf %0 : vector<8x128xf32> to vector<8x128xbf16>
    %c0_1 = arith.constant 0 : index
    %c0_2 = arith.constant 0 : index
    %2 = vector.load %arg2[%c0_1, %c0_2] : memref<128x256xbf16, #tpu.memory_space<vmem>>, vector<128x256xbf16>
    %cst = arith.constant dense<0.000000e+00> : vector<8x256xf32>
    %3 = tpu.matmul %1, %2, %cst {dimension_numbers = #tpu.dot_dimension_numbers<[1], [0], [0], [1], [0, 0, 1, 1], [], []>} : vector<8x128xbf16>, vector<128x256xbf16>, vector<8x256xf32> -> vector<8x256xf32>
    %4 = arith.truncf %3 : vector<8x256xf32> to vector<8x256xbf16>
    %c0_3 = arith.constant 0 : index
    %c0_4 = arith.constant 0 : index
    %5 = vector.load %arg3[%c0_3, %c0_4] : memref<1x256xbf16, #tpu.memory_space<vmem>>, vector<1x256xbf16>
    %6 = vector.broadcast %5 : vector<1x256xbf16> to vector<8x256xbf16>
    %7 = arith.addf %4, %6 : vector<8x256xbf16>
    %cst_5 = arith.constant 0.000000e+00 : bf16
    %8 = vector.broadcast %cst_5 : bf16 to vector<8x256xbf16>
    %9 = arith.maximumf %7, %8 : vector<8x256xbf16>
    %c0_6 = arith.constant 0 : index
    %c0_7 = arith.constant 0 : index
    %10 = vector.load %arg4[%c0_6, %c0_7] : memref<256x512xbf16, #tpu.memory_space<vmem>>, vector<256x512xbf16>
    %cst_8 = arith.constant dense<0.000000e+00> : vector<8x512xf32>
    %11 = tpu.matmul %9, %10, %cst_8 {dimension_numbers = #tpu.dot_dimension_numbers<[1], [0], [0], [1], [0, 0, 1, 1], [], []>} : vector<8x256xbf16>, vector<256x512xbf16>, vector<8x512xf32> -> vector<8x512xf32>
    %12 = arith.truncf %11 : vector<8x512xf32> to vector<8x512xbf16>
    %c0_9 = arith.constant 0 : index
    %c0_10 = arith.constant 0 : index
    %13 = vector.load %arg5[%c0_9, %c0_10] : memref<1x512xbf16, #tpu.memory_space<vmem>>, vector<1x512xbf16>
    %14 = vector.broadcast %13 : vector<1x512xbf16> to vector<8x512xbf16>
    %15 = arith.addf %12, %14 : vector<8x512xbf16>
    %cst_11 = arith.constant 0.000000e+00 : bf16
    %16 = vector.broadcast %cst_11 : bf16 to vector<8x512xbf16>
    %17 = arith.maximumf %15, %16 : vector<8x512xbf16>
    %c0_12 = arith.constant 0 : index
    %c0_13 = arith.constant 0 : index
    %18 = vector.load %arg6[%c0_12, %c0_13] : memref<512x1024xbf16, #tpu.memory_space<vmem>>, vector<512x1024xbf16>
    %cst_14 = arith.constant dense<0.000000e+00> : vector<8x1024xf32>
    %19 = tpu.matmul %17, %18, %cst_14 {dimension_numbers = #tpu.dot_dimension_numbers<[1], [0], [0], [1], [0, 0, 1, 1], [], []>} : vector<8x512xbf16>, vector<512x1024xbf16>, vector<8x1024xf32> -> vector<8x1024xf32>
    %20 = arith.truncf %19 : vector<8x1024xf32> to vector<8x1024xbf16>
    %c0_15 = arith.constant 0 : index
    %c0_16 = arith.constant 0 : index
    %21 = vector.load %arg7[%c0_15, %c0_16] : memref<1x1024xbf16, #tpu.memory_space<vmem>>, vector<1x1024xbf16>
    %22 = vector.broadcast %21 : vector<1x1024xbf16> to vector<8x1024xbf16>
    %23 = arith.addf %20, %22 : vector<8x1024xbf16>
    %cst_17 = arith.constant 0.000000e+00 : bf16
    %24 = vector.broadcast %cst_17 : bf16 to vector<8x1024xbf16>
    %25 = arith.maximumf %23, %24 : vector<8x1024xbf16>
    %c0_18 = arith.constant 0 : index
    %c0_19 = arith.constant 0 : index
    %26 = vector.load %arg8[%c0_18, %c0_19] : memref<1024x512xbf16, #tpu.memory_space<vmem>>, vector<1024x512xbf16>
    %cst_20 = arith.constant dense<0.000000e+00> : vector<8x512xf32>
    %27 = tpu.matmul %25, %26, %cst_20 {dimension_numbers = #tpu.dot_dimension_numbers<[1], [0], [0], [1], [0, 0, 1, 1], [], []>} : vector<8x1024xbf16>, vector<1024x512xbf16>, vector<8x512xf32> -> vector<8x512xf32>
    %c0_21 = arith.constant 0 : index
    %c0_22 = arith.constant 0 : index
    %28 = vector.load %arg9[%c0_21, %c0_22] : memref<1x512xf32, #tpu.memory_space<vmem>>, vector<1x512xf32>
    %29 = vector.broadcast %28 : vector<1x512xf32> to vector<8x512xf32>
    %30 = arith.addf %27, %29 : vector<8x512xf32>
    %c0_23 = arith.constant 0 : index
    %c0_24 = arith.constant 0 : index
    %31 = vector.load %arg10[%c0_23, %c0_24] : memref<8x512xf32, #tpu.memory_space<vmem>>, vector<8x512xf32>
    tpu.vector_store %arg10[%c0_23, %c0_24], %30 {strides = array<i32>} : memref<8x512xf32, #tpu.memory_space<vmem>>, vector<8x512xf32>,
    return
  }
  func.func @transform_0(%arg0: i32) -> (i32, i32) {
    %c0_i32 = arith.constant 0 : i32
    %c0_i32_0 = arith.constant 0 : i32
    return %arg0, %c0_i32 : i32, i32
  }
  func.func @transform_1(%arg0: i32) -> (i32, i32) {
    %c0_i32 = arith.constant 0 : i32
    %c0_i32_0 = arith.constant 0 : i32
    %c0_i32_1 = arith.constant 0 : i32
    return %c0_i32, %c0_i32_0 : i32, i32
  }
  func.func @transform_2(%arg0: i32) -> (i32, i32) {
    %c0_i32 = arith.constant 0 : i32
    %c0_i32_0 = arith.constant 0 : i32
    %c0_i32_1 = arith.constant 0 : i32
    return %c0_i32, %c0_i32_0 : i32, i32
  }
  func.func @transform_3(%arg0: i32) -> (i32, i32) {
    %c0_i32 = arith.constant 0 : i32
    %c0_i32_0 = arith.constant 0 : i32
    %c0_i32_1 = arith.constant 0 : i32
    return %c0_i32, %c0_i32_0 : i32, i32
  }
  func.func @transform_4(%arg0: i32) -> (i32, i32) {
    %c0_i32 = arith.constant 0 : i32
    %c0_i32_0 = arith.constant 0 : i32
    %c0_i32_1 = arith.constant 0 : i32
    return %c0_i32, %c0_i32_0 : i32, i32
  }
  func.func @transform_5(%arg0: i32) -> (i32, i32) {
    %c0_i32 = arith.constant 0 : i32
    %c0_i32_0 = arith.constant 0 : i32
    %c0_i32_1 = arith.constant 0 : i32
    return %c0_i32, %c0_i32_0 : i32, i32
  }
  func.func @transform_6(%arg0: i32) -> (i32, i32) {
    %c0_i32 = arith.constant 0 : i32
    %c0_i32_0 = arith.constant 0 : i32
    %c0_i32_1 = arith.constant 0 : i32
    return %c0_i32, %c0_i32_0 : i32, i32
  }
  func.func @transform_7(%arg0: i32) -> (i32, i32) {
    %c0_i32 = arith.constant 0 : i32
    %c0_i32_0 = arith.constant 0 : i32
    %c0_i32_1 = arith.constant 0 : i32
    return %c0_i32, %c0_i32_0 : i32, i32
  }
  func.func @transform_8(%arg0: i32) -> (i32, i32) {
    %c0_i32 = arith.constant 0 : i32
    %c0_i32_0 = arith.constant 0 : i32
    %c0_i32_1 = arith.constant 0 : i32
    return %c0_i32, %c0_i32_0 : i32, i32
  }
  func.func @transform_9(%arg0: i32) -> (i32, i32) {
    %c0_i32 = arith.constant 0 : i32
    %c0_i32_0 = arith.constant 0 : i32
    return %arg0, %c0_i32 : i32, i32
  }
}

</mosaic_0001>

<llo_original>
// kernel: generator_forward.1
$region0: #{generator_forward.1}
  #allocation0 [shape = 'u32[]', space=smem, size = 0x4, offset = 0x4, fixed_abs, tag = 'smem constant byte address 0x4 - core index']
  #allocation1 [shape = 'u32[144,128]{1,0:T(1,128)}', space=vmem, size = 0x12000, scoped, tag = 'internal scratch']
  %s0 = inlined_call_operand.vmem [shape: f32[8,128], index: 0, kind: input, shape index: {}]
  %s1 = inlined_call_operand.hbm [shape: bf16[128,256], index: 1, kind: input, shape index: {}]
  %s2 = inlined_call_operand.vmem [shape: bf16[1,256], index: 2, kind: input, shape index: {}]
  %s3 = inlined_call_operand.hbm [shape: bf16[256,512], index: 3, kind: input, shape index: {}]
  %s4 = inlined_call_operand.vmem [shape: bf16[1,512], index: 4, kind: input, shape index: {}]
  %s5 = inlined_call_operand.hbm [shape: bf16[512,1024], index: 5, kind: input, shape index: {}]
  %s6 = inlined_call_operand.vmem [shape: bf16[1,1024], index: 6, kind: input, shape index: {}]
  %s7 = inlined_call_operand.hbm [shape: bf16[1024,512], index: 7, kind: input, shape index: {}]
  %s8 = inlined_call_operand.vmem [shape: f32[1,512], index: 8, kind: input, shape index: {}]
  %s9 = inlined_call_operand.vmem [shape: f32[8,512], index: 9, kind: output, shape index: {}]
  %s10 = sld [smem:[#allocation0]]
  $region62: #{generator_forward.1} parent=0
    _
  %s12 = ssub.s32 1, %s10
  %s13 = scalar_select 0, %s12, %s10
  $region1: #{generator_forward.1} parent=0
    #allocation2 [shape = 'u8[65536]{0}', space=vmem, size = 0x10000, scoped, tag = 'input window, operand 1, single buffered']
    #allocation3 [shape = 's32[1]{0}', space=sflag, size = 0x4, scoped, tag = 'scoped memory for generator_forward.1']
    #allocation4 [shape = 'u8[262144]{0}', space=vmem, size = 0x40000, scoped, tag = 'input window, operand 3, single buffered']
    #allocation5 [shape = 's32[1]{0}', space=sflag, size = 0x4, scoped, tag = 'scoped memory for generator_forward.1']
    #allocation6 [shape = 'u8[1048576]{0}', space=vmem, size = 0x100000, scoped, tag = 'input window, operand 5, single buffered']
    #allocation7 [shape = 'u8[1048576]{0}', space=vmem, size = 0x100000, scoped, tag = 'input window, operand 7, single buffered']
    #allocation8 [shape = 's32[1]{0}', space=sflag, size = 0x4, scoped, tag = 'scoped memory for generator_forward.1']
    %14 = vsyncpa [#allocation3], 0
    %15 = vsyncpa [#allocation5], 0
    %16 = vsyncpa [#allocation8], 0
    // Predicated region
    $region2: #{generator_forward.1} parent=1 // pred_check
      _
    $region3: #{generator_forward.1} parent=1 // pred_check_branch
      %18 = sbr.rel (0) target = $region5
    $region4: #{generator_forward.1} parent=1 // pred_region
      _
    $region5: #{generator_forward.1} parent=1 // pred_fallthru
      _
    // Predicated region
    $region6: #{generator_forward.1} parent=1 // pred_check
      _
    $region7: #{generator_forward.1} parent=1 // pred_check_branch
      %20 = sbr.rel (0) target = $region9
    $region8: #{generator_forward.1} parent=1 // pred_region
      %s22 = ssub.s32 2048, 2048
      %23 = vsyncadd [#allocation3], %s22
      %s24 = sshll.u32 [#allocation2], 4
      %s25 = int_to_ptr.vmem [resolvable:$true] %s24
      %30 = dma.hbm_to_vmem [thread:$0]  %s1, 2048, %s25, [#allocation3], 128, 128, 8
    $region9: #{generator_forward.1} parent=1 // pred_fallthru
      _
    // Predicated region
    $region10: #{generator_forward.1} parent=1 // pred_check
      _
    $region11: #{generator_forward.1} parent=1 // pred_check_branch
      %32 = sbr.rel (0) target = $region13
    $region12: #{generator_forward.1} parent=1 // pred_region
      _
    $region13: #{generator_forward.1} parent=1 // pred_fallthru
      _
    // Predicated region
    $region14: #{generator_forward.1} parent=1 // pred_check
      _
    $region15: #{generator_forward.1} parent=1 // pred_check_branch
      %34 = sbr.rel (0) target = $region17
    $region16: #{generator_forward.1} parent=1 // pred_region
      %s36 = ssub.s32 8192, 8192
      %37 = vsyncadd [#allocation5], %s36
      %s38 = sshll.u32 [#allocation4], 4
      %s39 = int_to_ptr.vmem [resolvable:$true] %s38
      %44 = dma.hbm_to_vmem [thread:$0]  %s3, 8192, %s39, [#allocation5], 256, 256, 16
    $region17: #{generator_forward.1} parent=1 // pred_fallthru
      _
    // Predicated region
    $region18: #{generator_forward.1} parent=1 // pred_check
      _
    $region19: #{generator_forward.1} parent=1 // pred_check_branch
      %46 = sbr.rel (0) target = $region21
    $region20: #{generator_forward.1} parent=1 // pred_region
      _
    $region21: #{generator_forward.1} parent=1 // pred_fallthru
      _
    // Predicated region
    $region22: #{generator_forward.1} parent=1 // pred_check
      _
    $region23: #{generator_forward.1} parent=1 // pred_check_branch
      %48 = sbr.rel (0) target = $region25
    $region24: #{generator_forward.1} parent=1 // pred_region
      %s50 = ssub.s32 32768, 32768
      %51 = vsyncadd [#allocation5], %s50
      %s52 = sshll.u32 [#allocation6], 4
      %s53 = int_to_ptr.vmem [resolvable:$true] %s52
      %58 = dma.hbm_to_vmem [thread:$0]  %s5, 32768, %s53, [#allocation5], 512, 512, 32
    $region25: #{generator_forward.1} parent=1 // pred_fallthru
      _
    // Predicated region
    $region26: #{generator_forward.1} parent=1 // pred_check
      _
    $region27: #{generator_forward.1} parent=1 // pred_check_branch
      %60 = sbr.rel (0) target = $region29
    $region28: #{generator_forward.1} parent=1 // pred_region
      _
    $region29: #{generator_forward.1} parent=1 // pred_fallthru
      _
    // Predicated region
    $region30: #{generator_forward.1} parent=1 // pred_check
      _
    $region31: #{generator_forward.1} parent=1 // pred_check_branch
      %62 = sbr.rel (0) target = $region33
    $region32: #{generator_forward.1} parent=1 // pred_region
      %s64 = ssub.s32 32768, 32768
      %65 = vsyncadd [#allocation8], %s64
      %s66 = sshll.u32 [#allocation7], 4
      %s67 = int_to_ptr.vmem [resolvable:$true] %s66
      %72 = dma.hbm_to_vmem [thread:$0]  %s7, 32768, %s67, [#allocation8], 256, 256, 16
    $region33: #{generator_forward.1} parent=1 // pred_fallthru
      _
    // Predicated region
    $region34: #{generator_forward.1} parent=1 // pred_check
      _
    $region35: #{generator_forward.1} parent=1 // pred_check_branch
      %74 = sbr.rel (0) target = $region37
    $region36: #{generator_forward.1} parent=1 // pred_region
      _
    $region37: #{generator_forward.1} parent=1 // pred_fallthru
      _
    // Predicated region
    $region38: #{generator_forward.1} parent=1 // pred_check
      _
    $region39: #{generator_forward.1} parent=1 // pred_check_branch
      %76 = sbr.rel (0) target = $region41
    $region40: #{generator_forward.1} parent=1 // pred_region
      %77 = dma.done [#allocation3], 2048
    $region41: #{generator_forward.1} parent=1 // pred_fallthru
      _
    // Predicated region
    $region42: #{generator_forward.1} parent=1 // pred_check
      _
    $region43: #{generator_forward.1} parent=1 // pred_check_branch
      %79 = sbr.rel (0) target = $region45
    $region44: #{generator_forward.1} parent=1 // pred_region
      %80 = dma.done [#allocation5], 8192
    $region45: #{generator_forward.1} parent=1 // pred_fallthru
      _
    // Predicated region
    $region46: #{generator_forward.1} parent=1 // pred_check
      _
    $region47: #{generator_forward.1} parent=1 // pred_check_branch
      %82 = sbr.rel (0) target = $region49
    $region48: #{generator_forward.1} parent=1 // pred_region
      %83 = dma.done [#allocation5], 32768
    $region49: #{generator_forward.1} parent=1 // pred_fallthru
      _
    // Predicated region
    $region50: #{generator_forward.1} parent=1 // pred_check
      _
    $region51: #{generator_forward.1} parent=1 // pred_check_branch
      %85 = sbr.rel (0) target = $region53
    $region52: #{generator_forward.1} parent=1 // pred_region
      %86 = dma.done [#allocation8], 32768
    $region53: #{generator_forward.1} parent=1 // pred_fallthru
      _
    %v88 = vld [vmem:[%s0] sm:$0xff]
    %v89 = vpack.c.bf16 %v88, %v88
    %v90 = vld [vmem:[#allocation2] sm:$0xff]
    %v91 = vld [vmem:[#allocation2 + $0x8] sm:$0xff]
    %v92 = vld [vmem:[#allocation2 + $0x10] sm:$0xff]
    %v93 = vld [vmem:[#allocation2 + $0x18] sm:$0xff]
    %v94 = vld [vmem:[#allocation2 + $0x20] sm:$0xff]
    %v95 = vld [vmem:[#allocation2 + $0x28] sm:$0xff]
    %v96 = vld [vmem:[#allocation2 + $0x30] sm:$0xff]
    %v97 = vld [vmem:[#allocation2 + $0x38] sm:$0xff]
    %v98 = vld [vmem:[#allocation2 + $0x40] sm:$0xff]
    %v99 = vld [vmem:[#allocation2 + $0x48] sm:$0xff]
    %v100 = vld [vmem:[#allocation2 + $0x50] sm:$0xff]
    %v101 = vld [vmem:[#allocation2 + $0x58] sm:$0xff]
    %v102 = vld [vmem:[#allocation2 + $0x60] sm:$0xff]
    %v103 = vld [vmem:[#allocation2 + $0x68] sm:$0xff]
    %v104 = vld [vmem:[#allocation2 + $0x70] sm:$0xff]
    %v105 = vld [vmem:[#allocation2 + $0x78] sm:$0xff]
    %v122 = vunpack.c.l.b16 %v90
    %v123 = vunpack.c.h.b16 %v90
    %v124 = vunpack.c.l.b16 %v91
    %v125 = vunpack.c.h.b16 %v91
    %v126 = vunpack.c.l.b16 %v92
    %v127 = vunpack.c.h.b16 %v92
    %v128 = vunpack.c.l.b16 %v93
    %v129 = vunpack.c.h.b16 %v93
    %v130 = vunpack.c.l.b16 %v94
    %v131 = vunpack.c.h.b16 %v94
    %v132 = vunpack.c.l.b16 %v95
    %v133 = vunpack.c.h.b16 %v95
    %v134 = vunpack.c.l.b16 %v96
    %v135 = vunpack.c.h.b16 %v96
    %v136 = vunpack.c.l.b16 %v97
    %v137 = vunpack.c.h.b16 %v97
    %v138 = vunpack.c.l.b16 %v98
    %v139 = vunpack.c.h.b16 %v98
    %v140 = vunpack.c.l.b16 %v99
    %v141 = vunpack.c.h.b16 %v99
    %v142 = vunpack.c.l.b16 %v100
    %v143 = vunpack.c.h.b16 %v100
    %v144 = vunpack.c.l.b16 %v101
    %v145 = vunpack.c.h.b16 %v101
    %v146 = vunpack.c.l.b16 %v102
    %v147 = vunpack.c.h.b16 %v102
    %v148 = vunpack.c.l.b16 %v103
    %v149 = vunpack.c.h.b16 %v103
    %v150 = vunpack.c.l.b16 %v104
    %v151 = vunpack.c.h.b16 %v104
    %v152 = vunpack.c.l.b16 %v105
    %v153 = vunpack.c.h.b16 %v105
    %v154 = vpack.c.b16 %v124, %v122
    %v155 = vpack.c.b16 %v125, %v123
    %v156 = vpack.c.b16 %v128, %v126
    %v157 = vpack.c.b16 %v129, %v127
    %v158 = vpack.c.b16 %v132, %v130
    %v159 = vpack.c.b16 %v133, %v131
    %v160 = vpack.c.b16 %v136, %v134
    %v161 = vpack.c.b16 %v137, %v135
    %v162 = vpack.c.b16 %v140, %v138
    %v163 = vpack.c.b16 %v141, %v139
    %v164 = vpack.c.b16 %v144, %v142
    %v165 = vpack.c.b16 %v145, %v143
    %v166 = vpack.c.b16 %v148, %v146
    %v167 = vpack.c.b16 %v149, %v147
    %v168 = vpack.c.b16 %v152, %v150
    %v169 = vpack.c.b16 %v153, %v151
    %186 = vmatprep.subr.bf16.mxu0 %v155
    %187 = vmatpush1.bf16.msra.mxu0 %v154
    %188 = vmatprep.subr.bf16.mxu0 %v157
    %189 = vmatpush1.bf16.msra.mxu0 %v156
    %190 = vmatprep.subr.bf16.mxu0 %v159
    %191 = vmatpush1.bf16.msra.mxu0 %v158
    %192 = vmatprep.subr.bf16.mxu0 %v161
    %193 = vmatpush1.bf16.msra.mxu0 %v160
    %194 = vmatprep.subr.bf16.mxu0 %v163
    %195 = vmatpush1.bf16.msra.mxu0 %v162
    %196 = vmatprep.subr.bf16.mxu0 %v165
    %197 = vmatpush1.bf16.msra.mxu0 %v164
    %198 = vmatprep.subr.bf16.mxu0 %v167
    %199 = vmatpush1.bf16.msra.mxu0 %v166
    %200 = vmatprep.subr.bf16.mxu0 %v169
    %201 = vmatpush1.bf16.msra.mxu0 %v168
    %202 = vmatprep.subr.bf16.mxu0 0
    %203 = vmatpush1.bf16.msra.mxu0 0
    %204 = vmatprep.subr.bf16.mxu0 0
    %205 = vmatpush1.bf16.msra.mxu0 0
    %206 = vmatprep.subr.bf16.mxu0 0
    %207 = vmatpush1.bf16.msra.mxu0 0
    %208 = vmatprep.subr.bf16.mxu0 0
    %209 = vmatpush1.bf16.msra.mxu0 0
    %210 = vmatprep.subr.bf16.mxu0 0
    %211 = vmatpush1.bf16.msra.mxu0 0
    %212 = vmatprep.subr.bf16.mxu0 0
    %213 = vmatpush1.bf16.msra.mxu0 0
    %214 = vmatprep.subr.bf16.mxu0 0
    %215 = vmatpush1.bf16.msra.mxu0 0
    %216 = vmatprep.subr.bf16.mxu0 0
    %217 = vmatpush1.bf16.msra.mxu0 0
    %218 = vmatprep.mubr.bf16.mxu0 0
    %219 = vmatmul.mubr.bf16.gmra.mrb[0].mxu0 %v89
    %v220 = vpop.f32.mrb[0].mxu0
    %v221 = vadd.f32 0.0, %v220
    %v222 = vpop.f32.mrb[0].mxu0
    %v223 = vadd.f32 0.0, %v222
    %v224 = vpop.f32.mrb[0].mxu0
    %v225 = vpop.f32.mrb[0].mxu0
    %226 = vdwg.mxu0
    %v227 = vpack.c.bf16 %v221, %v221
    %v228 = vpack.c.bf16 %v223, %v223
    %v229 = vld [vmem:[%s2] sm:$0x3]
    %v232 = vunpack.c.l.s4 1966171168
    %v233 = vunpack.c.0.s8 %v232
    %v234 = vlaneseq
    %v235 = vshrl.u32 %v234, 7
    %v236 = vsub.s32 %v233, %v235
    %v237 = vrot.slane %v229, %v236
    %v238 = vcombine.high %v237, %v237
    %v240 = vunpack.c.l.s4 1966171168
    %v241 = vunpack.c.0.s8 %v240
    %v242 = vlaneseq
    %v243 = vshrl.u32 %v242, 7
    %v244 = vsub.s32 %v241, %v243
    %v245 = vrot.slane %v237, %v244
    %v247 = vunpack.c.l.s4 1966171168
    %v248 = vunpack.c.0.s8 %v247
    %v249 = vlaneseq
    %v250 = vshrl.u32 %v249, 7
    %v251 = vsub.s32 %v248, %v250
    %v252 = vrot.slane %v238, %v251
    %v254 = vpack.i.b16 %v245, %v245
    %v256 = vlaneseq
    %v257 = vshrl.u32 %v256, 7
    %v258 = vsub.s32 0, %v257
    %v259 = vrot.slane %v254, %v258
    %v261 = vpack.i.b16 %v252, %v252
    %v263 = vlaneseq
    %v264 = vshrl.u32 %v263, 7
    %v265 = vsub.s32 0, %v264
    %v266 = vrot.slane %v261, %v265
    %v267 = vadd.bf16 %v227, %v259
    %v268 = vadd.bf16 %v228, %v266
    %v269 = vmax.bf16 %v267, 0
    %v270 = vmax.bf16 %v268, 0
    %v271 = vld [vmem:[#allocation4] sm:$0xff]
    %v272 = vld [vmem:[#allocation4 + $0x8] sm:$0xff]
    %v273 = vld [vmem:[#allocation4 + $0x10] sm:$0xff]
    %v274 = vld [vmem:[#allocation4 + $0x18] sm:$0xff]
    %v275 = vld [vmem:[#allocation4 + $0x20] sm:$0xff]
    %v276 = vld [vmem:[#allocation4 + $0x28] sm:$0xff]
    %v277 = vld [vmem:[#allocation4 + $0x30] sm:$0xff]
    %v278 = vld [vmem:[#allocation4 + $0x38] sm:$0xff]
    %v279 = vld [vmem:[#allocation4 + $0x40] sm:$0xff]
    %v280 = vld [vmem:[#allocation4 + $0x48] sm:$0xff]
    %v281 = vld [vmem:[#allocation4 + $0x50] sm:$0xff]
    %v282 = vld [vmem:[#allocation4 + $0x58] sm:$0xff]
    %v283 = vld [vmem:[#allocation4 + $0x60] sm:$0xff]
    %v284 = vld [vmem:[#allocation4 + $0x68] sm:$0xff]
    %v285 = vld [vmem:[#allocation4 + $0x70] sm:$0xff]
    %v286 = vld [vmem:[#allocation4 + $0x78] sm:$0xff]
    %v287 = vld [vmem:[#allocation4 + $0x80] sm:$0xff]
    %v288 = vld [vmem:[#allocation4 + $0x88] sm:$0xff]
    %v289 = vld [vmem:[#allocation4 + $0x90] sm:$0xff]
    %v290 = vld [vmem:[#allocation4 + $0x98] sm:$0xff]
    %v291 = vld [vmem:[#allocation4 + $0xa0] sm:$0xff]
    %v292 = vld [vmem:[#allocation4 + $0xa8] sm:$0xff]
    %v293 = vld [vmem:[#allocation4 + $0xb0] sm:$0xff]
    %v294 = vld [vmem:[#allocation4 + $0xb8] sm:$0xff]
    %v295 = vld [vmem:[#allocation4 + $0xc0] sm:$0xff]
    %v296 = vld [vmem:[#allocation4 + $0xc8] sm:$0xff]
    %v297 = vld [vmem:[#allocation4 + $0xd0] sm:$0xff]
    %v298 = vld [vmem:[#allocation4 + $0xd8] sm:$0xff]
    %v299 = vld [vmem:[#allocation4 + $0xe0] sm:$0xff]
    %v300 = vld [vmem:[#allocation4 + $0xe8] sm:$0xff]
    %v301 = vld [vmem:[#allocation4 + $0xf0] sm:$0xff]
    %v302 = vld [vmem:[#allocation4 + $0xf8] sm:$0xff]
    %v303 = vld [vmem:[#allocation4 + $0x100] sm:$0xff]
    %v304 = vld [vmem:[#allocation4 + $0x108] sm:$0xff]
    %v305 = vld [vmem:[#allocation4 + $0x110] sm:$0xff]
    %v306 = vld [vmem:[#allocation4 + $0x118] sm:$0xff]
    %v307 = vld [vmem:[#allocation4 + $0x120] sm:$0xff]
    %v308 = vld [vmem:[#allocation4 + $0x128] sm:$0xff]
    %v309 = vld [vmem:[#allocation4 + $0x130] sm:$0xff]
    %v310 = vld [vmem:[#allocation4 + $0x138] sm:$0xff]
    %v311 = vld [vmem:[#allocation4 + $0x140] sm:$0xff]
    %v312 = vld [vmem:[#allocation4 + $0x148] sm:$0xff]
    %v313 = vld [vmem:[#allocation4 + $0x150] sm:$0xff]
    %v314 = vld [vmem:[#allocation4 + $0x158] sm:$0xff]
    %v315 = vld [vmem:[#allocation4 + $0x160] sm:$0xff]
    %v316 = vld [vmem:[#allocation4 + $0x168] sm:$0xff]
    %v317 = vld [vmem:[#allocation4 + $0x170] sm:$0xff]
    %v318 = vld [vmem:[#allocation4 + $0x178] sm:$0xff]
    %v319 = vld [vmem:[#allocation4 + $0x180] sm:$0xff]
    %v320 = vld [vmem:[#allocation4 + $0x188] sm:$0xff]
    %v321 = vld [vmem:[#allocation4 + $0x190] sm:$0xff]
    %v322 = vld [vmem:[#allocation4 + $0x198] sm:$0xff]
    %v323 = vld [vmem:[#allocation4 + $0x1a0] sm:$0xff]
    %v324 = vld [vmem:[#allocation4 + $0x1a8] sm:$0xff]
    %v325 = vld [vmem:[#allocation4 + $0x1b0] sm:$0xff]
    %v326 = vld [vmem:[#allocation4 + $0x1b8] sm:$0xff]
    %v327 = vld [vmem:[#allocation4 + $0x1c0] sm:$0xff]
    %v328 = vld [vmem:[#allocation4 + $0x1c8] sm:$0xff]
    %v329 = vld [vmem:[#allocation4 + $0x1d0] sm:$0xff]
    %v330 = vld [vmem:[#allocation4 + $0x1d8] sm:$0xff]
    %v331 = vld [vmem:[#allocation4 + $0x1e0] sm:$0xff]
    %v332 = vld [vmem:[#allocation4 + $0x1e8] sm:$0xff]
    %v333 = vld [vmem:[#allocation4 + $0x1f0] sm:$0xff]
    %v334 = vld [vmem:[#allocation4 + $0x1f8] sm:$0xff]
    %v399 = vunpack.c.l.b16 %v271
    %v400 = vunpack.c.h.b16 %v271
    %v401 = vunpack.c.l.b16 %v272
    %v402 = vunpack.c.h.b16 %v272
    %v403 = vunpack.c.l.b16 %v273
    %v404 = vunpack.c.h.b16 %v273
    %v405 = vunpack.c.l.b16 %v274
    %v406 = vunpack.c.h.b16 %v274
    %v407 = vunpack.c.l.b16 %v275
    %v408 = vunpack.c.h.b16 %v275
    %v409 = vunpack.c.l.b16 %v276
    %v410 = vunpack.c.h.b16 %v276
    %v411 = vunpack.c.l.b16 %v277
    %v412 = vunpack.c.h.b16 %v277
    %v413 = vunpack.c.l.b16 %v278
    %v414 = vunpack.c.h.b16 %v278
    %v415 = vunpack.c.l.b16 %v279
    %v416 = vunpack.c.h.b16 %v279
    %v417 = vunpack.c.l.b16 %v280
    %v418 = vunpack.c.h.b16 %v280
    %v419 = vunpack.c.l.b16 %v281
    %v420 = vunpack.c.h.b16 %v281
    %v421 = vunpack.c.l.b16 %v282
    %v422 = vunpack.c.h.b16 %v282
    %v423 = vunpack.c.l.b16 %v283
    %v424 = vunpack.c.h.b16 %v283
    %v425 = vunpack.c.l.b16 %v284
    %v426 = vunpack.c.h.b16 %v284
    %v427 = vunpack.c.l.b16 %v285
    %v428 = vunpack.c.h.b16 %v285
    %v429 = vunpack.c.l.b16 %v286
    %v430 = vunpack.c.h.b16 %v286
    %v431 = vunpack.c.l.b16 %v287
    %v432 = vunpack.c.h.b16 %v287
    %v433 = vunpack.c.l.b16 %v288
    %v434 = vunpack.c.h.b16 %v288
    %v435 = vunpack.c.l.b16 %v289
    %v436 = vunpack.c.h.b16 %v289
    %v437 = vunpack.c.l.b16 %v290
    %v438 = vunpack.c.h.b16 %v290
    %v439 = vunpack.c.l.b16 %v291
    %v440 = vunpack.c.h.b16 %v291
    %v441 = vunpack.c.l.b16 %v292
    %v442 = vunpack.c.h.b16 %v292
    %v443 = vunpack.c.l.b16 %v293
    %v444 = vunpack.c.h.b16 %v293
    %v445 = vunpack.c.l.b16 %v294
    %v446 = vunpack.c.h.b16 %v294
    %v447 = vunpack.c.l.b16 %v295
    %v448 = vunpack.c.h.b16 %v295
    %v449 = vunpack.c.l.b16 %v296
    %v450 = vunpack.c.h.b16 %v296
    %v451 = vunpack.c.l.b16 %v297
    %v452 = vunpack.c.h.b16 %v297
    %v453 = vunpack.c.l.b16 %v298
    %v454 = vunpack.c.h.b16 %v298
    %v455 = vunpack.c.l.b16 %v299
    %v456 = vunpack.c.h.b16 %v299
    %v457 = vunpack.c.l.b16 %v300
    %v458 = vunpack.c.h.b16 %v300
    %v459 = vunpack.c.l.b16 %v301
    %v460 = vunpack.c.h.b16 %v301
    %v461 = vunpack.c.l.b16 %v302
    %v462 = vunpack.c.h.b16 %v302
    %v463 = vunpack.c.l.b16 %v303
    %v464 = vunpack.c.h.b16 %v303
    %v465 = vunpack.c.l.b16 %v304
    %v466 = vunpack.c.h.b16 %v304
    %v467 = vunpack.c.l.b16 %v305
    %v468 = vunpack.c.h.b16 %v305
    %v469 = vunpack.c.l.b16 %v306
    %v470 = vunpack.c.h.b16 %v306
    %v471 = vunpack.c.l.b16 %v307
    %v472 = vunpack.c.h.b16 %v307
    %v473 = vunpack.c.l.b16 %v308
    %v474 = vunpack.c.h.b16 %v308
    %v475 = vunpack.c.l.b16 %v309
    %v476 = vunpack.c.h.b16 %v309
    %v477 = vunpack.c.l.b16 %v310
    %v478 = vunpack.c.h.b16 %v310
    %v479 = vunpack.c.l.b16 %v311
    %v480 = vunpack.c.h.b16 %v311
    %v481 = vunpack.c.l.b16 %v312
    %v482 = vunpack.c.h.b16 %v312
    %v483 = vunpack.c.l.b16 %v313
    %v484 = vunpack.c.h.b16 %v313
    %v485 = vunpack.c.l.b16 %v314
    %v486 = vunpack.c.h.b16 %v314
    %v487 = vunpack.c.l.b16 %v315
    %v488 = vunpack.c.h.b16 %v315
    %v489 = vunpack.c.l.b16 %v316
    %v490 = vunpack.c.h.b16 %v316
    %v491 = vunpack.c.l.b16 %v317
    %v492 = vunpack.c.h.b16 %v317
    %v493 = vunpack.c.l.b16 %v318
    %v494 = vunpack.c.h.b16 %v318
    %v495 = vunpack.c.l.b16 %v319
    %v496 = vunpack.c.h.b16 %v319
    %v497 = vunpack.c.l.b16 %v320
    %v498 = vunpack.c.h.b16 %v320
    %v499 = vunpack.c.l.b16 %v321
    %v500 = vunpack.c.h.b16 %v321
    %v501 = vunpack.c.l.b16 %v322
    %v502 = vunpack.c.h.b16 %v322
    %v503 = vunpack.c.l.b16 %v323
    %v504 = vunpack.c.h.b16 %v323
    %v505 = vunpack.c.l.b16 %v324
    %v506 = vunpack.c.h.b16 %v324
    %v507 = vunpack.c.l.b16 %v325
    %v508 = vunpack.c.h.b16 %v325
    %v509 = vunpack.c.l.b16 %v326
    %v510 = vunpack.c.h.b16 %v326
    %v511 = vunpack.c.l.b16 %v327
    %v512 = vunpack.c.h.b16 %v327
    %v513 = vunpack.c.l.b16 %v328
    %v514 = vunpack.c.h.b16 %v328
    %v515 = vunpack.c.l.b16 %v329
    %v516 = vunpack.c.h.b16 %v329
    %v517 = vunpack.c.l.b16 %v330
    %v518 = vunpack.c.h.b16 %v330
    %v519 = vunpack.c.l.b16 %v331
    %v520 = vunpack.c.h.b16 %v331
    %v521 = vunpack.c.l.b16 %v332
    %v522 = vunpack.c.h.b16 %v332
    %v523 = vunpack.c.l.b16 %v333
    %v524 = vunpack.c.h.b16 %v333
    %v525 = vunpack.c.l.b16 %v334
    %v526 = vunpack.c.h.b16 %v334
    %v527 = vpack.c.b16 %v403, %v399
    %v528 = vpack.c.b16 %v404, %v400
    %v529 = vpack.c.b16 %v405, %v401
    %v530 = vpack.c.b16 %v406, %v402
    %v531 = vpack.c.b16 %v411, %v407
    %v532 = vpack.c.b16 %v412, %v408
    %v533 = vpack.c.b16 %v413, %v409
    %v534 = vpack.c.b16 %v414, %v410
    %v535 = vpack.c.b16 %v419, %v415
    %v536 = vpack.c.b16 %v420, %v416
    %v537 = vpack.c.b16 %v421, %v417
    %v538 = vpack.c.b16 %v422, %v418
    %v539 = vpack.c.b16 %v427, %v423
    %v540 = vpack.c.b16 %v428, %v424
    %v541 = vpack.c.b16 %v429, %v425
    %v542 = vpack.c.b16 %v430, %v426
    %v543 = vpack.c.b16 %v435, %v431
    %v544 = vpack.c.b16 %v436, %v432
    %v545 = vpack.c.b16 %v437, %v433
    %v546 = vpack.c.b16 %v438, %v434
    %v547 = vpack.c.b16 %v443, %v439
    %v548 = vpack.c.b16 %v444, %v440
    %v549 = vpack.c.b16 %v445, %v441
    %v550 = vpack.c.b16 %v446, %v442
    %v551 = vpack.c.b16 %v451, %v447
    %v552 = vpack.c.b16 %v452, %v448
    %v553 = vpack.c.b16 %v453, %v449
    %v554 = vpack.c.b16 %v454, %v450
    %v555 = vpack.c.b16 %v459, %v455
    %v556 = vpack.c.b16 %v460, %v456
    %v557 = vpack.c.b16 %v461, %v457
    %v558 = vpack.c.b16 %v462, %v458
    %v559 = vpack.c.b16 %v467, %v463
    %v560 = vpack.c.b16 %v468, %v464
    %v561 = vpack.c.b16 %v469, %v465
    %v562 = vpack.c.b16 %v470, %v466
    %v563 = vpack.c.b16 %v475, %v471
    %v564 = vpack.c.b16 %v476, %v472
    %v565 = vpack.c.b16 %v477, %v473
    %v566 = vpack.c.b16 %v478, %v474
    %v567 = vpack.c.b16 %v483, %v479
    %v568 = vpack.c.b16 %v484, %v480
    %v569 = vpack.c.b16 %v485, %v481
    %v570 = vpack.c.b16 %v486, %v482
    %v571 = vpack.c.b16 %v491, %v487
    %v572 = vpack.c.b16 %v492, %v488
    %v573 = vpack.c.b16 %v493, %v489
    %v574 = vpack.c.b16 %v494, %v490
    %v575 = vpack.c.b16 %v499, %v495
    %v576 = vpack.c.b16 %v500, %v496
    %v577 = vpack.c.b16 %v501, %v497
    %v578 = vpack.c.b16 %v502, %v498
    %v579 = vpack.c.b16 %v507, %v503
    %v580 = vpack.c.b16 %v508, %v504
    %v581 = vpack.c.b16 %v509, %v505
    %v582 = vpack.c.b16 %v510, %v506
    %v583 = vpack.c.b16 %v515, %v511
    %v584 = vpack.c.b16 %v516, %v512
    %v585 = vpack.c.b16 %v517, %v513
    %v586 = vpack.c.b16 %v518, %v514
    %v587 = vpack.c.b16 %v523, %v519
    %v588 = vpack.c.b16 %v524, %v520
    %v589 = vpack.c.b16 %v525, %v521
    %v590 = vpack.c.b16 %v526, %v522
    %655 = vmatprep.subr.bf16.mxu0 %v528
    %656 = vmatpush1.bf16.msra.mxu0 %v527
    %657 = vmatprep.subr.bf16.mxu0 %v532
    %658 = vmatpush1.bf16.msra.mxu0 %v531
    %659 = vmatprep.subr.bf16.mxu0 %v536
    %660 = vmatpush1.bf16.msra.mxu0 %v535
    %661 = vmatprep.subr.bf16.mxu0 %v540
    %662 = vmatpush1.bf16.msra.mxu0 %v539
    %663 = vmatprep.subr.bf16.mxu0 %v544
    %664 = vmatpush1.bf16.msra.mxu0 %v543
    %665 = vmatprep.subr.bf16.mxu0 %v548
    %666 = vmatpush1.bf16.msra.mxu0 %v547
    %667 = vmatprep.subr.bf16.mxu0 %v552
    %668 = vmatpush1.bf16.msra.mxu0 %v551
    %669 = vmatprep.subr.bf16.mxu0 %v556
    %670 = vmatpush1.bf16.msra.mxu0 %v555
    %671 = vmatprep.subr.bf16.mxu0 %v560
    %672 = vmatpush1.bf16.msra.mxu0 %v559
    %673 = vmatprep.subr.bf16.mxu0 %v564
    %674 = vmatpush1.bf16.msra.mxu0 %v563
    %675 = vmatprep.subr.bf16.mxu0 %v568
    %676 = vmatpush1.bf16.msra.mxu0 %v567
    %677 = vmatprep.subr.bf16.mxu0 %v572
    %678 = vmatpush1.bf16.msra.mxu0 %v571
    %679 = vmatprep.subr.bf16.mxu0 %v576
    %680 = vmatpush1.bf16.msra.mxu0 %v575
    %681 = vmatprep.subr.bf16.mxu0 %v580
    %682 = vmatpush1.bf16.msra.mxu0 %v579
    %683 = vmatprep.subr.bf16.mxu0 %v584
    %684 = vmatpush1.bf16.msra.mxu0 %v583
    %685 = vmatprep.subr.bf16.mxu0 %v588
    %686 = vmatpush1.bf16.msra.mxu0 %v587
    %687 = vmatprep.mubr.bf16.mxu0 %v270
    %688 = vmatmul.mubr.bf16.gmra.mrb[0].mxu0 %v269
    %v689 = vpop.f32.mrb[0].mxu0
    %v690 = vadd.f32 0.0, %v689
    %v691 = vpop.f32.mrb[0].mxu0
    %v692 = vadd.f32 0.0, %v691
    %v693 = vpop.f32.mrb[0].mxu0
    %v694 = vpop.f32.mrb[0].mxu0
    %695 = vdwg.mxu0
    %696 = vmatprep.subr.bf16.mxu0 %v530
    %697 = vmatpush1.bf16.msra.mxu0 %v529
    %698 = vmatprep.subr.bf16.mxu0 %v534
    %699 = vmatpush1.bf16.msra.mxu0 %v533
    %700 = vmatprep.subr.bf16.mxu0 %v538
    %701 = vmatpush1.bf16.msra.mxu0 %v537
    %702 = vmatprep.subr.bf16.mxu0 %v542
    %703 = vmatpush1.bf16.msra.mxu0 %v541
    %704 = vmatprep.subr.bf16.mxu0 %v546
    %705 = vmatpush1.bf16.msra.mxu0 %v545
    %706 = vmatprep.subr.bf16.mxu0 %v550
    %707 = vmatpush1.bf16.msra.mxu0 %v549
    %708 = vmatprep.subr.bf16.mxu0 %v554
    %709 = vmatpush1.bf16.msra.mxu0 %v553
    %710 = vmatprep.subr.bf16.mxu0 %v558
    %711 = vmatpush1.bf16.msra.mxu0 %v557
    %712 = vmatprep.subr.bf16.mxu0 %v562
    %713 = vmatpush1.bf16.msra.mxu0 %v561
    %714 = vmatprep.subr.bf16.mxu0 %v566
    %715 = vmatpush1.bf16.msra.mxu0 %v565
    %716 = vmatprep.subr.bf16.mxu0 %v570
    %717 = vmatpush1.bf16.msra.mxu0 %v569
    %718 = vmatprep.subr.bf16.mxu0 %v574
    %719 = vmatpush1.bf16.msra.mxu0 %v573
    %720 = vmatprep.subr.bf16.mxu0 %v578
    %721 = vmatpush1.bf16.msra.mxu0 %v577
    %722 = vmatprep.subr.bf16.mxu0 %v582
    %723 = vmatpush1.bf16.msra.mxu0 %v581
    %724 = vmatprep.subr.bf16.mxu0 %v586
    %725 = vmatpush1.bf16.msra.mxu0 %v585
    %726 = vmatprep.subr.bf16.mxu0 %v590
    %727 = vmatpush1.bf16.msra.mxu0 %v589
    %728 = vmatprep.mubr.bf16.mxu0 %v270
    %729 = vmatmul.mubr.bf16.gmra.mrb[0].mxu0 %v269
    %v730 = vpop.f32.mrb[0].mxu0
    %v731 = vadd.f32 0.0, %v730
    %v732 = vpop.f32.mrb[0].mxu0
    %v733 = vadd.f32 0.0, %v732
    %v734 = vpop.f32.mrb[0].mxu0
    %v735 = vpop.f32.mrb[0].mxu0
    %736 = vdwg.mxu0
    %v737 = vpack.c.bf16 %v690, %v690
    %v738 = vpack.c.bf16 %v692, %v692
    %v739 = vpack.c.bf16 %v731, %v731
    %v740 = vpack.c.bf16 %v733, %v733
    %v741 = vld [vmem:[%s4] sm:$0xf]
    %v744 = vunpack.c.l.s4 1966171168
    %v745 = vunpack.c.0.s8 %v744
    %v746 = vlaneseq
    %v747 = vshrl.u32 %v746, 7
    %v748 = vsub.s32 %v745, %v747
    %v749 = vrot.slane %v741, %v748
    %v750 = vcombine.high %v749, %v749
    %v752 = vunpack.c.l.s4 1966171168
    %v753 = vunpack.c.0.s8 %v752
    %v754 = vlaneseq
    %v755 = vshrl.u32 %v754, 7
    %v756 = vsub.s32 %v753, %v755
    %v757 = vrot.slane %v749, %v756
    %v759 = vunpack.c.l.s4 1966171168
    %v760 = vunpack.c.0.s8 %v759
    %v761 = vlaneseq
    %v762 = vshrl.u32 %v761, 7
    %v763 = vsub.s32 %v760, %v762
    %v764 = vrot.slane %v750, %v763
    %v765 = vcombine.high %v757, %v757
    %v766 = vcombine.high %v764, %v764
    %v768 = vpack.i.b16 %v757, %v757
    %v770 = vlaneseq
    %v771 = vshrl.u32 %v770, 7
    %v772 = vsub.s32 0, %v771
    %v773 = vrot.slane %v768, %v772
    %v775 = vpack.i.b16 %v764, %v764
    %v777 = vlaneseq
    %v778 = vshrl.u32 %v777, 7
    %v779 = vsub.s32 0, %v778
    %v780 = vrot.slane %v775, %v779
    %v782 = vpack.i.b16 %v765, %v765
    %v784 = vlaneseq
    %v785 = vshrl.u32 %v784, 7
    %v786 = vsub.s32 0, %v785
    %v787 = vrot.slane %v782, %v786
    %v789 = vpack.i.b16 %v766, %v766
    %v791 = vlaneseq
    %v792 = vshrl.u32 %v791, 7
    %v793 = vsub.s32 0, %v792
    %v794 = vrot.slane %v789, %v793
    %v795 = vadd.bf16 %v737, %v773
    %v796 = vadd.bf16 %v738, %v780
    %v797 = vadd.bf16 %v739, %v787
    %v798 = vadd.bf16 %v740, %v794
    %v799 = vmax.bf16 %v795, 0
    %v800 = vmax.bf16 %v796, 0
    %v801 = vmax.bf16 %v797, 0
    %v802 = vmax.bf16 %v798, 0
    %v803 = vld [vmem:[#allocation6] sm:$0xff]
    %v804 = vld [vmem:[#allocation6 + $0x8] sm:$0xff]
    %v805 = vld [vmem:[#allocation6 + $0x10] sm:$0xff]
    %v806 = vld [vmem:[#allocation6 + $0x18] sm:$0xff]
    %v807 = vld [vmem:[#allocation6 + $0x20] sm:$0xff]
    %v808 = vld [vmem:[#allocation6 + $0x28] sm:$0xff]
    %v809 = vld [vmem:[#allocation6 + $0x30] sm:$0xff]
    %v810 = vld [vmem:[#allocation6 + $0x38] sm:$0xff]
    %v811 = vld [vmem:[#allocation6 + $0x40] sm:$0xff]
    %v812 = vld [vmem:[#allocation6 + $0x48] sm:$0xff]
    %v813 = vld [vmem:[#allocation6 + $0x50] sm:$0xff]
    %v814 = vld [vmem:[#allocation6 + $0x58] sm:$0xff]
    %v815 = vld [vmem:[#allocation6 + $0x60] sm:$0xff]
    %v816 = vld [vmem:[#allocation6 + $0x68] sm:$0xff]
    %v817 = vld [vmem:[#allocation6 + $0x70] sm:$0xff]
    %v818 = vld [vmem:[#allocation6 + $0x78] sm:$0xff]
    %v819 = vld [vmem:[#allocation6 + $0x80] sm:$0xff]
    %v820 = vld [vmem:[#allocation6 + $0x88] sm:$0xff]
    %v821 = vld [vmem:[#allocation6 + $0x90] sm:$0xff]
    %v822 = vld [vmem:[#allocation6 + $0x98] sm:$0xff]
    %v823 = vld [vmem:[#allocation6 + $0xa0] sm:$0xff]
    %v824 = vld [vmem:[#allocation6 + $0xa8] sm:$0xff]
    %v825 = vld [vmem:[#allocation6 + $0xb0] sm:$0xff]
    %v826 = vld [vmem:[#allocation6 + $0xb8] sm:$0xff]
    %v827 = vld [vmem:[#allocation6 + $0xc0] sm:$0xff]
    %v828 = vld [vmem:[#allocation6 + $0xc8] sm:$0xff]
    %v829 = vld [vmem:[#allocation6 + $0xd0] sm:$0xff]
    %v830 = vld [vmem:[#allocation6 + $0xd8] sm:$0xff]
    %v831 = vld [vmem:[#allocation6 + $0xe0] sm:$0xff]
    %v832 = vld [vmem:[#allocation6 + $0xe8] sm:$0xff]
    %v833 = vld [vmem:[#allocation6 + $0xf0] sm:$0xff]
    %v834 = vld [vmem:[#allocation6 + $0xf8] sm:$0xff]
    %v835 = vld [vmem:[#allocation6 + $0x100] sm:$0xff]
    %v836 = vld [vmem:[#allocation6 + $0x108] sm:$0xff]
    %v837 = vld [vmem:[#allocation6 + $0x110] sm:$0xff]
    %v838 = vld [vmem:[#allocation6 + $0x118] sm:$0xff]
    %v839 = vld [vmem:[#allocation6 + $0x120] sm:$0xff]
    %v840 = vld [vmem:[#allocation6 + $0x128] sm:$0xff]
    %v841 = vld [vmem:[#allocation6 + $0x130] sm:$0xff]
    %v842 = vld [vmem:[#allocation6 + $0x138] sm:$0xff]
    %v843 = vld [vmem:[#allocation6 + $0x140] sm:$0xff]
    %v844 = vld [vmem:[#allocation6 + $0x148] sm:$0xff]
    %v845 = vld [vmem:[#allocation6 + $0x150] sm:$0xff]
    %v846 = vld [vmem:[#allocation6 + $0x158] sm:$0xff]
    %v847 = vld [vmem:[#allocation6 + $0x160] sm:$0xff]
    %v848 = vld [vmem:[#allocation6 + $0x168] sm:$0xff]
    %v849 = vld [vmem:[#allocation6 + $0x170] sm:$0xff]
    %v850 = vld [vmem:[#allocation6 + $0x178] sm:$0xff]
    %v851 = vld [vmem:[#allocation6 + $0x180] sm:$0xff]
    %v852 = vld [vmem:[#allocation6 + $0x188] sm:$0xff]
    %v853 = vld [vmem:[#allocation6 + $0x190] sm:$0xff]
    %v854 = vld [vmem:[#allocation6 + $0x198] sm:$0xff]
    %v855 = vld [vmem:[#allocation6 + $0x1a0] sm:$0xff]
    %v856 = vld [vmem:[#allocation6 + $0x1a8] sm:$0xff]
    %v857 = vld [vmem:[#allocation6 + $0x1b0] sm:$0xff]
    %v858 = vld [vmem:[#allocation6 + $0x1b8] sm:$0xff]
    %v859 = vld [vmem:[#allocation6 + $0x1c0] sm:$0xff]
    %v860 = vld [vmem:[#allocation6 + $0x1c8] sm:$0xff]
    %v861 = vld [vmem:[#allocation6 + $0x1d0] sm:$0xff]
    %v862 = vld [vmem:[#allocation6 + $0x1d8] sm:$0xff]
    %v863 = vld [vmem:[#allocation6 + $0x1e0] sm:$0xff]
    %v864 = vld [vmem:[#allocation6 + $0x1e8] sm:$0xff]
    %v865 = vld [vmem:[#allocation6 + $0x1f0] sm:$0xff]
    %v866 = vld [vmem:[#allocation6 + $0x1f8] sm:$0xff]
    %v867 = vld [vmem:[#allocation6 + $0x200] sm:$0xff]
    %v868 = vld [vmem:[#allocation6 + $0x208] sm:$0xff]
    %v869 = vld [vmem:[#allocation6 + $0x210] sm:$0xff]
    %v870 = vld [vmem:[#allocation6 + $0x218] sm:$0xff]
    %v871 = vld [vmem:[#allocation6 + $0x220] sm:$0xff]
    %v872 = vld [vmem:[#allocation6 + $0x228] sm:$0xff]
    %v873 = vld [vmem:[#allocation6 + $0x230] sm:$0xff]
    %v874 = vld [vmem:[#allocation6 + $0x238] sm:$0xff]
    %v875 = vld [vmem:[#allocation6 + $0x240] sm:$0xff]
    %v876 = vld [vmem:[#allocation6 + $0x248] sm:$0xff]
    %v877 = vld [vmem:[#allocation6 + $0x250] sm:$0xff]
    %v878 = vld [vmem:[#allocation6 + $0x258] sm:$0xff]
    %v879 = vld [vmem:[#allocation6 + $0x260] sm:$0xff]
    %v880 = vld [vmem:[#allocation6 + $0x268] sm:$0xff]
    %v881 = vld [vmem:[#allocation6 + $0x270] sm:$0xff]
    %v882 = vld [vmem:[#allocation6 + $0x278] sm:$0xff]
    %v883 = vld [vmem:[#allocation6 + $0x280] sm:$0xff]
    %v884 = vld [vmem:[#allocation6 + $0x288] sm:$0xff]
    %v885 = vld [vmem:[#allocation6 + $0x290] sm:$0xff]
    %v886 = vld [vmem:[#allocation6 + $0x298] sm:$0xff]
    %v887 = vld [vmem:[#allocation6 + $0x2a0] sm:$0xff]
    %v888 = vld [vmem:[#allocation6 + $0x2a8] sm:$0xff]
    %v889 = vld [vmem:[#allocation6 + $0x2b0] sm:$0xff]
    %v890 = vld [vmem:[#allocation6 + $0x2b8] sm:$0xff]
    %v891 = vld [vmem:[#allocation6 + $0x2c0] sm:$0xff]
    %v892 = vld [vmem:[#allocation6 + $0x2c8] sm:$0xff]
    %v893 = vld [vmem:[#allocation6 + $0x2d0] sm:$0xff]
    %v894 = vld [vmem:[#allocation6 + $0x2d8] sm:$0xff]
    %v895 = vld [vmem:[#allocation6 + $0x2e0] sm:$0xff]
    %v896 = vld [vmem:[#allocation6 + $0x2e8] sm:$0xff]
    %v897 = vld [vmem:[#allocation6 + $0x2f0] sm:$0xff]
    %v898 = vld [vmem:[#allocation6 + $0x2f8] sm:$0xff]
    %v899 = vld [vmem:[#allocation6 + $0x300] sm:$0xff]
    %v900 = vld [vmem:[#allocation6 + $0x308] sm:$0xff]
    %v901 = vld [vmem:[#allocation6 + $0x310] sm:$0xff]
    %v902 = vld [vmem:[#allocation6 + $0x318] sm:$0xff]
    %v903 = vld [vmem:[#allocation6 + $0x320] sm:$0xff]
    %v904 = vld [vmem:[#allocation6 + $0x328] sm:$0xff]
    %v905 = vld [vmem:[#allocation6 + $0x330] sm:$0xff]
    %v906 = vld [vmem:[#allocation6 + $0x338] sm:$0xff]
    %v907 = vld [vmem:[#allocation6 + $0x340] sm:$0xff]
    %v908 = vld [vmem:[#allocation6 + $0x348] sm:$0xff]
    %v909 = vld [vmem:[#allocation6 + $0x350] sm:$0xff]
    %v910 = vld [vmem:[#allocation6 + $0x358] sm:$0xff]
    %v911 = vld [vmem:[#allocation6 + $0x360] sm:$0xff]
    %v912 = vld [vmem:[#allocation6 + $0x368] sm:$0xff]
    %v913 = vld [vmem:[#allocation6 + $0x370] sm:$0xff]
    %v914 = vld [vmem:[#allocation6 + $0x378] sm:$0xff]
    %v915 = vld [vmem:[#allocation6 + $0x380] sm:$0xff]
    %v916 = vld [vmem:[#allocation6 + $0x388] sm:$0xff]
    %v917 = vld [vmem:[#allocation6 + $0x390] sm:$0xff]
    %v918 = vld [vmem:[#allocation6 + $0x398] sm:$0xff]
    %v919 = vld [vmem:[#allocation6 + $0x3a0] sm:$0xff]
    %v920 = vld [vmem:[#allocation6 + $0x3a8] sm:$0xff]
    %v921 = vld [vmem:[#allocation6 + $0x3b0] sm:$0xff]
    %v922 = vld [vmem:[#allocation6 + $0x3b8] sm:$0xff]
    %v923 = vld [vmem:[#allocation6 + $0x3c0] sm:$0xff]
    %v924 = vld [vmem:[#allocation6 + $0x3c8] sm:$0xff]
    %v925 = vld [vmem:[#allocation6 + $0x3d0] sm:$0xff]
    %v926 = vld [vmem:[#allocation6 + $0x3d8] sm:$0xff]
    %v927 = vld [vmem:[#allocation6 + $0x3e0] sm:$0xff]
    %v928 = vld [vmem:[#allocation6 + $0x3e8] sm:$0xff]
    %v929 = vld [vmem:[#allocation6 + $0x3f0] sm:$0xff]
    %v930 = vld [vmem:[#allocation6 + $0x3f8] sm:$0xff]
    %v931 = vld [vmem:[#allocation6 + $0x400] sm:$0xff]
    %v932 = vld [vmem:[#allocation6 + $0x408] sm:$0xff]
    %v933 = vld [vmem:[#allocation6 + $0x410] sm:$0xff]
    %v934 = vld [vmem:[#allocation6 + $0x418] sm:$0xff]
    %v935 = vld [vmem:[#allocation6 + $0x420] sm:$0xff]
    %v936 = vld [vmem:[#allocation6 + $0x428] sm:$0xff]
    %v937 = vld [vmem:[#allocation6 + $0x430] sm:$0xff]
    %v938 = vld [vmem:[#allocation6 + $0x438] sm:$0xff]
    %v939 = vld [vmem:[#allocation6 + $0x440] sm:$0xff]
    %v940 = vld [vmem:[#allocation6 + $0x448] sm:$0xff]
    %v941 = vld [vmem:[#allocation6 + $0x450] sm:$0xff]
    %v942 = vld [vmem:[#allocation6 + $0x458] sm:$0xff]
    %v943 = vld [vmem:[#allocation6 + $0x460] sm:$0xff]
    %v944 = vld [vmem:[#allocation6 + $0x468] sm:$0xff]
    %v945 = vld [vmem:[#allocation6 + $0x470] sm:$0xff]
    %v946 = vld [vmem:[#allocation6 + $0x478] sm:$0xff]
    %v947 = vld [vmem:[#allocation6 + $0x480] sm:$0xff]
    %v948 = vld [vmem:[#allocation6 + $0x488] sm:$0xff]
    %v949 = vld [vmem:[#allocation6 + $0x490] sm:$0xff]
    %v950 = vld [vmem:[#allocation6 + $0x498] sm:$0xff]
    %v951 = vld [vmem:[#allocation6 + $0x4a0] sm:$0xff]
    %v952 = vld [vmem:[#allocation6 + $0x4a8] sm:$0xff]
    %v953 = vld [vmem:[#allocation6 + $0x4b0] sm:$0xff]
    %v954 = vld [vmem:[#allocation6 + $0x4b8] sm:$0xff]
    %v955 = vld [vmem:[#allocation6 + $0x4c0] sm:$0xff]
    %v956 = vld [vmem:[#allocation6 + $0x4c8] sm:$0xff]
    %v957 = vld [vmem:[#allocation6 + $0x4d0] sm:$0xff]
    %v958 = vld [vmem:[#allocation6 + $0x4d8] sm:$0xff]
    %v959 = vld [vmem:[#allocation6 + $0x4e0] sm:$0xff]
    %v960 = vld [vmem:[#allocation6 + $0x4e8] sm:$0xff]
    %v961 = vld [vmem:[#allocation6 + $0x4f0] sm:$0xff]
    %v962 = vld [vmem:[#allocation6 + $0x4f8] sm:$0xff]
    %v963 = vld [vmem:[#allocation6 + $0x500] sm:$0xff]
    %v964 = vld [vmem:[#allocation6 + $0x508] sm:$0xff]
    %v965 = vld [vmem:[#allocation6 + $0x510] sm:$0xff]
    %v966 = vld [vmem:[#allocation6 + $0x518] sm:$0xff]
    %v967 = vld [vmem:[#allocation6 + $0x520] sm:$0xff]
    %v968 = vld [vmem:[#allocation6 + $0x528] sm:$0xff]
    %v969 = vld [vmem:[#allocation6 + $0x530] sm:$0xff]
    %v970 = vld [vmem:[#allocation6 + $0x538] sm:$0xff]
    %v971 = vld [vmem:[#allocation6 + $0x540] sm:$0xff]
    %v972 = vld [vmem:[#allocation6 + $0x548] sm:$0xff]
    %v973 = vld [vmem:[#allocation6 + $0x550] sm:$0xff]
    %v974 = vld [vmem:[#allocation6 + $0x558] sm:$0xff]
    %v975 = vld [vmem:[#allocation6 + $0x560] sm:$0xff]
    %v976 = vld [vmem:[#allocation6 + $0x568] sm:$0xff]
    %v977 = vld [vmem:[#allocation6 + $0x570] sm:$0xff]
    %v978 = vld [vmem:[#allocation6 + $0x578] sm:$0xff]
    %v979 = vld [vmem:[#allocation6 + $0x580] sm:$0xff]
    %v980 = vld [vmem:[#allocation6 + $0x588] sm:$0xff]
    %v981 = vld [vmem:[#allocation6 + $0x590] sm:$0xff]
    %v982 = vld [vmem:[#allocation6 + $0x598] sm:$0xff]
    %v983 = vld [vmem:[#allocation6 + $0x5a0] sm:$0xff]
    %v984 = vld [vmem:[#allocation6 + $0x5a8] sm:$0xff]
    %v985 = vld [vmem:[#allocation6 + $0x5b0] sm:$0xff]
    %v986 = vld [vmem:[#allocation6 + $0x5b8] sm:$0xff]
    %v987 = vld [vmem:[#allocation6 + $0x5c0] sm:$0xff]
    %v988 = vld [vmem:[#allocation6 + $0x5c8] sm:$0xff]
    %v989 = vld [vmem:[#allocation6 + $0x5d0] sm:$0xff]
    %v990 = vld [vmem:[#allocation6 + $0x5d8] sm:$0xff]
    %v991 = vld [vmem:[#allocation6 + $0x5e0] sm:$0xff]
    %v992 = vld [vmem:[#allocation6 + $0x5e8] sm:$0xff]
    %v993 = vld [vmem:[#allocation6 + $0x5f0] sm:$0xff]
    %v994 = vld [vmem:[#allocation6 + $0x5f8] sm:$0xff]
    %v995 = vld [vmem:[#allocation6 + $0x600] sm:$0xff]
    %v996 = vld [vmem:[#allocation6 + $0x608] sm:$0xff]
    %v997 = vld [vmem:[#allocation6 + $0x610] sm:$0xff]
    %v998 = vld [vmem:[#allocation6 + $0x618] sm:$0xff]
    %v999 = vld [vmem:[#allocation6 + $0x620] sm:$0xff]
    %v1000 = vld [vmem:[#allocation6 + $0x628] sm:$0xff]
    %v1001 = vld [vmem:[#allocation6 + $0x630] sm:$0xff]
    %v1002 = vld [vmem:[#allocation6 + $0x638] sm:$0xff]
    %v1003 = vld [vmem:[#allocation6 + $0x640] sm:$0xff]
    %v1004 = vld [vmem:[#allocation6 + $0x648] sm:$0xff]
    %v1005 = vld [vmem:[#allocation6 + $0x650] sm:$0xff]
    %v1006 = vld [vmem:[#allocation6 + $0x658] sm:$0xff]
    %v1007 = vld [vmem:[#allocation6 + $0x660] sm:$0xff]
    %v1008 = vld [vmem:[#allocation6 + $0x668] sm:$0xff]
    %v1009 = vld [vmem:[#allocation6 + $0x670] sm:$0xff]
    %v1010 = vld [vmem:[#allocation6 + $0x678] sm:$0xff]
    %v1011 = vld [vmem:[#allocation6 + $0x680] sm:$0xff]
    %v1012 = vld [vmem:[#allocation6 + $0x688] sm:$0xff]
    %v1013 = vld [vmem:[#allocation6 + $0x690] sm:$0xff]
    %v1014 = vld [vmem:[#allocation6 + $0x698] sm:$0xff]
    %v1015 = vld [vmem:[#allocation6 + $0x6a0] sm:$0xff]
    %v1016 = vld [vmem:[#allocation6 + $0x6a8] sm:$0xff]
    %v1017 = vld [vmem:[#allocation6 + $0x6b0] sm:$0xff]
    %v1018 = vld [vmem:[#allocation6 + $0x6b8] sm:$0xff]
    %v1019 = vld [vmem:[#allocation6 + $0x6c0] sm:$0xff]
    %v1020 = vld [vmem:[#allocation6 + $0x6c8] sm:$0xff]
    %v1021 = vld [vmem:[#allocation6 + $0x6d0] sm:$0xff]
    %v1022 = vld [vmem:[#allocation6 + $0x6d8] sm:$0xff]
    %v1023 = vld [vmem:[#allocation6 + $0x6e0] sm:$0xff]
    %v1024 = vld [vmem:[#allocation6 + $0x6e8] sm:$0xff]
    %v1025 = vld [vmem:[#allocation6 + $0x6f0] sm:$0xff]
    %v1026 = vld [vmem:[#allocation6 + $0x6f8] sm:$0xff]
    %v1027 = vld [vmem:[#allocation6 + $0x700] sm:$0xff]
    %v1028 = vld [vmem:[#allocation6 + $0x708] sm:$0xff]
    %v1029 = vld [vmem:[#allocation6 + $0x710] sm:$0xff]
    %v1030 = vld [vmem:[#allocation6 + $0x718] sm:$0xff]
    %v1031 = vld [vmem:[#allocation6 + $0x720] sm:$0xff]
    %v1032 = vld [vmem:[#allocation6 + $0x728] sm:$0xff]
    %v1033 = vld [vmem:[#allocation6 + $0x730] sm:$0xff]
    %v1034 = vld [vmem:[#allocation6 + $0x738] sm:$0xff]
    %v1035 = vld [vmem:[#allocation6 + $0x740] sm:$0xff]
    %v1036 = vld [vmem:[#allocation6 + $0x748] sm:$0xff]
    %v1037 = vld [vmem:[#allocation6 + $0x750] sm:$0xff]
    %v1038 = vld [vmem:[#allocation6 + $0x758] sm:$0xff]
    %v1039 = vld [vmem:[#allocation6 + $0x760] sm:$0xff]
    %v1040 = vld [vmem:[#allocation6 + $0x768] sm:$0xff]
    %v1041 = vld [vmem:[#allocation6 + $0x770] sm:$0xff]
    %v1042 = vld [vmem:[#allocation6 + $0x778] sm:$0xff]
    %v1043 = vld [vmem:[#allocation6 + $0x780] sm:$0xff]
    %v1044 = vld [vmem:[#allocation6 + $0x788] sm:$0xff]
    %v1045 = vld [vmem:[#allocation6 + $0x790] sm:$0xff]
    %v1046 = vld [vmem:[#allocation6 + $0x798] sm:$0xff]
    %v1047 = vld [vmem:[#allocation6 + $0x7a0] sm:$0xff]
    %v1048 = vld [vmem:[#allocation6 + $0x7a8] sm:$0xff]
    %v1049 = vld [vmem:[#allocation6 + $0x7b0] sm:$0xff]
    %v1050 = vld [vmem:[#allocation6 + $0x7b8] sm:$0xff]
    %v1051 = vld [vmem:[#allocation6 + $0x7c0] sm:$0xff]
    %v1052 = vld [vmem:[#allocation6 + $0x7c8] sm:$0xff]
    %v1053 = vld [vmem:[#allocation6 + $0x7d0] sm:$0xff]
    %v1054 = vld [vmem:[#allocation6 + $0x7d8] sm:$0xff]
    %v1055 = vld [vmem:[#allocation6 + $0x7e0] sm:$0xff]
    %v1056 = vld [vmem:[#allocation6 + $0x7e8] sm:$0xff]
    %v1057 = vld [vmem:[#allocation6 + $0x7f0] sm:$0xff]
    %v1058 = vld [vmem:[#allocation6 + $0x7f8] sm:$0xff]
    %v1315 = vunpack.c.l.b16 %v803
    %v1316 = vunpack.c.h.b16 %v803
    %v1317 = vunpack.c.l.b16 %v804
    %v1318 = vunpack.c.h.b16 %v804
    %v1319 = vunpack.c.l.b16 %v805
    %v1320 = vunpack.c.h.b16 %v805
    %v1321 = vunpack.c.l.b16 %v806
    %v1322 = vunpack.c.h.b16 %v806
    %v1323 = vunpack.c.l.b16 %v807
    %v1324 = vunpack.c.h.b16 %v807
    %v1325 = vunpack.c.l.b16 %v808
    %v1326 = vunpack.c.h.b16 %v808
    %v1327 = vunpack.c.l.b16 %v809
    %v1328 = vunpack.c.h.b16 %v809
    %v1329 = vunpack.c.l.b16 %v810
    %v1330 = vunpack.c.h.b16 %v810
    %v1331 = vunpack.c.l.b16 %v811
    %v1332 = vunpack.c.h.b16 %v811
    %v1333 = vunpack.c.l.b16 %v812
    %v1334 = vunpack.c.h.b16 %v812
    %v1335 = vunpack.c.l.b16 %v813
    %v1336 = vunpack.c.h.b16 %v813
    %v1337 = vunpack.c.l.b16 %v814
    %v1338 = vunpack.c.h.b16 %v814
    %v1339 = vunpack.c.l.b16 %v815
    %v1340 = vunpack.c.h.b16 %v815
    %v1341 = vunpack.c.l.b16 %v816
    %v1342 = vunpack.c.h.b16 %v816
    %v1343 = vunpack.c.l.b16 %v817
    %v1344 = vunpack.c.h.b16 %v817
    %v1345 = vunpack.c.l.b16 %v818
    %v1346 = vunpack.c.h.b16 %v818
    %v1347 = vunpack.c.l.b16 %v819
    %v1348 = vunpack.c.h.b16 %v819
    %v1349 = vunpack.c.l.b16 %v820
    %v1350 = vunpack.c.h.b16 %v820
    %v1351 = vunpack.c.l.b16 %v821
    %v1352 = vunpack.c.h.b16 %v821
    %v1353 = vunpack.c.l.b16 %v822
    %v1354 = vunpack.c.h.b16 %v822
    %v1355 = vunpack.c.l.b16 %v823
    %v1356 = vunpack.c.h.b16 %v823
    %v1357 = vunpack.c.l.b16 %v824
    %v1358 = vunpack.c.h.b16 %v824
    %v1359 = vunpack.c.l.b16 %v825
    %v1360 = vunpack.c.h.b16 %v825
    %v1361 = vunpack.c.l.b16 %v826
    %v1362 = vunpack.c.h.b16 %v826
    %v1363 = vunpack.c.l.b16 %v827
    %v1364 = vunpack.c.h.b16 %v827
    %v1365 = vunpack.c.l.b16 %v828
    %v1366 = vunpack.c.h.b16 %v828
    %v1367 = vunpack.c.l.b16 %v829
    %v1368 = vunpack.c.h.b16 %v829
    %v1369 = vunpack.c.l.b16 %v830
    %v1370 = vunpack.c.h.b16 %v830
    %v1371 = vunpack.c.l.b16 %v831
    %v1372 = vunpack.c.h.b16 %v831
    %v1373 = vunpack.c.l.b16 %v832
    %v1374 = vunpack.c.h.b16 %v832
    %v1375 = vunpack.c.l.b16 %v833
    %v1376 = vunpack.c.h.b16 %v833
    %v1377 = vunpack.c.l.b16 %v834
    %v1378 = vunpack.c.h.b16 %v834
    %v1379 = vunpack.c.l.b16 %v835
    %v1380 = vunpack.c.h.b16 %v835
    %v1381 = vunpack.c.l.b16 %v836
    %v1382 = vunpack.c.h.b16 %v836
    %v1383 = vunpack.c.l.b16 %v837
    %v1384 = vunpack.c.h.b16 %v837
    %v1385 = vunpack.c.l.b16 %v838
    %v1386 = vunpack.c.h.b16 %v838
    %v1387 = vunpack.c.l.b16 %v839
    %v1388 = vunpack.c.h.b16 %v839
    %v1389 = vunpack.c.l.b16 %v840
    %v1390 = vunpack.c.h.b16 %v840
    %v1391 = vunpack.c.l.b16 %v841
    %v1392 = vunpack.c.h.b16 %v841
    %v1393 = vunpack.c.l.b16 %v842
    %v1394 = vunpack.c.h.b16 %v842
    %v1395 = vunpack.c.l.b16 %v843
    %v1396 = vunpack.c.h.b16 %v843
    %v1397 = vunpack.c.l.b16 %v844
    %v1398 = vunpack.c.h.b16 %v844
    %v1399 = vunpack.c.l.b16 %v845
    %v1400 = vunpack.c.h.b16 %v845
    %v1401 = vunpack.c.l.b16 %v846
    %v1402 = vunpack.c.h.b16 %v846
    %v1403 = vunpack.c.l.b16 %v847
    %v1404 = vunpack.c.h.b16 %v847
    %v1405 = vunpack.c.l.b16 %v848
    %v1406 = vunpack.c.h.b16 %v848
    %v1407 = vunpack.c.l.b16 %v849
    %v1408 = vunpack.c.h.b16 %v849
    %v1409 = vunpack.c.l.b16 %v850
    %v1410 = vunpack.c.h.b16 %v850
    %v1411 = vunpack.c.l.b16 %v851
    %v1412 = vunpack.c.h.b16 %v851
    %v1413 = vunpack.c.l.b16 %v852
    %v1414 = vunpack.c.h.b16 %v852
    %v1415 = vunpack.c.l.b16 %v853
    %v1416 = vunpack.c.h.b16 %v853
    %v1417 = vunpack.c.l.b16 %v854
    %v1418 = vunpack.c.h.b16 %v854
    %v1419 = vunpack.c.l.b16 %v855
    %v1420 = vunpack.c.h.b16 %v855
    %v1421 = vunpack.c.l.b16 %v856
    %v1422 = vunpack.c.h.b16 %v856
    %v1423 = vunpack.c.l.b16 %v857
    %v1424 = vunpack.c.h.b16 %v857
    %v1425 = vunpack.c.l.b16 %v858
    %v1426 = vunpack.c.h.b16 %v858
    %v1427 = vunpack.c.l.b16 %v859
    %v1428 = vunpack.c.h.b16 %v859
    %v1429 = vunpack.c.l.b16 %v860
    %v1430 = vunpack.c.h.b16 %v860
    %v1431 = vunpack.c.l.b16 %v861
    %v1432 = vunpack.c.h.b16 %v861
    %v1433 = vunpack.c.l.b16 %v862
    %v1434 = vunpack.c.h.b16 %v862
    %v1435 = vunpack.c.l.b16 %v863
    %v1436 = vunpack.c.h.b16 %v863
    %v1437 = vunpack.c.l.b16 %v864
    %v1438 = vunpack.c.h.b16 %v864
    %v1439 = vunpack.c.l.b16 %v865
    %v1440 = vunpack.c.h.b16 %v865
    %v1441 = vunpack.c.l.b16 %v866
    %v1442 = vunpack.c.h.b16 %v866
    %v1443 = vunpack.c.l.b16 %v867
    %v1444 = vunpack.c.h.b16 %v867
    %v1445 = vunpack.c.l.b16 %v868
    %v1446 = vunpack.c.h.b16 %v868
    %v1447 = vunpack.c.l.b16 %v869
    %v1448 = vunpack.c.h.b16 %v869
    %v1449 = vunpack.c.l.b16 %v870
    %v1450 = vunpack.c.h.b16 %v870
    %v1451 = vunpack.c.l.b16 %v871
    %v1452 = vunpack.c.h.b16 %v871
    %v1453 = vunpack.c.l.b16 %v872
    %v1454 = vunpack.c.h.b16 %v872
    %v1455 = vunpack.c.l.b16 %v873
    %v1456 = vunpack.c.h.b16 %v873
    %v1457 = vunpack.c.l.b16 %v874
    %v1458 = vunpack.c.h.b16 %v874
    %v1459 = vunpack.c.l.b16 %v875
    %v1460 = vunpack.c.h.b16 %v875
    %v1461 = vunpack.c.l.b16 %v876
    %v1462 = vunpack.c.h.b16 %v876
    %v1463 = vunpack.c.l.b16 %v877
    %v1464 = vunpack.c.h.b16 %v877
    %v1465 = vunpack.c.l.b16 %v878
    %v1466 = vunpack.c.h.b16 %v878
    %v1467 = vunpack.c.l.b16 %v879
    %v1468 = vunpack.c.h.b16 %v879
    %v1469 = vunpack.c.l.b16 %v880
    %v1470 = vunpack.c.h.b16 %v880
    %v1471 = vunpack.c.l.b16 %v881
    %v1472 = vunpack.c.h.b16 %v881
    %v1473 = vunpack.c.l.b16 %v882
    %v1474 = vunpack.c.h.b16 %v882
    %v1475 = vunpack.c.l.b16 %v883
    %v1476 = vunpack.c.h.b16 %v883
    %v1477 = vunpack.c.l.b16 %v884
    %v1478 = vunpack.c.h.b16 %v884
    %v1479 = vunpack.c.l.b16 %v885
    %v1480 = vunpack.c.h.b16 %v885
    %v1481 = vunpack.c.l.b16 %v886
    %v1482 = vunpack.c.h.b16 %v886
    %v1483 = vunpack.c.l.b16 %v887
    %v1484 = vunpack.c.h.b16 %v887
    %v1485 = vunpack.c.l.b16 %v888
    %v1486 = vunpack.c.h.b16 %v888
    %v1487 = vunpack.c.l.b16 %v889
    %v1488 = vunpack.c.h.b16 %v889
    %v1489 = vunpack.c.l.b16 %v890
    %v1490 = vunpack.c.h.b16 %v890
    %v1491 = vunpack.c.l.b16 %v891
    %v1492 = vunpack.c.h.b16 %v891
    %v1493 = vunpack.c.l.b16 %v892
    %v1494 = vunpack.c.h.b16 %v892
    %v1495 = vunpack.c.l.b16 %v893
    %v1496 = vunpack.c.h.b16 %v893
    %v1497 = vunpack.c.l.b16 %v894
    %v1498 = vunpack.c.h.b16 %v894
    %v1499 = vunpack.c.l.b16 %v895
    %v1500 = vunpack.c.h.b16 %v895
    %v1501 = vunpack.c.l.b16 %v896
    %v1502 = vunpack.c.h.b16 %v896
    %v1503 = vunpack.c.l.b16 %v897
    %v1504 = vunpack.c.h.b16 %v897
    %v1505 = vunpack.c.l.b16 %v898
    %v1506 = vunpack.c.h.b16 %v898
    %v1507 = vunpack.c.l.b16 %v899
    %v1508 = vunpack.c.h.b16 %v899
    %v1509 = vunpack.c.l.b16 %v900
    %v1510 = vunpack.c.h.b16 %v900
    %v1511 = vunpack.c.l.b16 %v901
    %v1512 = vunpack.c.h.b16 %v901
    %v1513 = vunpack.c.l.b16 %v902
    %v1514 = vunpack.c.h.b16 %v902
    %v1515 = vunpack.c.l.b16 %v903
    %v1516 = vunpack.c.h.b16 %v903
    %v1517 = vunpack.c.l.b16 %v904
    %v1518 = vunpack.c.h.b16 %v904
    %v1519 = vunpack.c.l.b16 %v905
    %v1520 = vunpack.c.h.b16 %v905
    %v1521 = vunpack.c.l.b16 %v906
    %v1522 = vunpack.c.h.b16 %v906
    %v1523 = vunpack.c.l.b16 %v907
    %v1524 = vunpack.c.h.b16 %v907
    %v1525 = vunpack.c.l.b16 %v908
    %v1526 = vunpack.c.h.b16 %v908
    %v1527 = vunpack.c.l.b16 %v909
    %v1528 = vunpack.c.h.b16 %v909
    %v1529 = vunpack.c.l.b16 %v910
    %v1530 = vunpack.c.h.b16 %v910
    %v1531 = vunpack.c.l.b16 %v911
    %v1532 = vunpack.c.h.b16 %v911
    %v1533 = vunpack.c.l.b16 %v912
    %v1534 = vunpack.c.h.b16 %v912
    %v1535 = vunpack.c.l.b16 %v913
    %v1536 = vunpack.c.h.b16 %v913
    %v1537 = vunpack.c.l.b16 %v914
    %v1538 = vunpack.c.h.b16 %v914
    %v1539 = vunpack.c.l.b16 %v915
    %v1540 = vunpack.c.h.b16 %v915
    %v1541 = vunpack.c.l.b16 %v916
    %v1542 = vunpack.c.h.b16 %v916
    %v1543 = vunpack.c.l.b16 %v917
    %v1544 = vunpack.c.h.b16 %v917
    %v1545 = vunpack.c.l.b16 %v918
    %v1546 = vunpack.c.h.b16 %v918
    %v1547 = vunpack.c.l.b16 %v919
    %v1548 = vunpack.c.h.b16 %v919
    %v1549 = vunpack.c.l.b16 %v920
    %v1550 = vunpack.c.h.b16 %v920
    %v1551 = vunpack.c.l.b16 %v921
    %v1552 = vunpack.c.h.b16 %v921
    %v1553 = vunpack.c.l.b16 %v922
    %v1554 = vunpack.c.h.b16 %v922
    %v1555 = vunpack.c.l.b16 %v923
    %v1556 = vunpack.c.h.b16 %v923
    %v1557 = vunpack.c.l.b16 %v924
    %v1558 = vunpack.c.h.b16 %v924
    %v1559 = vunpack.c.l.b16 %v925
    %v1560 = vunpack.c.h.b16 %v925
    %v1561 = vunpack.c.l.b16 %v926
    %v1562 = vunpack.c.h.b16 %v926
    %v1563 = vunpack.c.l.b16 %v927
    %v1564 = vunpack.c.h.b16 %v927
    %v1565 = vunpack.c.l.b16 %v928
    %v1566 = vunpack.c.h.b16 %v928
    %v1567 = vunpack.c.l.b16 %v929
    %v1568 = vunpack.c.h.b16 %v929
    %v1569 = vunpack.c.l.b16 %v930
    %v1570 = vunpack.c.h.b16 %v930
    %v1571 = vunpack.c.l.b16 %v931
    %v1572 = vunpack.c.h.b16 %v931
    %v1573 = vunpack.c.l.b16 %v932
    %v1574 = vunpack.c.h.b16 %v932
    %v1575 = vunpack.c.l.b16 %v933
    %v1576 = vunpack.c.h.b16 %v933
    %v1577 = vunpack.c.l.b16 %v934
    %v1578 = vunpack.c.h.b16 %v934
    %v1579 = vunpack.c.l.b16 %v935
    %v1580 = vunpack.c.h.b16 %v935
    %v1581 = vunpack.c.l.b16 %v936
    %v1582 = vunpack.c.h.b16 %v936
    %v1583 = vunpack.c.l.b16 %v937
    %v1584 = vunpack.c.h.b16 %v937
    %v1585 = vunpack.c.l.b16 %v938
    %v1586 = vunpack.c.h.b16 %v938
    %v1587 = vunpack.c.l.b16 %v939
    %v1588 = vunpack.c.h.b16 %v939
    %v1589 = vunpack.c.l.b16 %v940
    %v1590 = vunpack.c.h.b16 %v940
    %v1591 = vunpack.c.l.b16 %v941
    %v1592 = vunpack.c.h.b16 %v941
    %v1593 = vunpack.c.l.b16 %v942
    %v1594 = vunpack.c.h.b16 %v942
    %v1595 = vunpack.c.l.b16 %v943
    %v1596 = vunpack.c.h.b16 %v943
    %v1597 = vunpack.c.l.b16 %v944
    %v1598 = vunpack.c.h.b16 %v944
    %v1599 = vunpack.c.l.b16 %v945
    %v1600 = vunpack.c.h.b16 %v945
    %v1601 = vunpack.c.l.b16 %v946
    %v1602 = vunpack.c.h.b16 %v946
    %v1603 = vunpack.c.l.b16 %v947
    %v1604 = vunpack.c.h.b16 %v947
    %v1605 = vunpack.c.l.b16 %v948
    %v1606 = vunpack.c.h.b16 %v948
    %v1607 = vunpack.c.l.b16 %v949
    %v1608 = vunpack.c.h.b16 %v949
    %v1609 = vunpack.c.l.b16 %v950
    %v1610 = vunpack.c.h.b16 %v950
    %v1611 = vunpack.c.l.b16 %v951
    %v1612 = vunpack.c.h.b16 %v951
    %v1613 = vunpack.c.l.b16 %v952
    %v1614 = vunpack.c.h.b16 %v952
    %v1615 = vunpack.c.l.b16 %v953
    %v1616 = vunpack.c.h.b16 %v953
    %v1617 = vunpack.c.l.b16 %v954
    %v1618 = vunpack.c.h.b16 %v954
    %v1619 = vunpack.c.l.b16 %v955
    %v1620 = vunpack.c.h.b16 %v955
    %v1621 = vunpack.c.l.b16 %v956
    %v1622 = vunpack.c.h.b16 %v956
    %v1623 = vunpack.c.l.b16 %v957
    %v1624 = vunpack.c.h.b16 %v957
    %v1625 = vunpack.c.l.b16 %v958
    %v1626 = vunpack.c.h.b16 %v958
    %v1627 = vunpack.c.l.b16 %v959
    %v1628 = vunpack.c.h.b16 %v959
    %v1629 = vunpack.c.l.b16 %v960
    %v1630 = vunpack.c.h.b16 %v960
    %v1631 = vunpack.c.l.b16 %v961
    %v1632 = vunpack.c.h.b16 %v961
    %v1633 = vunpack.c.l.b16 %v962
    %v1634 = vunpack.c.h.b16 %v962
    %v1635 = vunpack.c.l.b16 %v963
    %v1636 = vunpack.c.h.b16 %v963
    %v1637 = vunpack.c.l.b16 %v964
    %v1638 = vunpack.c.h.b16 %v964
    %v1639 = vunpack.c.l.b16 %v965
    %v1640 = vunpack.c.h.b16 %v965
    %v1641 = vunpack.c.l.b16 %v966
    %v1642 = vunpack.c.h.b16 %v966
    %v1643 = vunpack.c.l.b16 %v967
    %v1644 = vunpack.c.h.b16 %v967
    %v1645 = vunpack.c.l.b16 %v968
    %v1646 = vunpack.c.h.b16 %v968
    %v1647 = vunpack.c.l.b16 %v969
    %v1648 = vunpack.c.h.b16 %v969
    %v1649 = vunpack.c.l.b16 %v970
    %v1650 = vunpack.c.h.b16 %v970
    %v1651 = vunpack.c.l.b16 %v971
    %v1652 = vunpack.c.h.b16 %v971
    %v1653 = vunpack.c.l.b16 %v972
    %v1654 = vunpack.c.h.b16 %v972
    %v1655 = vunpack.c.l.b16 %v973
    %v1656 = vunpack.c.h.b16 %v973
    %v1657 = vunpack.c.l.b16 %v974
    %v1658 = vunpack.c.h.b16 %v974
    %v1659 = vunpack.c.l.b16 %v975
    %v1660 = vunpack.c.h.b16 %v975
    %v1661 = vunpack.c.l.b16 %v976
    %v1662 = vunpack.c.h.b16 %v976
    %v1663 = vunpack.c.l.b16 %v977
    %v1664 = vunpack.c.h.b16 %v977
    %v1665 = vunpack.c.l.b16 %v978
    %v1666 = vunpack.c.h.b16 %v978
    %v1667 = vunpack.c.l.b16 %v979
    %v1668 = vunpack.c.h.b16 %v979
    %v1669 = vunpack.c.l.b16 %v980
    %v1670 = vunpack.c.h.b16 %v980
    %v1671 = vunpack.c.l.b16 %v981
    %v1672 = vunpack.c.h.b16 %v981
    %v1673 = vunpack.c.l.b16 %v982
    %v1674 = vunpack.c.h.b16 %v982
    %v1675 = vunpack.c.l.b16 %v983
    %v1676 = vunpack.c.h.b16 %v983
    %v1677 = vunpack.c.l.b16 %v984
    %v1678 = vunpack.c.h.b16 %v984
    %v1679 = vunpack.c.l.b16 %v985
    %v1680 = vunpack.c.h.b16 %v985
    %v1681 = vunpack.c.l.b16 %v986
    %v1682 = vunpack.c.h.b16 %v986
    %v1683 = vunpack.c.l.b16 %v987
    %v1684 = vunpack.c.h.b16 %v987
    %v1685 = vunpack.c.l.b16 %v988
    %v1686 = vunpack.c.h.b16 %v988
    %v1687 = vunpack.c.l.b16 %v989
    %v1688 = vunpack.c.h.b16 %v989
    %v1689 = vunpack.c.l.b16 %v990
    %v1690 = vunpack.c.h.b16 %v990
    %v1691 = vunpack.c.l.b16 %v991
    %v1692 = vunpack.c.h.b16 %v991
    %v1693 = vunpack.c.l.b16 %v992
    %v1694 = vunpack.c.h.b16 %v992
    %v1695 = vunpack.c.l.b16 %v993
    %v1696 = vunpack.c.h.b16 %v993
    %v1697 = vunpack.c.l.b16 %v994
    %v1698 = vunpack.c.h.b16 %v994
    %v1699 = vunpack.c.l.b16 %v995
    %v1700 = vunpack.c.h.b16 %v995
    %v1701 = vunpack.c.l.b16 %v996
    %v1702 = vunpack.c.h.b16 %v996
    %v1703 = vunpack.c.l.b16 %v997
    %v1704 = vunpack.c.h.b16 %v997
    %v1705 = vunpack.c.l.b16 %v998
    %v1706 = vunpack.c.h.b16 %v998
    %v1707 = vunpack.c.l.b16 %v999
    %v1708 = vunpack.c.h.b16 %v999
    %v1709 = vunpack.c.l.b16 %v1000
    %v1710 = vunpack.c.h.b16 %v1000
    %v1711 = vunpack.c.l.b16 %v1001
    %v1712 = vunpack.c.h.b16 %v1001
    %v1713 = vunpack.c.l.b16 %v1002
    %v1714 = vunpack.c.h.b16 %v1002
    %v1715 = vunpack.c.l.b16 %v1003
    %v1716 = vunpack.c.h.b16 %v1003
    %v1717 = vunpack.c.l.b16 %v1004
    %v1718 = vunpack.c.h.b16 %v1004
    %v1719 = vunpack.c.l.b16 %v1005
    %v1720 = vunpack.c.h.b16 %v1005
    %v1721 = vunpack.c.l.b16 %v1006
    %v1722 = vunpack.c.h.b16 %v1006
    %v1723 = vunpack.c.l.b16 %v1007
    %v1724 = vunpack.c.h.b16 %v1007
    %v1725 = vunpack.c.l.b16 %v1008
    %v1726 = vunpack.c.h.b16 %v1008
    %v1727 = vunpack.c.l.b16 %v1009
    %v1728 = vunpack.c.h.b16 %v1009
    %v1729 = vunpack.c.l.b16 %v1010
    %v1730 = vunpack.c.h.b16 %v1010
    %v1731 = vunpack.c.l.b16 %v1011
    %v1732 = vunpack.c.h.b16 %v1011
    %v1733 = vunpack.c.l.b16 %v1012
    %v1734 = vunpack.c.h.b16 %v1012
    %v1735 = vunpack.c.l.b16 %v1013
    %v1736 = vunpack.c.h.b16 %v1013
    %v1737 = vunpack.c.l.b16 %v1014
    %v1738 = vunpack.c.h.b16 %v1014
    %v1739 = vunpack.c.l.b16 %v1015
    %v1740 = vunpack.c.h.b16 %v1015
    %v1741 = vunpack.c.l.b16 %v1016
    %v1742 = vunpack.c.h.b16 %v1016
    %v1743 = vunpack.c.l.b16 %v1017
    %v1744 = vunpack.c.h.b16 %v1017
    %v1745 = vunpack.c.l.b16 %v1018
    %v1746 = vunpack.c.h.b16 %v1018
    %v1747 = vunpack.c.l.b16 %v1019
    %v1748 = vunpack.c.h.b16 %v1019
    %v1749 = vunpack.c.l.b16 %v1020
    %v1750 = vunpack.c.h.b16 %v1020
    %v1751 = vunpack.c.l.b16 %v1021
    %v1752 = vunpack.c.h.b16 %v1021
    %v1753 = vunpack.c.l.b16 %v1022
    %v1754 = vunpack.c.h.b16 %v1022
    %v1755 = vunpack.c.l.b16 %v1023
    %v1756 = vunpack.c.h.b16 %v1023
    %v1757 = vunpack.c.l.b16 %v1024
    %v1758 = vunpack.c.h.b16 %v1024
    %v1759 = vunpack.c.l.b16 %v1025
    %v1760 = vunpack.c.h.b16 %v1025
    %v1761 = vunpack.c.l.b16 %v1026
    %v1762 = vunpack.c.h.b16 %v1026
    %v1763 = vunpack.c.l.b16 %v1027
    %v1764 = vunpack.c.h.b16 %v1027
    %v1765 = vunpack.c.l.b16 %v1028
    %v1766 = vunpack.c.h.b16 %v1028
    %v1767 = vunpack.c.l.b16 %v1029
    %v1768 = vunpack.c.h.b16 %v1029
    %v1769 = vunpack.c.l.b16 %v1030
    %v1770 = vunpack.c.h.b16 %v1030
    %v1771 = vunpack.c.l.b16 %v1031
    %v1772 = vunpack.c.h.b16 %v1031
    %v1773 = vunpack.c.l.b16 %v1032
    %v1774 = vunpack.c.h.b16 %v1032
    %v1775 = vunpack.c.l.b16 %v1033
    %v1776 = vunpack.c.h.b16 %v1033
    %v1777 = vunpack.c.l.b16 %v1034
    %v1778 = vunpack.c.h.b16 %v1034
    %v1779 = vunpack.c.l.b16 %v1035
    %v1780 = vunpack.c.h.b16 %v1035
    %v1781 = vunpack.c.l.b16 %v1036
    %v1782 = vunpack.c.h.b16 %v1036
    %v1783 = vunpack.c.l.b16 %v1037
    %v1784 = vunpack.c.h.b16 %v1037
    %v1785 = vunpack.c.l.b16 %v1038
    %v1786 = vunpack.c.h.b16 %v1038
    %v1787 = vunpack.c.l.b16 %v1039
    %v1788 = vunpack.c.h.b16 %v1039
    %v1789 = vunpack.c.l.b16 %v1040
    %v1790 = vunpack.c.h.b16 %v1040
    %v1791 = vunpack.c.l.b16 %v1041
    %v1792 = vunpack.c.h.b16 %v1041
    %v1793 = vunpack.c.l.b16 %v1042
    %v1794 = vunpack.c.h.b16 %v1042
    %v1795 = vunpack.c.l.b16 %v1043
    %v1796 = vunpack.c.h.b16 %v1043
    %v1797 = vunpack.c.l.b16 %v1044
    %v1798 = vunpack.c.h.b16 %v1044
    %v1799 = vunpack.c.l.b16 %v1045
    %v1800 = vunpack.c.h.b16 %v1045
    %v1801 = vunpack.c.l.b16 %v1046
    %v1802 = vunpack.c.h.b16 %v1046
    %v1803 = vunpack.c.l.b16 %v1047
    %v1804 = vunpack.c.h.b16 %v1047
    %v1805 = vunpack.c.l.b16 %v1048
    %v1806 = vunpack.c.h.b16 %v1048
    %v1807 = vunpack.c.l.b16 %v1049
    %v1808 = vunpack.c.h.b16 %v1049
    %v1809 = vunpack.c.l.b16 %v1050
    %v1810 = vunpack.c.h.b16 %v1050
    %v1811 = vunpack.c.l.b16 %v1051
    %v1812 = vunpack.c.h.b16 %v1051
    %v1813 = vunpack.c.l.b16 %v1052
    %v1814 = vunpack.c.h.b16 %v1052
    %v1815 = vunpack.c.l.b16 %v1053
    %v1816 = vunpack.c.h.b16 %v1053
    %v1817 = vunpack.c.l.b16 %v1054
    %v1818 = vunpack.c.h.b16 %v1054
    %v1819 = vunpack.c.l.b16 %v1055
    %v1820 = vunpack.c.h.b16 %v1055
    %v1821 = vunpack.c.l.b16 %v1056
    %v1822 = vunpack.c.h.b16 %v1056
    %v1823 = vunpack.c.l.b16 %v1057
    %v1824 = vunpack.c.h.b16 %v1057
    %v1825 = vunpack.c.l.b16 %v1058
    %v1826 = vunpack.c.h.b16 %v1058
    %v1827 = vpack.c.b16 %v1323, %v1315
    %v1828 = vpack.c.b16 %v1324, %v1316
    %v1829 = vpack.c.b16 %v1325, %v1317
    %v1830 = vpack.c.b16 %v1326, %v1318
    %v1831 = vpack.c.b16 %v1327, %v1319
    %v1832 = vpack.c.b16 %v1328, %v1320
    %v1833 = vpack.c.b16 %v1329, %v1321
    %v1834 = vpack.c.b16 %v1330, %v1322
    %v1835 = vpack.c.b16 %v1339, %v1331
    %v1836 = vpack.c.b16 %v1340, %v1332
    %v1837 = vpack.c.b16 %v1341, %v1333
    %v1838 = vpack.c.b16 %v1342, %v1334
    %v1839 = vpack.c.b16 %v1343, %v1335
    %v1840 = vpack.c.b16 %v1344, %v1336
    %v1841 = vpack.c.b16 %v1345, %v1337
    %v1842 = vpack.c.b16 %v1346, %v1338
    %v1843 = vpack.c.b16 %v1355, %v1347
    %v1844 = vpack.c.b16 %v1356, %v1348
    %v1845 = vpack.c.b16 %v1357, %v1349
    %v1846 = vpack.c.b16 %v1358, %v1350
    %v1847 = vpack.c.b16 %v1359, %v1351
    %v1848 = vpack.c.b16 %v1360, %v1352
    %v1849 = vpack.c.b16 %v1361, %v1353
    %v1850 = vpack.c.b16 %v1362, %v1354
    %v1851 = vpack.c.b16 %v1371, %v1363
    %v1852 = vpack.c.b16 %v1372, %v1364
    %v1853 = vpack.c.b16 %v1373, %v1365
    %v1854 = vpack.c.b16 %v1374, %v1366
    %v1855 = vpack.c.b16 %v1375, %v1367
    %v1856 = vpack.c.b16 %v1376, %v1368
    %v1857 = vpack.c.b16 %v1377, %v1369
    %v1858 = vpack.c.b16 %v1378, %v1370
    %v1859 = vpack.c.b16 %v1387, %v1379
    %v1860 = vpack.c.b16 %v1388, %v1380
    %v1861 = vpack.c.b16 %v1389, %v1381
    %v1862 = vpack.c.b16 %v1390, %v1382
    %v1863 = vpack.c.b16 %v1391, %v1383
    %v1864 = vpack.c.b16 %v1392, %v1384
    %v1865 = vpack.c.b16 %v1393, %v1385
    %v1866 = vpack.c.b16 %v1394, %v1386
    %v1867 = vpack.c.b16 %v1403, %v1395
    %v1868 = vpack.c.b16 %v1404, %v1396
    %v1869 = vpack.c.b16 %v1405, %v1397
    %v1870 = vpack.c.b16 %v1406, %v1398
    %v1871 = vpack.c.b16 %v1407, %v1399
    %v1872 = vpack.c.b16 %v1408, %v1400
    %v1873 = vpack.c.b16 %v1409, %v1401
    %v1874 = vpack.c.b16 %v1410, %v1402
    %v1875 = vpack.c.b16 %v1419, %v1411
    %v1876 = vpack.c.b16 %v1420, %v1412
    %v1877 = vpack.c.b16 %v1421, %v1413
    %v1878 = vpack.c.b16 %v1422, %v1414
    %v1879 = vpack.c.b16 %v1423, %v1415
    %v1880 = vpack.c.b16 %v1424, %v1416
    %v1881 = vpack.c.b16 %v1425, %v1417
    %v1882 = vpack.c.b16 %v1426, %v1418
    %v1883 = vpack.c.b16 %v1435, %v1427
    %v1884 = vpack.c.b16 %v1436, %v1428
    %v1885 = vpack.c.b16 %v1437, %v1429
    %v1886 = vpack.c.b16 %v1438, %v1430
    %v1887 = vpack.c.b16 %v1439, %v1431
    %v1888 = vpack.c.b16 %v1440, %v1432
    %v1889 = vpack.c.b16 %v1441, %v1433
    %v1890 = vpack.c.b16 %v1442, %v1434
    %v1891 = vpack.c.b16 %v1451, %v1443
    %v1892 = vpack.c.b16 %v1452, %v1444
    %v1893 = vpack.c.b16 %v1453, %v1445
    %v1894 = vpack.c.b16 %v1454, %v1446
    %v1895 = vpack.c.b16 %v1455, %v1447
    %v1896 = vpack.c.b16 %v1456, %v1448
    %v1897 = vpack.c.b16 %v1457, %v1449
    %v1898 = vpack.c.b16 %v1458, %v1450
    %v1899 = vpack.c.b16 %v1467, %v1459
    %v1900 = vpack.c.b16 %v1468, %v1460
    %v1901 = vpack.c.b16 %v1469, %v1461
    %v1902 = vpack.c.b16 %v1470, %v1462
    %v1903 = vpack.c.b16 %v1471, %v1463
    %v1904 = vpack.c.b16 %v1472, %v1464
    %v1905 = vpack.c.b16 %v1473, %v1465
    %v1906 = vpack.c.b16 %v1474, %v1466
    %v1907 = vpack.c.b16 %v1483, %v1475
    %v1908 = vpack.c.b16 %v1484, %v1476
    %v1909 = vpack.c.b16 %v1485, %v1477
    %v1910 = vpack.c.b16 %v1486, %v1478
    %v1911 = vpack.c.b16 %v1487, %v1479
    %v1912 = vpack.c.b16 %v1488, %v1480
    %v1913 = vpack.c.b16 %v1489, %v1481
    %v1914 = vpack.c.b16 %v1490, %v1482
    %v1915 = vpack.c.b16 %v1499, %v1491
    %v1916 = vpack.c.b16 %v1500, %v1492
    %v1917 = vpack.c.b16 %v1501, %v1493
    %v1918 = vpack.c.b16 %v1502, %v1494
    %v1919 = vpack.c.b16 %v1503, %v1495
    %v1920 = vpack.c.b16 %v1504, %v1496
    %v1921 = vpack.c.b16 %v1505, %v1497
    %v1922 = vpack.c.b16 %v1506, %v1498
    %v1923 = vpack.c.b16 %v1515, %v1507
    %v1924 = vpack.c.b16 %v1516, %v1508
    %v1925 = vpack.c.b16 %v1517, %v1509
    %v1926 = vpack.c.b16 %v1518, %v1510
    %v1927 = vpack.c.b16 %v1519, %v1511
    %v1928 = vpack.c.b16 %v1520, %v1512
    %v1929 = vpack.c.b16 %v1521, %v1513
    %v1930 = vpack.c.b16 %v1522, %v1514
    %v1931 = vpack.c.b16 %v1531, %v1523
    %v1932 = vpack.c.b16 %v1532, %v1524
    %v1933 = vpack.c.b16 %v1533, %v1525
    %v1934 = vpack.c.b16 %v1534, %v1526
    %v1935 = vpack.c.b16 %v1535, %v1527
    %v1936 = vpack.c.b16 %v1536, %v1528
    %v1937 = vpack.c.b16 %v1537, %v1529
    %v1938 = vpack.c.b16 %v1538, %v1530
    %v1939 = vpack.c.b16 %v1547, %v1539
    %v1940 = vpack.c.b16 %v1548, %v1540
    %v1941 = vpack.c.b16 %v1549, %v1541
    %v1942 = vpack.c.b16 %v1550, %v1542
    %v1943 = vpack.c.b16 %v1551, %v1543
    %v1944 = vpack.c.b16 %v1552, %v1544
    %v1945 = vpack.c.b16 %v1553, %v1545
    %v1946 = vpack.c.b16 %v1554, %v1546
    %v1947 = vpack.c.b16 %v1563, %v1555
    %v1948 = vpack.c.b16 %v1564, %v1556
    %v1949 = vpack.c.b16 %v1565, %v1557
    %v1950 = vpack.c.b16 %v1566, %v1558
    %v1951 = vpack.c.b16 %v1567, %v1559
    %v1952 = vpack.c.b16 %v1568, %v1560
    %v1953 = vpack.c.b16 %v1569, %v1561
    %v1954 = vpack.c.b16 %v1570, %v1562
    %v1955 = vpack.c.b16 %v1579, %v1571
    %v1956 = vpack.c.b16 %v1580, %v1572
    %v1957 = vpack.c.b16 %v1581, %v1573
    %v1958 = vpack.c.b16 %v1582, %v1574
    %v1959 = vpack.c.b16 %v1583, %v1575
    %v1960 = vpack.c.b16 %v1584, %v1576
    %v1961 = vpack.c.b16 %v1585, %v1577
    %v1962 = vpack.c.b16 %v1586, %v1578
    %v1963 = vpack.c.b16 %v1595, %v1587
    %v1964 = vpack.c.b16 %v1596, %v1588
    %v1965 = vpack.c.b16 %v1597, %v1589
    %v1966 = vpack.c.b16 %v1598, %v1590
    %v1967 = vpack.c.b16 %v1599, %v1591
    %v1968 = vpack.c.b16 %v1600, %v1592
    %v1969 = vpack.c.b16 %v1601, %v1593
    %v1970 = vpack.c.b16 %v1602, %v1594
    %v1971 = vpack.c.b16 %v1611, %v1603
    %v1972 = vpack.c.b16 %v1612, %v1604
    %v1973 = vpack.c.b16 %v1613, %v1605
    %v1974 = vpack.c.b16 %v1614, %v1606
    %v1975 = vpack.c.b16 %v1615, %v1607
    %v1976 = vpack.c.b16 %v1616, %v1608
    %v1977 = vpack.c.b16 %v1617, %v1609
    %v1978 = vpack.c.b16 %v1618, %v1610
    %v1979 = vpack.c.b16 %v1627, %v1619
    %v1980 = vpack.c.b16 %v1628, %v1620
    %v1981 = vpack.c.b16 %v1629, %v1621
    %v1982 = vpack.c.b16 %v1630, %v1622
    %v1983 = vpack.c.b16 %v1631, %v1623
    %v1984 = vpack.c.b16 %v1632, %v1624
    %v1985 = vpack.c.b16 %v1633, %v1625
    %v1986 = vpack.c.b16 %v1634, %v1626
    %v1987 = vpack.c.b16 %v1643, %v1635
    %v1988 = vpack.c.b16 %v1644, %v1636
    %v1989 = vpack.c.b16 %v1645, %v1637
    %v1990 = vpack.c.b16 %v1646, %v1638
    %v1991 = vpack.c.b16 %v1647, %v1639
    %v1992 = vpack.c.b16 %v1648, %v1640
    %v1993 = vpack.c.b16 %v1649, %v1641
    %v1994 = vpack.c.b16 %v1650, %v1642
    %v1995 = vpack.c.b16 %v1659, %v1651
    %v1996 = vpack.c.b16 %v1660, %v1652
    %v1997 = vpack.c.b16 %v1661, %v1653
    %v1998 = vpack.c.b16 %v1662, %v1654
    %v1999 = vpack.c.b16 %v1663, %v1655
    %v2000 = vpack.c.b16 %v1664, %v1656
    %v2001 = vpack.c.b16 %v1665, %v1657
    %v2002 = vpack.c.b16 %v1666, %v1658
    %v2003 = vpack.c.b16 %v1675, %v1667
    %v2004 = vpack.c.b16 %v1676, %v1668
    %v2005 = vpack.c.b16 %v1677, %v1669
    %v2006 = vpack.c.b16 %v1678, %v1670
    %v2007 = vpack.c.b16 %v1679, %v1671
    %v2008 = vpack.c.b16 %v1680, %v1672
    %v2009 = vpack.c.b16 %v1681, %v1673
    %v2010 = vpack.c.b16 %v1682, %v1674
    %v2011 = vpack.c.b16 %v1691, %v1683
    %v2012 = vpack.c.b16 %v1692, %v1684
    %v2013 = vpack.c.b16 %v1693, %v1685
    %v2014 = vpack.c.b16 %v1694, %v1686
    %v2015 = vpack.c.b16 %v1695, %v1687
    %v2016 = vpack.c.b16 %v1696, %v1688
    %v2017 = vpack.c.b16 %v1697, %v1689
    %v2018 = vpack.c.b16 %v1698, %v1690
    %v2019 = vpack.c.b16 %v1707, %v1699
    %v2020 = vpack.c.b16 %v1708, %v1700
    %v2021 = vpack.c.b16 %v1709, %v1701
    %v2022 = vpack.c.b16 %v1710, %v1702
    %v2023 = vpack.c.b16 %v1711, %v1703
    %v2024 = vpack.c.b16 %v1712, %v1704
    %v2025 = vpack.c.b16 %v1713, %v1705
    %v2026 = vpack.c.b16 %v1714, %v1706
    %v2027 = vpack.c.b16 %v1723, %v1715
    %v2028 = vpack.c.b16 %v1724, %v1716
    %v2029 = vpack.c.b16 %v1725, %v1717
    %v2030 = vpack.c.b16 %v1726, %v1718
    %v2031 = vpack.c.b16 %v1727, %v1719
    %v2032 = vpack.c.b16 %v1728, %v1720
    %v2033 = vpack.c.b16 %v1729, %v1721
    %v2034 = vpack.c.b16 %v1730, %v1722
    %v2035 = vpack.c.b16 %v1739, %v1731
    %v2036 = vpack.c.b16 %v1740, %v1732
    %v2037 = vpack.c.b16 %v1741, %v1733
    %v2038 = vpack.c.b16 %v1742, %v1734
    %v2039 = vpack.c.b16 %v1743, %v1735
    %v2040 = vpack.c.b16 %v1744, %v1736
    %v2041 = vpack.c.b16 %v1745, %v1737
    %v2042 = vpack.c.b16 %v1746, %v1738
    %v2043 = vpack.c.b16 %v1755, %v1747
    %v2044 = vpack.c.b16 %v1756, %v1748
    %v2045 = vpack.c.b16 %v1757, %v1749
    %v2046 = vpack.c.b16 %v1758, %v1750
    %v2047 = vpack.c.b16 %v1759, %v1751
    %v2048 = vpack.c.b16 %v1760, %v1752
    %v2049 = vpack.c.b16 %v1761, %v1753
    %v2050 = vpack.c.b16 %v1762, %v1754
    %v2051 = vpack.c.b16 %v1771, %v1763
    %v2052 = vpack.c.b16 %v1772, %v1764
    %v2053 = vpack.c.b16 %v1773, %v1765
    %v2054 = vpack.c.b16 %v1774, %v1766
    %v2055 = vpack.c.b16 %v1775, %v1767
    %v2056 = vpack.c.b16 %v1776, %v1768
    %v2057 = vpack.c.b16 %v1777, %v1769
    %v2058 = vpack.c.b16 %v1778, %v1770
    %v2059 = vpack.c.b16 %v1787, %v1779
    %v2060 = vpack.c.b16 %v1788, %v1780
    %v2061 = vpack.c.b16 %v1789, %v1781
    %v2062 = vpack.c.b16 %v1790, %v1782
    %v2063 = vpack.c.b16 %v1791, %v1783
    %v2064 = vpack.c.b16 %v1792, %v1784
    %v2065 = vpack.c.b16 %v1793, %v1785
    %v2066 = vpack.c.b16 %v1794, %v1786
    %v2067 = vpack.c.b16 %v1803, %v1795
    %v2068 = vpack.c.b16 %v1804, %v1796
    %v2069 = vpack.c.b16 %v1805, %v1797
    %v2070 = vpack.c.b16 %v1806, %v1798
    %v2071 = vpack.c.b16 %v1807, %v1799
    %v2072 = vpack.c.b16 %v1808, %v1800
    %v2073 = vpack.c.b16 %v1809, %v1801
    %v2074 = vpack.c.b16 %v1810, %v1802
    %v2075 = vpack.c.b16 %v1819, %v1811
    %v2076 = vpack.c.b16 %v1820, %v1812
    %v2077 = vpack.c.b16 %v1821, %v1813
    %v2078 = vpack.c.b16 %v1822, %v1814
    %v2079 = vpack.c.b16 %v1823, %v1815
    %v2080 = vpack.c.b16 %v1824, %v1816
    %v2081 = vpack.c.b16 %v1825, %v1817
    %v2082 = vpack.c.b16 %v1826, %v1818
    %2339 = vmatprep.subr.bf16.mxu0 %v1828
    %2340 = vmatpush1.bf16.msra.mxu0 %v1827
    %2341 = vmatprep.subr.bf16.mxu0 %v1836
    %2342 = vmatpush1.bf16.msra.mxu0 %v1835
    %2343 = vmatprep.subr.bf16.mxu0 %v1844
    %2344 = vmatpush1.bf16.msra.mxu0 %v1843
    %2345 = vmatprep.subr.bf16.mxu0 %v1852
    %2346 = vmatpush1.bf16.msra.mxu0 %v1851
    %2347 = vmatprep.subr.bf16.mxu0 %v1860
    %2348 = vmatpush1.bf16.msra.mxu0 %v1859
    %2349 = vmatprep.subr.bf16.mxu0 %v1868
    %2350 = vmatpush1.bf16.msra.mxu0 %v1867
    %2351 = vmatprep.subr.bf16.mxu0 %v1876
    %2352 = vmatpush1.bf16.msra.mxu0 %v1875
    %2353 = vmatprep.subr.bf16.mxu0 %v1884
    %2354 = vmatpush1.bf16.msra.mxu0 %v1883
    %2355 = vmatprep.subr.bf16.mxu0 %v1892
    %2356 = vmatpush1.bf16.msra.mxu0 %v1891
    %2357 = vmatprep.subr.bf16.mxu0 %v1900
    %2358 = vmatpush1.bf16.msra.mxu0 %v1899
    %2359 = vmatprep.subr.bf16.mxu0 %v1908
    %2360 = vmatpush1.bf16.msra.mxu0 %v1907
    %2361 = vmatprep.subr.bf16.mxu0 %v1916
    %2362 = vmatpush1.bf16.msra.mxu0 %v1915
    %2363 = vmatprep.subr.bf16.mxu0 %v1924
    %2364 = vmatpush1.bf16.msra.mxu0 %v1923
    %2365 = vmatprep.subr.bf16.mxu0 %v1932
    %2366 = vmatpush1.bf16.msra.mxu0 %v1931
    %2367 = vmatprep.subr.bf16.mxu0 %v1940
    %2368 = vmatpush1.bf16.msra.mxu0 %v1939
    %2369 = vmatprep.subr.bf16.mxu0 %v1948
    %2370 = vmatpush1.bf16.msra.mxu0 %v1947
    %2371 = vmatprep.mubr.bf16.mxu0 %v800
    %2372 = vmatmul.mubr.bf16.gmra.mrb[0].mxu0 %v799
    %v2373 = vpop.f32.mrb[0].mxu0
    %v2374 = vadd.f32 0.0, %v2373
    %v2375 = vpop.f32.mrb[0].mxu0
    %v2376 = vadd.f32 0.0, %v2375
    %v2377 = vpop.f32.mrb[0].mxu0
    %v2378 = vpop.f32.mrb[0].mxu0
    %2379 = vdwg.mxu0
    %2380 = vmatprep.subr.bf16.mxu0 %v1956
    %2381 = vmatpush1.bf16.msra.mxu0 %v1955
    %2382 = vmatprep.subr.bf16.mxu0 %v1964
    %2383 = vmatpush1.bf16.msra.mxu0 %v1963
    %2384 = vmatprep.subr.bf16.mxu0 %v1972
    %2385 = vmatpush1.bf16.msra.mxu0 %v1971
    %2386 = vmatprep.subr.bf16.mxu0 %v1980
    %2387 = vmatpush1.bf16.msra.mxu0 %v1979
    %2388 = vmatprep.subr.bf16.mxu0 %v1988
    %2389 = vmatpush1.bf16.msra.mxu0 %v1987
    %2390 = vmatprep.subr.bf16.mxu0 %v1996
    %2391 = vmatpush1.bf16.msra.mxu0 %v1995
    %2392 = vmatprep.subr.bf16.mxu0 %v2004
    %2393 = vmatpush1.bf16.msra.mxu0 %v2003
    %2394 = vmatprep.subr.bf16.mxu0 %v2012
    %2395 = vmatpush1.bf16.msra.mxu0 %v2011
    %2396 = vmatprep.subr.bf16.mxu0 %v2020
    %2397 = vmatpush1.bf16.msra.mxu0 %v2019
    %2398 = vmatprep.subr.bf16.mxu0 %v2028
    %2399 = vmatpush1.bf16.msra.mxu0 %v2027
    %2400 = vmatprep.subr.bf16.mxu0 %v2036
    %2401 = vmatpush1.bf16.msra.mxu0 %v2035
    %2402 = vmatprep.subr.bf16.mxu0 %v2044
    %2403 = vmatpush1.bf16.msra.mxu0 %v2043
    %2404 = vmatprep.subr.bf16.mxu0 %v2052
    %2405 = vmatpush1.bf16.msra.mxu0 %v2051
    %2406 = vmatprep.subr.bf16.mxu0 %v2060
    %2407 = vmatpush1.bf16.msra.mxu0 %v2059
    %2408 = vmatprep.subr.bf16.mxu0 %v2068
    %2409 = vmatpush1.bf16.msra.mxu0 %v2067
    %2410 = vmatprep.subr.bf16.mxu0 %v2076
    %2411 = vmatpush1.bf16.msra.mxu0 %v2075
    %2412 = vmatprep.mubr.bf16.mxu0 %v802
    %2413 = vmatmul.mubr.bf16.gmra.mrb[0].mxu0 %v801
    %v2414 = vpop.f32.mrb[0].mxu0
    %v2415 = vadd.f32 %v2374, %v2414
    %v2416 = vpop.f32.mrb[0].mxu0
    %v2417 = vadd.f32 %v2376, %v2416
    %v2418 = vpop.f32.mrb[0].mxu0
    %v2419 = vpop.f32.mrb[0].mxu0
    %2420 = vdwg.mxu0
    %2421 = vmatprep.subr.bf16.mxu0 %v1830
    %2422 = vmatpush1.bf16.msra.mxu0 %v1829
    %2423 = vmatprep.subr.bf16.mxu0 %v1838
    %2424 = vmatpush1.bf16.msra.mxu0 %v1837
    %2425 = vmatprep.subr.bf16.mxu0 %v1846
    %2426 = vmatpush1.bf16.msra.mxu0 %v1845
    %2427 = vmatprep.subr.bf16.mxu0 %v1854
    %2428 = vmatpush1.bf16.msra.mxu0 %v1853
    %2429 = vmatprep.subr.bf16.mxu0 %v1862
    %2430 = vmatpush1.bf16.msra.mxu0 %v1861
    %2431 = vmatprep.subr.bf16.mxu0 %v1870
    %2432 = vmatpush1.bf16.msra.mxu0 %v1869
    %2433 = vmatprep.subr.bf16.mxu0 %v1878
    %2434 = vmatpush1.bf16.msra.mxu0 %v1877
    %2435 = vmatprep.subr.bf16.mxu0 %v1886
    %2436 = vmatpush1.bf16.msra.mxu0 %v1885
    %2437 = vmatprep.subr.bf16.mxu0 %v1894
    %2438 = vmatpush1.bf16.msra.mxu0 %v1893
    %2439 = vmatprep.subr.bf16.mxu0 %v1902
    %2440 = vmatpush1.bf16.msra.mxu0 %v1901
    %2441 = vmatprep.subr.bf16.mxu0 %v1910
    %2442 = vmatpush1.bf16.msra.mxu0 %v1909
    %2443 = vmatprep.subr.bf16.mxu0 %v1918
    %2444 = vmatpush1.bf16.msra.mxu0 %v1917
    %2445 = vmatprep.subr.bf16.mxu0 %v1926
    %2446 = vmatpush1.bf16.msra.mxu0 %v1925
    %2447 = vmatprep.subr.bf16.mxu0 %v1934
    %2448 = vmatpush1.bf16.msra.mxu0 %v1933
    %2449 = vmatprep.subr.bf16.mxu0 %v1942
    %2450 = vmatpush1.bf16.msra.mxu0 %v1941
    %2451 = vmatprep.subr.bf16.mxu0 %v1950
    %2452 = vmatpush1.bf16.msra.mxu0 %v1949
    %2453 = vmatprep.mubr.bf16.mxu0 %v800
    %2454 = vmatmul.mubr.bf16.gmra.mrb[0].mxu0 %v799
    %v2455 = vpop.f32.mrb[0].mxu0
    %v2456 = vadd.f32 0.0, %v2455
    %v2457 = vpop.f32.mrb[0].mxu0
    %v2458 = vadd.f32 0.0, %v2457
    %v2459 = vpop.f32.mrb[0].mxu0
    %v2460 = vpop.f32.mrb[0].mxu0
    %2461 = vdwg.mxu0
    %2462 = vmatprep.subr.bf16.mxu0 %v1958
    %2463 = vmatpush1.bf16.msra.mxu0 %v1957
    %2464 = vmatprep.subr.bf16.mxu0 %v1966
    %2465 = vmatpush1.bf16.msra.mxu0 %v1965
    %2466 = vmatprep.subr.bf16.mxu0 %v1974
    %2467 = vmatpush1.bf16.msra.mxu0 %v1973
    %2468 = vmatprep.subr.bf16.mxu0 %v1982
    %2469 = vmatpush1.bf16.msra.mxu0 %v1981
    %2470 = vmatprep.subr.bf16.mxu0 %v1990
    %2471 = vmatpush1.bf16.msra.mxu0 %v1989
    %2472 = vmatprep.subr.bf16.mxu0 %v1998
    %2473 = vmatpush1.bf16.msra.mxu0 %v1997
    %2474 = vmatprep.subr.bf16.mxu0 %v2006
    %2475 = vmatpush1.bf16.msra.mxu0 %v2005
    %2476 = vmatprep.subr.bf16.mxu0 %v2014
    %2477 = vmatpush1.bf16.msra.mxu0 %v2013
    %2478 = vmatprep.subr.bf16.mxu0 %v2022
    %2479 = vmatpush1.bf16.msra.mxu0 %v2021
    %2480 = vmatprep.subr.bf16.mxu0 %v2030
    %2481 = vmatpush1.bf16.msra.mxu0 %v2029
    %2482 = vmatprep.subr.bf16.mxu0 %v2038
    %2483 = vmatpush1.bf16.msra.mxu0 %v2037
    %2484 = vmatprep.subr.bf16.mxu0 %v2046
    %2485 = vmatpush1.bf16.msra.mxu0 %v2045
    %2486 = vmatprep.subr.bf16.mxu0 %v2054
    %2487 = vmatpush1.bf16.msra.mxu0 %v2053
    %2488 = vmatprep.subr.bf16.mxu0 %v2062
    %2489 = vmatpush1.bf16.msra.mxu0 %v2061
    %2490 = vmatprep.subr.bf16.mxu0 %v2070
    %2491 = vmatpush1.bf16.msra.mxu0 %v2069
    %2492 = vmatprep.subr.bf16.mxu0 %v2078
    %2493 = vmatpush1.bf16.msra.mxu0 %v2077
    %2494 = vmatprep.mubr.bf16.mxu0 %v802
    %2495 = vmatmul.mubr.bf16.gmra.mrb[0].mxu0 %v801
    %v2496 = vpop.f32.mrb[0].mxu0
    %v2497 = vadd.f32 %v2456, %v2496
    %v2498 = vpop.f32.mrb[0].mxu0
    %v2499 = vadd.f32 %v2458, %v2498
    %v2500 = vpop.f32.mrb[0].mxu0
    %v2501 = vpop.f32.mrb[0].mxu0
    %2502 = vdwg.mxu0
    %2503 = vmatprep.subr.bf16.mxu0 %v1832
    %2504 = vmatpush1.bf16.msra.mxu0 %v1831
    %2505 = vmatprep.subr.bf16.mxu0 %v1840
    %2506 = vmatpush1.bf16.msra.mxu0 %v1839
    %2507 = vmatprep.subr.bf16.mxu0 %v1848
    %2508 = vmatpush1.bf16.msra.mxu0 %v1847
    %2509 = vmatprep.subr.bf16.mxu0 %v1856
    %2510 = vmatpush1.bf16.msra.mxu0 %v1855
    %2511 = vmatprep.subr.bf16.mxu0 %v1864
    %2512 = vmatpush1.bf16.msra.mxu0 %v1863
    %2513 = vmatprep.subr.bf16.mxu0 %v1872
    %2514 = vmatpush1.bf16.msra.mxu0 %v1871
    %2515 = vmatprep.subr.bf16.mxu0 %v1880
    %2516 = vmatpush1.bf16.msra.mxu0 %v1879
    %2517 = vmatprep.subr.bf16.mxu0 %v1888
    %2518 = vmatpush1.bf16.msra.mxu0 %v1887
    %2519 = vmatprep.subr.bf16.mxu0 %v1896
    %2520 = vmatpush1.bf16.msra.mxu0 %v1895
    %2521 = vmatprep.subr.bf16.mxu0 %v1904
    %2522 = vmatpush1.bf16.msra.mxu0 %v1903
    %2523 = vmatprep.subr.bf16.mxu0 %v1912
    %2524 = vmatpush1.bf16.msra.mxu0 %v1911
    %2525 = vmatprep.subr.bf16.mxu0 %v1920
    %2526 = vmatpush1.bf16.msra.mxu0 %v1919
    %2527 = vmatprep.subr.bf16.mxu0 %v1928
    %2528 = vmatpush1.bf16.msra.mxu0 %v1927
    %2529 = vmatprep.subr.bf16.mxu0 %v1936
    %2530 = vmatpush1.bf16.msra.mxu0 %v1935
    %2531 = vmatprep.subr.bf16.mxu0 %v1944
    %2532 = vmatpush1.bf16.msra.mxu0 %v1943
    %2533 = vmatprep.subr.bf16.mxu0 %v1952
    %2534 = vmatpush1.bf16.msra.mxu0 %v1951
    %2535 = vmatprep.mubr.bf16.mxu0 %v800
    %2536 = vmatmul.mubr.bf16.gmra.mrb[0].mxu0 %v799
    %v2537 = vpop.f32.mrb[0].mxu0
    %v2538 = vadd.f32 0.0, %v2537
    %v2539 = vpop.f32.mrb[0].mxu0
    %v2540 = vadd.f32 0.0, %v2539
    %v2541 = vpop.f32.mrb[0].mxu0
    %v2542 = vpop.f32.mrb[0].mxu0
    %2543 = vdwg.mxu0
    %2544 = vmatprep.subr.bf16.mxu0 %v1960
    %2545 = vmatpush1.bf16.msra.mxu0 %v1959
    %2546 = vmatprep.subr.bf16.mxu0 %v1968
    %2547 = vmatpush1.bf16.msra.mxu0 %v1967
    %2548 = vmatprep.subr.bf16.mxu0 %v1976
    %2549 = vmatpush1.bf16.msra.mxu0 %v1975
    %2550 = vmatprep.subr.bf16.mxu0 %v1984
    %2551 = vmatpush1.bf16.msra.mxu0 %v1983
    %2552 = vmatprep.subr.bf16.mxu0 %v1992
    %2553 = vmatpush1.bf16.msra.mxu0 %v1991
    %2554 = vmatprep.subr.bf16.mxu0 %v2000
    %2555 = vmatpush1.bf16.msra.mxu0 %v1999
    %2556 = vmatprep.subr.bf16.mxu0 %v2008
    %2557 = vmatpush1.bf16.msra.mxu0 %v2007
    %2558 = vmatprep.subr.bf16.mxu0 %v2016
    %2559 = vmatpush1.bf16.msra.mxu0 %v2015
    %2560 = vmatprep.subr.bf16.mxu0 %v2024
    %2561 = vmatpush1.bf16.msra.mxu0 %v2023
    %2562 = vmatprep.subr.bf16.mxu0 %v2032
    %2563 = vmatpush1.bf16.msra.mxu0 %v2031
    %2564 = vmatprep.subr.bf16.mxu0 %v2040
    %2565 = vmatpush1.bf16.msra.mxu0 %v2039
    %2566 = vmatprep.subr.bf16.mxu0 %v2048
    %2567 = vmatpush1.bf16.msra.mxu0 %v2047
    %2568 = vmatprep.subr.bf16.mxu0 %v2056
    %2569 = vmatpush1.bf16.msra.mxu0 %v2055
    %2570 = vmatprep.subr.bf16.mxu0 %v2064
    %2571 = vmatpush1.bf16.msra.mxu0 %v2063
    %2572 = vmatprep.subr.bf16.mxu0 %v2072
    %2573 = vmatpush1.bf16.msra.mxu0 %v2071
    %2574 = vmatprep.subr.bf16.mxu0 %v2080
    %2575 = vmatpush1.bf16.msra.mxu0 %v2079
    %2576 = vmatprep.mubr.bf16.mxu0 %v802
    %2577 = vmatmul.mubr.bf16.gmra.mrb[0].mxu0 %v801
    %v2578 = vpop.f32.mrb[0].mxu0
    %v2579 = vadd.f32 %v2538, %v2578
    %v2580 = vpop.f32.mrb[0].mxu0
    %v2581 = vadd.f32 %v2540, %v2580
    %v2582 = vpop.f32.mrb[0].mxu0
    %v2583 = vpop.f32.mrb[0].mxu0
    %2584 = vdwg.mxu0
    %2585 = vmatprep.subr.bf16.mxu0 %v1834
    %2586 = vmatpush1.bf16.msra.mxu0 %v1833
    %2587 = vmatprep.subr.bf16.mxu0 %v1842
    %2588 = vmatpush1.bf16.msra.mxu0 %v1841
    %2589 = vmatprep.subr.bf16.mxu0 %v1850
    %2590 = vmatpush1.bf16.msra.mxu0 %v1849
    %2591 = vmatprep.subr.bf16.mxu0 %v1858
    %2592 = vmatpush1.bf16.msra.mxu0 %v1857
    %2593 = vmatprep.subr.bf16.mxu0 %v1866
    %2594 = vmatpush1.bf16.msra.mxu0 %v1865
    %2595 = vmatprep.subr.bf16.mxu0 %v1874
    %2596 = vmatpush1.bf16.msra.mxu0 %v1873
    %2597 = vmatprep.subr.bf16.mxu0 %v1882
    %2598 = vmatpush1.bf16.msra.mxu0 %v1881
    %2599 = vmatprep.subr.bf16.mxu0 %v1890
    %2600 = vmatpush1.bf16.msra.mxu0 %v1889
    %2601 = vmatprep.subr.bf16.mxu0 %v1898
    %2602 = vmatpush1.bf16.msra.mxu0 %v1897
    %2603 = vmatprep.subr.bf16.mxu0 %v1906
    %2604 = vmatpush1.bf16.msra.mxu0 %v1905
    %2605 = vmatprep.subr.bf16.mxu0 %v1914
    %2606 = vmatpush1.bf16.msra.mxu0 %v1913
    %2607 = vmatprep.subr.bf16.mxu0 %v1922
    %2608 = vmatpush1.bf16.msra.mxu0 %v1921
    %2609 = vmatprep.subr.bf16.mxu0 %v1930
    %2610 = vmatpush1.bf16.msra.mxu0 %v1929
    %2611 = vmatprep.subr.bf16.mxu0 %v1938
    %2612 = vmatpush1.bf16.msra.mxu0 %v1937
    %2613 = vmatprep.subr.bf16.mxu0 %v1946
    %2614 = vmatpush1.bf16.msra.mxu0 %v1945
    %2615 = vmatprep.subr.bf16.mxu0 %v1954
    %2616 = vmatpush1.bf16.msra.mxu0 %v1953
    %2617 = vmatprep.mubr.bf16.mxu0 %v800
    %2618 = vmatmul.mubr.bf16.gmra.mrb[0].mxu0 %v799
    %v2619 = vpop.f32.mrb[0].mxu0
    %v2620 = vadd.f32 0.0, %v2619
    %v2621 = vpop.f32.mrb[0].mxu0
    %v2622 = vadd.f32 0.0, %v2621
    %v2623 = vpop.f32.mrb[0].mxu0
    %v2624 = vpop.f32.mrb[0].mxu0
    %2625 = vdwg.mxu0
    %2626 = vmatprep.subr.bf16.mxu0 %v1962
    %2627 = vmatpush1.bf16.msra.mxu0 %v1961
    %2628 = vmatprep.subr.bf16.mxu0 %v1970
    %2629 = vmatpush1.bf16.msra.mxu0 %v1969
    %2630 = vmatprep.subr.bf16.mxu0 %v1978
    %2631 = vmatpush1.bf16.msra.mxu0 %v1977
    %2632 = vmatprep.subr.bf16.mxu0 %v1986
    %2633 = vmatpush1.bf16.msra.mxu0 %v1985
    %2634 = vmatprep.subr.bf16.mxu0 %v1994
    %2635 = vmatpush1.bf16.msra.mxu0 %v1993
    %2636 = vmatprep.subr.bf16.mxu0 %v2002
    %2637 = vmatpush1.bf16.msra.mxu0 %v2001
    %2638 = vmatprep.subr.bf16.mxu0 %v2010
    %2639 = vmatpush1.bf16.msra.mxu0 %v2009
    %2640 = vmatprep.subr.bf16.mxu0 %v2018
    %2641 = vmatpush1.bf16.msra.mxu0 %v2017
    %2642 = vmatprep.subr.bf16.mxu0 %v2026
    %2643 = vmatpush1.bf16.msra.mxu0 %v2025
    %2644 = vmatprep.subr.bf16.mxu0 %v2034
    %2645 = vmatpush1.bf16.msra.mxu0 %v2033
    %2646 = vmatprep.subr.bf16.mxu0 %v2042
    %2647 = vmatpush1.bf16.msra.mxu0 %v2041
    %2648 = vmatprep.subr.bf16.mxu0 %v2050
    %2649 = vmatpush1.bf16.msra.mxu0 %v2049
    %2650 = vmatprep.subr.bf16.mxu0 %v2058
    %2651 = vmatpush1.bf16.msra.mxu0 %v2057
    %2652 = vmatprep.subr.bf16.mxu0 %v2066
    %2653 = vmatpush1.bf16.msra.mxu0 %v2065
    %2654 = vmatprep.subr.bf16.mxu0 %v2074
    %2655 = vmatpush1.bf16.msra.mxu0 %v2073
    %2656 = vmatprep.subr.bf16.mxu0 %v2082
    %2657 = vmatpush1.bf16.msra.mxu0 %v2081
    %2658 = vmatprep.mubr.bf16.mxu0 %v802
    %2659 = vmatmul.mubr.bf16.gmra.mrb[0].mxu0 %v801
    %v2660 = vpop.f32.mrb[0].mxu0
    %v2661 = vadd.f32 %v2620, %v2660
    %v2662 = vpop.f32.mrb[0].mxu0
    %v2663 = vadd.f32 %v2622, %v2662
    %v2664 = vpop.f32.mrb[0].mxu0
    %v2665 = vpop.f32.mrb[0].mxu0
    %2666 = vdwg.mxu0
    %v2667 = vpack.c.bf16 %v2415, %v2415
    %v2668 = vpack.c.bf16 %v2417, %v2417
    %v2669 = vpack.c.bf16 %v2497, %v2497
    %v2670 = vpack.c.bf16 %v2499, %v2499
    %v2671 = vpack.c.bf16 %v2579, %v2579
    %v2672 = vpack.c.bf16 %v2581, %v2581
    %v2673 = vpack.c.bf16 %v2661, %v2661
    %v2674 = vpack.c.bf16 %v2663, %v2663
    %v2675 = vld [vmem:[%s6] sm:$0xff]
    %v2677 = vcombine.high %v2675, %v2675
    %v2679 = vunpack.c.l.s4 1966171168
    %v2680 = vunpack.c.0.s8 %v2679
    %v2681 = vlaneseq
    %v2682 = vshrl.u32 %v2681, 7
    %v2683 = vsub.s32 %v2680, %v2682
    %v2684 = vrot.slane %v2675, %v2683
    %v2686 = vunpack.c.l.s4 1966171168
    %v2687 = vunpack.c.0.s8 %v2686
    %v2688 = vlaneseq
    %v2689 = vshrl.u32 %v2688, 7
    %v2690 = vsub.s32 %v2687, %v2689
    %v2691 = vrot.slane %v2677, %v2690
    %v2692 = vcombine.high %v2684, %v2684
    %v2693 = vcombine.high %v2691, %v2691
    %v2695 = vunpack.c.l.s4 1966171168
    %v2696 = vunpack.c.0.s8 %v2695
    %v2697 = vlaneseq
    %v2698 = vshrl.u32 %v2697, 7
    %v2699 = vsub.s32 %v2696, %v2698
    %v2700 = vrot.slane %v2684, %v2699
    %v2702 = vunpack.c.l.s4 1966171168
    %v2703 = vunpack.c.0.s8 %v2702
    %v2704 = vlaneseq
    %v2705 = vshrl.u32 %v2704, 7
    %v2706 = vsub.s32 %v2703, %v2705
    %v2707 = vrot.slane %v2691, %v2706
    %v2709 = vunpack.c.l.s4 1966171168
    %v2710 = vunpack.c.0.s8 %v2709
    %v2711 = vlaneseq
    %v2712 = vshrl.u32 %v2711, 7
    %v2713 = vsub.s32 %v2710, %v2712
    %v2714 = vrot.slane %v2692, %v2713
    %v2716 = vunpack.c.l.s4 1966171168
    %v2717 = vunpack.c.0.s8 %v2716
    %v2718 = vlaneseq
    %v2719 = vshrl.u32 %v2718, 7
    %v2720 = vsub.s32 %v2717, %v2719
    %v2721 = vrot.slane %v2693, %v2720
    %v2722 = vcombine.high %v2700, %v2700
    %v2723 = vcombine.high %v2707, %v2707
    %v2724 = vcombine.high %v2714, %v2714
    %v2725 = vcombine.high %v2721, %v2721
    %v2727 = vpack.i.b16 %v2700, %v2700
    %v2729 = vlaneseq
    %v2730 = vshrl.u32 %v2729, 7
    %v2731 = vsub.s32 0, %v2730
    %v2732 = vrot.slane %v2727, %v2731
    %v2734 = vpack.i.b16 %v2714, %v2714
    %v2736 = vlaneseq
    %v2737 = vshrl.u32 %v2736, 7
    %v2738 = vsub.s32 0, %v2737
    %v2739 = vrot.slane %v2734, %v2738
    %v2741 = vpack.i.b16 %v2722, %v2722
    %v2743 = vlaneseq
    %v2744 = vshrl.u32 %v2743, 7
    %v2745 = vsub.s32 0, %v2744
    %v2746 = vrot.slane %v2741, %v2745
    %v2748 = vpack.i.b16 %v2724, %v2724
    %v2750 = vlaneseq
    %v2751 = vshrl.u32 %v2750, 7
    %v2752 = vsub.s32 0, %v2751
    %v2753 = vrot.slane %v2748, %v2752
    %v2755 = vpack.i.b16 %v2707, %v2707
    %v2757 = vlaneseq
    %v2758 = vshrl.u32 %v2757, 7
    %v2759 = vsub.s32 0, %v2758
    %v2760 = vrot.slane %v2755, %v2759
    %v2762 = vpack.i.b16 %v2721, %v2721
    %v2764 = vlaneseq
    %v2765 = vshrl.u32 %v2764, 7
    %v2766 = vsub.s32 0, %v2765
    %v2767 = vrot.slane %v2762, %v2766
    %v2769 = vpack.i.b16 %v2723, %v2723
    %v2771 = vlaneseq
    %v2772 = vshrl.u32 %v2771, 7
    %v2773 = vsub.s32 0, %v2772
    %v2774 = vrot.slane %v2769, %v2773
    %v2776 = vpack.i.b16 %v2725, %v2725
    %v2778 = vlaneseq
    %v2779 = vshrl.u32 %v2778, 7
    %v2780 = vsub.s32 0, %v2779
    %v2781 = vrot.slane %v2776, %v2780
    %v2782 = vadd.bf16 %v2667, %v2732
    %v2783 = vadd.bf16 %v2668, %v2739
    %v2784 = vadd.bf16 %v2669, %v2746
    %v2785 = vadd.bf16 %v2670, %v2753
    %v2786 = vadd.bf16 %v2671, %v2760
    %v2787 = vadd.bf16 %v2672, %v2767
    %v2788 = vadd.bf16 %v2673, %v2774
    %v2789 = vadd.bf16 %v2674, %v2781
    %v2790 = vmax.bf16 %v2782, 0
    %v2791 = vmax.bf16 %v2783, 0
    %v2792 = vmax.bf16 %v2784, 0
    %v2793 = vmax.bf16 %v2785, 0
    %v2794 = vmax.bf16 %v2786, 0
    %v2795 = vmax.bf16 %v2787, 0
    %v2796 = vmax.bf16 %v2788, 0
    %v2797 = vmax.bf16 %v2789, 0
    %v2798 = vld [vmem:[#allocation7] sm:$0xff]
    %v2799 = vld [vmem:[#allocation7 + $0x8] sm:$0xff]
    %v2800 = vld [vmem:[#allocation7 + $0x10] sm:$0xff]
    %v2801 = vld [vmem:[#allocation7 + $0x18] sm:$0xff]
    %v2802 = vld [vmem:[#allocation7 + $0x20] sm:$0xff]
    %v2803 = vld [vmem:[#allocation7 + $0x28] sm:$0xff]
    %v2804 = vld [vmem:[#allocation7 + $0x30] sm:$0xff]
    %v2805 = vld [vmem:[#allocation7 + $0x38] sm:$0xff]
    %v2806 = vld [vmem:[#allocation7 + $0x40] sm:$0xff]
    %v2807 = vld [vmem:[#allocation7 + $0x48] sm:$0xff]
    %v2808 = vld [vmem:[#allocation7 + $0x50] sm:$0xff]
    %v2809 = vld [vmem:[#allocation7 + $0x58] sm:$0xff]
    %v2810 = vld [vmem:[#allocation7 + $0x60] sm:$0xff]
    %v2811 = vld [vmem:[#allocation7 + $0x68] sm:$0xff]
    %v2812 = vld [vmem:[#allocation7 + $0x70] sm:$0xff]
    %v2813 = vld [vmem:[#allocation7 + $0x78] sm:$0xff]
    %v2814 = vld [vmem:[#allocation7 + $0x80] sm:$0xff]
    %v2815 = vld [vmem:[#allocation7 + $0x88] sm:$0xff]
    %v2816 = vld [vmem:[#allocation7 + $0x90] sm:$0xff]
    %v2817 = vld [vmem:[#allocation7 + $0x98] sm:$0xff]
    %v2818 = vld [vmem:[#allocation7 + $0xa0] sm:$0xff]
    %v2819 = vld [vmem:[#allocation7 + $0xa8] sm:$0xff]
    %v2820 = vld [vmem:[#allocation7 + $0xb0] sm:$0xff]
    %v2821 = vld [vmem:[#allocation7 + $0xb8] sm:$0xff]
    %v2822 = vld [vmem:[#allocation7 + $0xc0] sm:$0xff]
    %v2823 = vld [vmem:[#allocation7 + $0xc8] sm:$0xff]
    %v2824 = vld [vmem:[#allocation7 + $0xd0] sm:$0xff]
    %v2825 = vld [vmem:[#allocation7 + $0xd8] sm:$0xff]
    %v2826 = vld [vmem:[#allocation7 + $0xe0] sm:$0xff]
    %v2827 = vld [vmem:[#allocation7 + $0xe8] sm:$0xff]
    %v2828 = vld [vmem:[#allocation7 + $0xf0] sm:$0xff]
    %v2829 = vld [vmem:[#allocation7 + $0xf8] sm:$0xff]
    %v2830 = vld [vmem:[#allocation7 + $0x100] sm:$0xff]
    %v2831 = vld [vmem:[#allocation7 + $0x108] sm:$0xff]
    %v2832 = vld [vmem:[#allocation7 + $0x110] sm:$0xff]
    %v2833 = vld [vmem:[#allocation7 + $0x118] sm:$0xff]
    %v2834 = vld [vmem:[#allocation7 + $0x120] sm:$0xff]
    %v2835 = vld [vmem:[#allocation7 + $0x128] sm:$0xff]
    %v2836 = vld [vmem:[#allocation7 + $0x130] sm:$0xff]
    %v2837 = vld [vmem:[#allocation7 + $0x138] sm:$0xff]
    %v2838 = vld [vmem:[#allocation7 + $0x140] sm:$0xff]
    %v2839 = vld [vmem:[#allocation7 + $0x148] sm:$0xff]
    %v2840 = vld [vmem:[#allocation7 + $0x150] sm:$0xff]
    %v2841 = vld [vmem:[#allocation7 + $0x158] sm:$0xff]
    %v2842 = vld [vmem:[#allocation7 + $0x160] sm:$0xff]
    %v2843 = vld [vmem:[#allocation7 + $0x168] sm:$0xff]
    %v2844 = vld [vmem:[#allocation7 + $0x170] sm:$0xff]
    %v2845 = vld [vmem:[#allocation7 + $0x178] sm:$0xff]
    %v2846 = vld [vmem:[#allocation7 + $0x180] sm:$0xff]
    %v2847 = vld [vmem:[#allocation7 + $0x188] sm:$0xff]
    %v2848 = vld [vmem:[#allocation7 + $0x190] sm:$0xff]
    %v2849 = vld [vmem:[#allocation7 + $0x198] sm:$0xff]
    %v2850 = vld [vmem:[#allocation7 + $0x1a0] sm:$0xff]
    %v2851 = vld [vmem:[#allocation7 + $0x1a8] sm:$0xff]
    %v2852 = vld [vmem:[#allocation7 + $0x1b0] sm:$0xff]
    %v2853 = vld [vmem:[#allocation7 + $0x1b8] sm:$0xff]
    %v2854 = vld [vmem:[#allocation7 + $0x1c0] sm:$0xff]
    %v2855 = vld [vmem:[#allocation7 + $0x1c8] sm:$0xff]
    %v2856 = vld [vmem:[#allocation7 + $0x1d0] sm:$0xff]
    %v2857 = vld [vmem:[#allocation7 + $0x1d8] sm:$0xff]
    %v2858 = vld [vmem:[#allocation7 + $0x1e0] sm:$0xff]
    %v2859 = vld [vmem:[#allocation7 + $0x1e8] sm:$0xff]
    %v2860 = vld [vmem:[#allocation7 + $0x1f0] sm:$0xff]
    %v2861 = vld [vmem:[#allocation7 + $0x1f8] sm:$0xff]
    %v2862 = vld [vmem:[#allocation7 + $0x200] sm:$0xff]
    %v2863 = vld [vmem:[#allocation7 + $0x208] sm:$0xff]
    %v2864 = vld [vmem:[#allocation7 + $0x210] sm:$0xff]
    %v2865 = vld [vmem:[#allocation7 + $0x218] sm:$0xff]
    %v2866 = vld [vmem:[#allocation7 + $0x220] sm:$0xff]
    %v2867 = vld [vmem:[#allocation7 + $0x228] sm:$0xff]
    %v2868 = vld [vmem:[#allocation7 + $0x230] sm:$0xff]
    %v2869 = vld [vmem:[#allocation7 + $0x238] sm:$0xff]
    %v2870 = vld [vmem:[#allocation7 + $0x240] sm:$0xff]
    %v2871 = vld [vmem:[#allocation7 + $0x248] sm:$0xff]
    %v2872 = vld [vmem:[#allocation7 + $0x250] sm:$0xff]
    %v2873 = vld [vmem:[#allocation7 + $0x258] sm:$0xff]
    %v2874 = vld [vmem:[#allocation7 + $0x260] sm:$0xff]
    %v2875 = vld [vmem:[#allocation7 + $0x268] sm:$0xff]
    %v2876 = vld [vmem:[#allocation7 + $0x270] sm:$0xff]
    %v2877 = vld [vmem:[#allocation7 + $0x278] sm:$0xff]
    %v2878 = vld [vmem:[#allocation7 + $0x280] sm:$0xff]
    %v2879 = vld [vmem:[#allocation7 + $0x288] sm:$0xff]
    %v2880 = vld [vmem:[#allocation7 + $0x290] sm:$0xff]
    %v2881 = vld [vmem:[#allocation7 + $0x298] sm:$0xff]
    %v2882 = vld [vmem:[#allocation7 + $0x2a0] sm:$0xff]
    %v2883 = vld [vmem:[#allocation7 + $0x2a8] sm:$0xff]
    %v2884 = vld [vmem:[#allocation7 + $0x2b0] sm:$0xff]
    %v2885 = vld [vmem:[#allocation7 + $0x2b8] sm:$0xff]
    %v2886 = vld [vmem:[#allocation7 + $0x2c0] sm:$0xff]
    %v2887 = vld [vmem:[#allocation7 + $0x2c8] sm:$0xff]
    %v2888 = vld [vmem:[#allocation7 + $0x2d0] sm:$0xff]
    %v2889 = vld [vmem:[#allocation7 + $0x2d8] sm:$0xff]
    %v2890 = vld [vmem:[#allocation7 + $0x2e0] sm:$0xff]
    %v2891 = vld [vmem:[#allocation7 + $0x2e8] sm:$0xff]
    %v2892 = vld [vmem:[#allocation7 + $0x2f0] sm:$0xff]
    %v2893 = vld [vmem:[#allocation7 + $0x2f8] sm:$0xff]
    %v2894 = vld [vmem:[#allocation7 + $0x300] sm:$0xff]
    %v2895 = vld [vmem:[#allocation7 + $0x308] sm:$0xff]
    %v2896 = vld [vmem:[#allocation7 + $0x310] sm:$0xff]
    %v2897 = vld [vmem:[#allocation7 + $0x318] sm:$0xff]
    %v2898 = vld [vmem:[#allocation7 + $0x320] sm:$0xff]
    %v2899 = vld [vmem:[#allocation7 + $0x328] sm:$0xff]
    %v2900 = vld [vmem:[#allocation7 + $0x330] sm:$0xff]
    %v2901 = vld [vmem:[#allocation7 + $0x338] sm:$0xff]
    %v2902 = vld [vmem:[#allocation7 + $0x340] sm:$0xff]
    %v2903 = vld [vmem:[#allocation7 + $0x348] sm:$0xff]
    %v2904 = vld [vmem:[#allocation7 + $0x350] sm:$0xff]
    %v2905 = vld [vmem:[#allocation7 + $0x358] sm:$0xff]
    %v2906 = vld [vmem:[#allocation7 + $0x360] sm:$0xff]
    %v2907 = vld [vmem:[#allocation7 + $0x368] sm:$0xff]
    %v2908 = vld [vmem:[#allocation7 + $0x370] sm:$0xff]
    %v2909 = vld [vmem:[#allocation7 + $0x378] sm:$0xff]
    %v2910 = vld [vmem:[#allocation7 + $0x380] sm:$0xff]
    %v2911 = vld [vmem:[#allocation7 + $0x388] sm:$0xff]
    %v2912 = vld [vmem:[#allocation7 + $0x390] sm:$0xff]
    %v2913 = vld [vmem:[#allocation7 + $0x398] sm:$0xff]
    %v2914 = vld [vmem:[#allocation7 + $0x3a0] sm:$0xff]
    %v2915 = vld [vmem:[#allocation7 + $0x3a8] sm:$0xff]
    %v2916 = vld [vmem:[#allocation7 + $0x3b0] sm:$0xff]
    %v2917 = vld [vmem:[#allocation7 + $0x3b8] sm:$0xff]
    %v2918 = vld [vmem:[#allocation7 + $0x3c0] sm:$0xff]
    %v2919 = vld [vmem:[#allocation7 + $0x3c8] sm:$0xff]
    %v2920 = vld [vmem:[#allocation7 + $0x3d0] sm:$0xff]
    %v2921 = vld [vmem:[#allocation7 + $0x3d8] sm:$0xff]
    %v2922 = vld [vmem:[#allocation7 + $0x3e0] sm:$0xff]
    %v2923 = vld [vmem:[#allocation7 + $0x3e8] sm:$0xff]
    %v2924 = vld [vmem:[#allocation7 + $0x3f0] sm:$0xff]
    %v2925 = vld [vmem:[#allocation7 + $0x3f8] sm:$0xff]
    %v2926 = vld [vmem:[#allocation7 + $0x400] sm:$0xff]
    %v2927 = vld [vmem:[#allocation7 + $0x408] sm:$0xff]
    %v2928 = vld [vmem:[#allocation7 + $0x410] sm:$0xff]
    %v2929 = vld [vmem:[#allocation7 + $0x418] sm:$0xff]
    %v2930 = vld [vmem:[#allocation7 + $0x420] sm:$0xff]
    %v2931 = vld [vmem:[#allocation7 + $0x428] sm:$0xff]
    %v2932 = vld [vmem:[#allocation7 + $0x430] sm:$0xff]
    %v2933 = vld [vmem:[#allocation7 + $0x438] sm:$0xff]
    %v2934 = vld [vmem:[#allocation7 + $0x440] sm:$0xff]
    %v2935 = vld [vmem:[#allocation7 + $0x448] sm:$0xff]
    %v2936 = vld [vmem:[#allocation7 + $0x450] sm:$0xff]
    %v2937 = vld [vmem:[#allocation7 + $0x458] sm:$0xff]
    %v2938 = vld [vmem:[#allocation7 + $0x460] sm:$0xff]
    %v2939 = vld [vmem:[#allocation7 + $0x468] sm:$0xff]
    %v2940 = vld [vmem:[#allocation7 + $0x470] sm:$0xff]
    %v2941 = vld [vmem:[#allocation7 + $0x478] sm:$0xff]
    %v2942 = vld [vmem:[#allocation7 + $0x480] sm:$0xff]
    %v2943 = vld [vmem:[#allocation7 + $0x488] sm:$0xff]
    %v2944 = vld [vmem:[#allocation7 + $0x490] sm:$0xff]
    %v2945 = vld [vmem:[#allocation7 + $0x498] sm:$0xff]
    %v2946 = vld [vmem:[#allocation7 + $0x4a0] sm:$0xff]
    %v2947 = vld [vmem:[#allocation7 + $0x4a8] sm:$0xff]
    %v2948 = vld [vmem:[#allocation7 + $0x4b0] sm:$0xff]
    %v2949 = vld [vmem:[#allocation7 + $0x4b8] sm:$0xff]
    %v2950 = vld [vmem:[#allocation7 + $0x4c0] sm:$0xff]
    %v2951 = vld [vmem:[#allocation7 + $0x4c8] sm:$0xff]
    %v2952 = vld [vmem:[#allocation7 + $0x4d0] sm:$0xff]
    %v2953 = vld [vmem:[#allocation7 + $0x4d8] sm:$0xff]
    %v2954 = vld [vmem:[#allocation7 + $0x4e0] sm:$0xff]
    %v2955 = vld [vmem:[#allocation7 + $0x4e8] sm:$0xff]
    %v2956 = vld [vmem:[#allocation7 + $0x4f0] sm:$0xff]
    %v2957 = vld [vmem:[#allocation7 + $0x4f8] sm:$0xff]
    %v2958 = vld [vmem:[#allocation7 + $0x500] sm:$0xff]
    %v2959 = vld [vmem:[#allocation7 + $0x508] sm:$0xff]
    %v2960 = vld [vmem:[#allocation7 + $0x510] sm:$0xff]
    %v2961 = vld [vmem:[#allocation7 + $0x518] sm:$0xff]
    %v2962 = vld [vmem:[#allocation7 + $0x520] sm:$0xff]
    %v2963 = vld [vmem:[#allocation7 + $0x528] sm:$0xff]
    %v2964 = vld [vmem:[#allocation7 + $0x530] sm:$0xff]
    %v2965 = vld [vmem:[#allocation7 + $0x538] sm:$0xff]
    %v2966 = vld [vmem:[#allocation7 + $0x540] sm:$0xff]
    %v2967 = vld [vmem:[#allocation7 + $0x548] sm:$0xff]
    %v2968 = vld [vmem:[#allocation7 + $0x550] sm:$0xff]
    %v2969 = vld [vmem:[#allocation7 + $0x558] sm:$0xff]
    %v2970 = vld [vmem:[#allocation7 + $0x560] sm:$0xff]
    %v2971 = vld [vmem:[#allocation7 + $0x568] sm:$0xff]
    %v2972 = vld [vmem:[#allocation7 + $0x570] sm:$0xff]
    %v2973 = vld [vmem:[#allocation7 + $0x578] sm:$0xff]
    %v2974 = vld [vmem:[#allocation7 + $0x580] sm:$0xff]
    %v2975 = vld [vmem:[#allocation7 + $0x588] sm:$0xff]
    %v2976 = vld [vmem:[#allocation7 + $0x590] sm:$0xff]
    %v2977 = vld [vmem:[#allocation7 + $0x598] sm:$0xff]
    %v2978 = vld [vmem:[#allocation7 + $0x5a0] sm:$0xff]
    %v2979 = vld [vmem:[#allocation7 + $0x5a8] sm:$0xff]
    %v2980 = vld [vmem:[#allocation7 + $0x5b0] sm:$0xff]
    %v2981 = vld [vmem:[#allocation7 + $0x5b8] sm:$0xff]
    %v2982 = vld [vmem:[#allocation7 + $0x5c0] sm:$0xff]
    %v2983 = vld [vmem:[#allocation7 + $0x5c8] sm:$0xff]
    %v2984 = vld [vmem:[#allocation7 + $0x5d0] sm:$0xff]
    %v2985 = vld [vmem:[#allocation7 + $0x5d8] sm:$0xff]
    %v2986 = vld [vmem:[#allocation7 + $0x5e0] sm:$0xff]
    %v2987 = vld [vmem:[#allocation7 + $0x5e8] sm:$0xff]
    %v2988 = vld [vmem:[#allocation7 + $0x5f0] sm:$0xff]
    %v2989 = vld [vmem:[#allocation7 + $0x5f8] sm:$0xff]
    %v2990 = vld [vmem:[#allocation7 + $0x600] sm:$0xff]
    %v2991 = vld [vmem:[#allocation7 + $0x608] sm:$0xff]
    %v2992 = vld [vmem:[#allocation7 + $0x610] sm:$0xff]
    %v2993 = vld [vmem:[#allocation7 + $0x618] sm:$0xff]
    %v2994 = vld [vmem:[#allocation7 + $0x620] sm:$0xff]
    %v2995 = vld [vmem:[#allocation7 + $0x628] sm:$0xff]
    %v2996 = vld [vmem:[#allocation7 + $0x630] sm:$0xff]
    %v2997 = vld [vmem:[#allocation7 + $0x638] sm:$0xff]
    %v2998 = vld [vmem:[#allocation7 + $0x640] sm:$0xff]
    %v2999 = vld [vmem:[#allocation7 + $0x648] sm:$0xff]
    %v3000 = vld [vmem:[#allocation7 + $0x650] sm:$0xff]
    %v3001 = vld [vmem:[#allocation7 + $0x658] sm:$0xff]
    %v3002 = vld [vmem:[#allocation7 + $0x660] sm:$0xff]
    %v3003 = vld [vmem:[#allocation7 + $0x668] sm:$0xff]
    %v3004 = vld [vmem:[#allocation7 + $0x670] sm:$0xff]
    %v3005 = vld [vmem:[#allocation7 + $0x678] sm:$0xff]
    %v3006 = vld [vmem:[#allocation7 + $0x680] sm:$0xff]
    %v3007 = vld [vmem:[#allocation7 + $0x688] sm:$0xff]
    %v3008 = vld [vmem:[#allocation7 + $0x690] sm:$0xff]
    %v3009 = vld [vmem:[#allocation7 + $0x698] sm:$0xff]
    %v3010 = vld [vmem:[#allocation7 + $0x6a0] sm:$0xff]
    %v3011 = vld [vmem:[#allocation7 + $0x6a8] sm:$0xff]
    %v3012 = vld [vmem:[#allocation7 + $0x6b0] sm:$0xff]
    %v3013 = vld [vmem:[#allocation7 + $0x6b8] sm:$0xff]
    %v3014 = vld [vmem:[#allocation7 + $0x6c0] sm:$0xff]
    %v3015 = vld [vmem:[#allocation7 + $0x6c8] sm:$0xff]
    %v3016 = vld [vmem:[#allocation7 + $0x6d0] sm:$0xff]
    %v3017 = vld [vmem:[#allocation7 + $0x6d8] sm:$0xff]
    %v3018 = vld [vmem:[#allocation7 + $0x6e0] sm:$0xff]
    %v3019 = vld [vmem:[#allocation7 + $0x6e8] sm:$0xff]
    %v3020 = vld [vmem:[#allocation7 + $0x6f0] sm:$0xff]
    %v3021 = vld [vmem:[#allocation7 + $0x6f8] sm:$0xff]
    %v3022 = vld [vmem:[#allocation7 + $0x700] sm:$0xff]
    %v3023 = vld [vmem:[#allocation7 + $0x708] sm:$0xff]
    %v3024 = vld [vmem:[#allocation7 + $0x710] sm:$0xff]
    %v3025 = vld [vmem:[#allocation7 + $0x718] sm:$0xff]
    %v3026 = vld [vmem:[#allocation7 + $0x720] sm:$0xff]
    %v3027 = vld [vmem:[#allocation7 + $0x728] sm:$0xff]
    %v3028 = vld [vmem:[#allocation7 + $0x730] sm:$0xff]
    %v3029 = vld [vmem:[#allocation7 + $0x738] sm:$0xff]
    %v3030 = vld [vmem:[#allocation7 + $0x740] sm:$0xff]
    %v3031 = vld [vmem:[#allocation7 + $0x748] sm:$0xff]
    %v3032 = vld [vmem:[#allocation7 + $0x750] sm:$0xff]
    %v3033 = vld [vmem:[#allocation7 + $0x758] sm:$0xff]
    %v3034 = vld [vmem:[#allocation7 + $0x760] sm:$0xff]
    %v3035 = vld [vmem:[#allocation7 + $0x768] sm:$0xff]
    %v3036 = vld [vmem:[#allocation7 + $0x770] sm:$0xff]
    %v3037 = vld [vmem:[#allocation7 + $0x778] sm:$0xff]
    %v3038 = vld [vmem:[#allocation7 + $0x780] sm:$0xff]
    %v3039 = vld [vmem:[#allocation7 + $0x788] sm:$0xff]
    %v3040 = vld [vmem:[#allocation7 + $0x790] sm:$0xff]
    %v3041 = vld [vmem:[#allocation7 + $0x798] sm:$0xff]
    %v3042 = vld [vmem:[#allocation7 + $0x7a0] sm:$0xff]
    %v3043 = vld [vmem:[#allocation7 + $0x7a8] sm:$0xff]
    %v3044 = vld [vmem:[#allocation7 + $0x7b0] sm:$0xff]
    %v3045 = vld [vmem:[#allocation7 + $0x7b8] sm:$0xff]
    %v3046 = vld [vmem:[#allocation7 + $0x7c0] sm:$0xff]
    %v3047 = vld [vmem:[#allocation7 + $0x7c8] sm:$0xff]
    %v3048 = vld [vmem:[#allocation7 + $0x7d0] sm:$0xff]
    %v3049 = vld [vmem:[#allocation7 + $0x7d8] sm:$0xff]
    %v3050 = vld [vmem:[#allocation7 + $0x7e0] sm:$0xff]
    %v3051 = vld [vmem:[#allocation7 + $0x7e8] sm:$0xff]
    %v3052 = vld [vmem:[#allocation7 + $0x7f0] sm:$0xff]
    %v3053 = vld [vmem:[#allocation7 + $0x7f8] sm:$0xff]
    %v3054 = vld [vmem:[%s8] sm:$0xf]
    %v3056 = vlaneseq
    %v3057 = vshrl.u32 %v3056, 7
    %v3058 = vsub.s32 0, %v3057
    %v3059 = vrot.slane %v3054, %v3058
    %v3060 = vlaneseq
    %v3061 = vshrl.u32 %v3060, 7
    %v3062 = vsub.s32 1, %v3061
    %v3063 = vrot.slane %v3054, %v3062
    %v3064 = vlaneseq
    %v3065 = vshrl.u32 %v3064, 7
    %v3066 = vsub.s32 2, %v3065
    %v3067 = vrot.slane %v3054, %v3066
    %v3068 = vlaneseq
    %v3069 = vshrl.u32 %v3068, 7
    %v3070 = vsub.s32 3, %v3069
    %v3071 = vrot.slane %v3054, %v3070
    %v3332 = vunpack.c.l.b16 %v2798
    %v3333 = vunpack.c.h.b16 %v2798
    %v3334 = vunpack.c.l.b16 %v2799
    %v3335 = vunpack.c.h.b16 %v2799
    %v3336 = vunpack.c.l.b16 %v2800
    %v3337 = vunpack.c.h.b16 %v2800
    %v3338 = vunpack.c.l.b16 %v2801
    %v3339 = vunpack.c.h.b16 %v2801
    %v3340 = vunpack.c.l.b16 %v2802
    %v3341 = vunpack.c.h.b16 %v2802
    %v3342 = vunpack.c.l.b16 %v2803
    %v3343 = vunpack.c.h.b16 %v2803
    %v3344 = vunpack.c.l.b16 %v2804
    %v3345 = vunpack.c.h.b16 %v2804
    %v3346 = vunpack.c.l.b16 %v2805
    %v3347 = vunpack.c.h.b16 %v2805
    %v3348 = vunpack.c.l.b16 %v2806
    %v3349 = vunpack.c.h.b16 %v2806
    %v3350 = vunpack.c.l.b16 %v2807
    %v3351 = vunpack.c.h.b16 %v2807
    %v3352 = vunpack.c.l.b16 %v2808
    %v3353 = vunpack.c.h.b16 %v2808
    %v3354 = vunpack.c.l.b16 %v2809
    %v3355 = vunpack.c.h.b16 %v2809
    %v3356 = vunpack.c.l.b16 %v2810
    %v3357 = vunpack.c.h.b16 %v2810
    %v3358 = vunpack.c.l.b16 %v2811
    %v3359 = vunpack.c.h.b16 %v2811
    %v3360 = vunpack.c.l.b16 %v2812
    %v3361 = vunpack.c.h.b16 %v2812
    %v3362 = vunpack.c.l.b16 %v2813
    %v3363 = vunpack.c.h.b16 %v2813
    %v3364 = vunpack.c.l.b16 %v2814
    %v3365 = vunpack.c.h.b16 %v2814
    %v3366 = vunpack.c.l.b16 %v2815
    %v3367 = vunpack.c.h.b16 %v2815
    %v3368 = vunpack.c.l.b16 %v2816
    %v3369 = vunpack.c.h.b16 %v2816
    %v3370 = vunpack.c.l.b16 %v2817
    %v3371 = vunpack.c.h.b16 %v2817
    %v3372 = vunpack.c.l.b16 %v2818
    %v3373 = vunpack.c.h.b16 %v2818
    %v3374 = vunpack.c.l.b16 %v2819
    %v3375 = vunpack.c.h.b16 %v2819
    %v3376 = vunpack.c.l.b16 %v2820
    %v3377 = vunpack.c.h.b16 %v2820
    %v3378 = vunpack.c.l.b16 %v2821
    %v3379 = vunpack.c.h.b16 %v2821
    %v3380 = vunpack.c.l.b16 %v2822
    %v3381 = vunpack.c.h.b16 %v2822
    %v3382 = vunpack.c.l.b16 %v2823
    %v3383 = vunpack.c.h.b16 %v2823
    %v3384 = vunpack.c.l.b16 %v2824
    %v3385 = vunpack.c.h.b16 %v2824
    %v3386 = vunpack.c.l.b16 %v2825
    %v3387 = vunpack.c.h.b16 %v2825
    %v3388 = vunpack.c.l.b16 %v2826
    %v3389 = vunpack.c.h.b16 %v2826
    %v3390 = vunpack.c.l.b16 %v2827
    %v3391 = vunpack.c.h.b16 %v2827
    %v3392 = vunpack.c.l.b16 %v2828
    %v3393 = vunpack.c.h.b16 %v2828
    %v3394 = vunpack.c.l.b16 %v2829
    %v3395 = vunpack.c.h.b16 %v2829
    %v3396 = vunpack.c.l.b16 %v2830
    %v3397 = vunpack.c.h.b16 %v2830
    %v3398 = vunpack.c.l.b16 %v2831
    %v3399 = vunpack.c.h.b16 %v2831
    %v3400 = vunpack.c.l.b16 %v2832
    %v3401 = vunpack.c.h.b16 %v2832
    %v3402 = vunpack.c.l.b16 %v2833
    %v3403 = vunpack.c.h.b16 %v2833
    %v3404 = vunpack.c.l.b16 %v2834
    %v3405 = vunpack.c.h.b16 %v2834
    %v3406 = vunpack.c.l.b16 %v2835
    %v3407 = vunpack.c.h.b16 %v2835
    %v3408 = vunpack.c.l.b16 %v2836
    %v3409 = vunpack.c.h.b16 %v2836
    %v3410 = vunpack.c.l.b16 %v2837
    %v3411 = vunpack.c.h.b16 %v2837
    %v3412 = vunpack.c.l.b16 %v2838
    %v3413 = vunpack.c.h.b16 %v2838
    %v3414 = vunpack.c.l.b16 %v2839
    %v3415 = vunpack.c.h.b16 %v2839
    %v3416 = vunpack.c.l.b16 %v2840
    %v3417 = vunpack.c.h.b16 %v2840
    %v3418 = vunpack.c.l.b16 %v2841
    %v3419 = vunpack.c.h.b16 %v2841
    %v3420 = vunpack.c.l.b16 %v2842
    %v3421 = vunpack.c.h.b16 %v2842
    %v3422 = vunpack.c.l.b16 %v2843
    %v3423 = vunpack.c.h.b16 %v2843
    %v3424 = vunpack.c.l.b16 %v2844
    %v3425 = vunpack.c.h.b16 %v2844
    %v3426 = vunpack.c.l.b16 %v2845
    %v3427 = vunpack.c.h.b16 %v2845
    %v3428 = vunpack.c.l.b16 %v2846
    %v3429 = vunpack.c.h.b16 %v2846
    %v3430 = vunpack.c.l.b16 %v2847
    %v3431 = vunpack.c.h.b16 %v2847
    %v3432 = vunpack.c.l.b16 %v2848
    %v3433 = vunpack.c.h.b16 %v2848
    %v3434 = vunpack.c.l.b16 %v2849
    %v3435 = vunpack.c.h.b16 %v2849
    %v3436 = vunpack.c.l.b16 %v2850
    %v3437 = vunpack.c.h.b16 %v2850
    %v3438 = vunpack.c.l.b16 %v2851
    %v3439 = vunpack.c.h.b16 %v2851
    %v3440 = vunpack.c.l.b16 %v2852
    %v3441 = vunpack.c.h.b16 %v2852
    %v3442 = vunpack.c.l.b16 %v2853
    %v3443 = vunpack.c.h.b16 %v2853
    %v3444 = vunpack.c.l.b16 %v2854
    %v3445 = vunpack.c.h.b16 %v2854
    %v3446 = vunpack.c.l.b16 %v2855
    %v3447 = vunpack.c.h.b16 %v2855
    %v3448 = vunpack.c.l.b16 %v2856
    %v3449 = vunpack.c.h.b16 %v2856
    %v3450 = vunpack.c.l.b16 %v2857
    %v3451 = vunpack.c.h.b16 %v2857
    %v3452 = vunpack.c.l.b16 %v2858
    %v3453 = vunpack.c.h.b16 %v2858
    %v3454 = vunpack.c.l.b16 %v2859
    %v3455 = vunpack.c.h.b16 %v2859
    %v3456 = vunpack.c.l.b16 %v2860
    %v3457 = vunpack.c.h.b16 %v2860
    %v3458 = vunpack.c.l.b16 %v2861
    %v3459 = vunpack.c.h.b16 %v2861
    %v3460 = vunpack.c.l.b16 %v2862
    %v3461 = vunpack.c.h.b16 %v2862
    %v3462 = vunpack.c.l.b16 %v2863
    %v3463 = vunpack.c.h.b16 %v2863
    %v3464 = vunpack.c.l.b16 %v2864
    %v3465 = vunpack.c.h.b16 %v2864
    %v3466 = vunpack.c.l.b16 %v2865
    %v3467 = vunpack.c.h.b16 %v2865
    %v3468 = vunpack.c.l.b16 %v2866
    %v3469 = vunpack.c.h.b16 %v2866
    %v3470 = vunpack.c.l.b16 %v2867
    %v3471 = vunpack.c.h.b16 %v2867
    %v3472 = vunpack.c.l.b16 %v2868
    %v3473 = vunpack.c.h.b16 %v2868
    %v3474 = vunpack.c.l.b16 %v2869
    %v3475 = vunpack.c.h.b16 %v2869
    %v3476 = vunpack.c.l.b16 %v2870
    %v3477 = vunpack.c.h.b16 %v2870
    %v3478 = vunpack.c.l.b16 %v2871
    %v3479 = vunpack.c.h.b16 %v2871
    %v3480 = vunpack.c.l.b16 %v2872
    %v3481 = vunpack.c.h.b16 %v2872
    %v3482 = vunpack.c.l.b16 %v2873
    %v3483 = vunpack.c.h.b16 %v2873
    %v3484 = vunpack.c.l.b16 %v2874
    %v3485 = vunpack.c.h.b16 %v2874
    %v3486 = vunpack.c.l.b16 %v2875
    %v3487 = vunpack.c.h.b16 %v2875
    %v3488 = vunpack.c.l.b16 %v2876
    %v3489 = vunpack.c.h.b16 %v2876
    %v3490 = vunpack.c.l.b16 %v2877
    %v3491 = vunpack.c.h.b16 %v2877
    %v3492 = vunpack.c.l.b16 %v2878
    %v3493 = vunpack.c.h.b16 %v2878
    %v3494 = vunpack.c.l.b16 %v2879
    %v3495 = vunpack.c.h.b16 %v2879
    %v3496 = vunpack.c.l.b16 %v2880
    %v3497 = vunpack.c.h.b16 %v2880
    %v3498 = vunpack.c.l.b16 %v2881
    %v3499 = vunpack.c.h.b16 %v2881
    %v3500 = vunpack.c.l.b16 %v2882
    %v3501 = vunpack.c.h.b16 %v2882
    %v3502 = vunpack.c.l.b16 %v2883
    %v3503 = vunpack.c.h.b16 %v2883
    %v3504 = vunpack.c.l.b16 %v2884
    %v3505 = vunpack.c.h.b16 %v2884
    %v3506 = vunpack.c.l.b16 %v2885
    %v3507 = vunpack.c.h.b16 %v2885
    %v3508 = vunpack.c.l.b16 %v2886
    %v3509 = vunpack.c.h.b16 %v2886
    %v3510 = vunpack.c.l.b16 %v2887
    %v3511 = vunpack.c.h.b16 %v2887
    %v3512 = vunpack.c.l.b16 %v2888
    %v3513 = vunpack.c.h.b16 %v2888
    %v3514 = vunpack.c.l.b16 %v2889
    %v3515 = vunpack.c.h.b16 %v2889
    %v3516 = vunpack.c.l.b16 %v2890
    %v3517 = vunpack.c.h.b16 %v2890
    %v3518 = vunpack.c.l.b16 %v2891
    %v3519 = vunpack.c.h.b16 %v2891
    %v3520 = vunpack.c.l.b16 %v2892
    %v3521 = vunpack.c.h.b16 %v2892
    %v3522 = vunpack.c.l.b16 %v2893
    %v3523 = vunpack.c.h.b16 %v2893
    %v3524 = vunpack.c.l.b16 %v2894
    %v3525 = vunpack.c.h.b16 %v2894
    %v3526 = vunpack.c.l.b16 %v2895
    %v3527 = vunpack.c.h.b16 %v2895
    %v3528 = vunpack.c.l.b16 %v2896
    %v3529 = vunpack.c.h.b16 %v2896
    %v3530 = vunpack.c.l.b16 %v2897
    %v3531 = vunpack.c.h.b16 %v2897
    %v3532 = vunpack.c.l.b16 %v2898
    %v3533 = vunpack.c.h.b16 %v2898
    %v3534 = vunpack.c.l.b16 %v2899
    %v3535 = vunpack.c.h.b16 %v2899
    %v3536 = vunpack.c.l.b16 %v2900
    %v3537 = vunpack.c.h.b16 %v2900
    %v3538 = vunpack.c.l.b16 %v2901
    %v3539 = vunpack.c.h.b16 %v2901
    %v3540 = vunpack.c.l.b16 %v2902
    %v3541 = vunpack.c.h.b16 %v2902
    %v3542 = vunpack.c.l.b16 %v2903
    %v3543 = vunpack.c.h.b16 %v2903
    %v3544 = vunpack.c.l.b16 %v2904
    %v3545 = vunpack.c.h.b16 %v2904
    %v3546 = vunpack.c.l.b16 %v2905
    %v3547 = vunpack.c.h.b16 %v2905
    %v3548 = vunpack.c.l.b16 %v2906
    %v3549 = vunpack.c.h.b16 %v2906
    %v3550 = vunpack.c.l.b16 %v2907
    %v3551 = vunpack.c.h.b16 %v2907
    %v3552 = vunpack.c.l.b16 %v2908
    %v3553 = vunpack.c.h.b16 %v2908
    %v3554 = vunpack.c.l.b16 %v2909
    %v3555 = vunpack.c.h.b16 %v2909
    %v3556 = vunpack.c.l.b16 %v2910
    %v3557 = vunpack.c.h.b16 %v2910
    %v3558 = vunpack.c.l.b16 %v2911
    %v3559 = vunpack.c.h.b16 %v2911
    %v3560 = vunpack.c.l.b16 %v2912
    %v3561 = vunpack.c.h.b16 %v2912
    %v3562 = vunpack.c.l.b16 %v2913
    %v3563 = vunpack.c.h.b16 %v2913
    %v3564 = vunpack.c.l.b16 %v2914
    %v3565 = vunpack.c.h.b16 %v2914
    %v3566 = vunpack.c.l.b16 %v2915
    %v3567 = vunpack.c.h.b16 %v2915
    %v3568 = vunpack.c.l.b16 %v2916
    %v3569 = vunpack.c.h.b16 %v2916
    %v3570 = vunpack.c.l.b16 %v2917
    %v3571 = vunpack.c.h.b16 %v2917
    %v3572 = vunpack.c.l.b16 %v2918
    %v3573 = vunpack.c.h.b16 %v2918
    %v3574 = vunpack.c.l.b16 %v2919
    %v3575 = vunpack.c.h.b16 %v2919
    %v3576 = vunpack.c.l.b16 %v2920
    %v3577 = vunpack.c.h.b16 %v2920
    %v3578 = vunpack.c.l.b16 %v2921
    %v3579 = vunpack.c.h.b16 %v2921
    %v3580 = vunpack.c.l.b16 %v2922
    %v3581 = vunpack.c.h.b16 %v2922
    %v3582 = vunpack.c.l.b16 %v2923
    %v3583 = vunpack.c.h.b16 %v2923
    %v3584 = vunpack.c.l.b16 %v2924
    %v3585 = vunpack.c.h.b16 %v2924
    %v3586 = vunpack.c.l.b16 %v2925
    %v3587 = vunpack.c.h.b16 %v2925
    %v3588 = vunpack.c.l.b16 %v2926
    %v3589 = vunpack.c.h.b16 %v2926
    %v3590 = vunpack.c.l.b16 %v2927
    %v3591 = vunpack.c.h.b16 %v2927
    %v3592 = vunpack.c.l.b16 %v2928
    %v3593 = vunpack.c.h.b16 %v2928
    %v3594 = vunpack.c.l.b16 %v2929
    %v3595 = vunpack.c.h.b16 %v2929
    %v3596 = vunpack.c.l.b16 %v2930
    %v3597 = vunpack.c.h.b16 %v2930
    %v3598 = vunpack.c.l.b16 %v2931
    %v3599 = vunpack.c.h.b16 %v2931
    %v3600 = vunpack.c.l.b16 %v2932
    %v3601 = vunpack.c.h.b16 %v2932
    %v3602 = vunpack.c.l.b16 %v2933
    %v3603 = vunpack.c.h.b16 %v2933
    %v3604 = vunpack.c.l.b16 %v2934
    %v3605 = vunpack.c.h.b16 %v2934
    %v3606 = vunpack.c.l.b16 %v2935
    %v3607 = vunpack.c.h.b16 %v2935
    %v3608 = vunpack.c.l.b16 %v2936
    %v3609 = vunpack.c.h.b16 %v2936
    %v3610 = vunpack.c.l.b16 %v2937
    %v3611 = vunpack.c.h.b16 %v2937
    %v3612 = vunpack.c.l.b16 %v2938
    %v3613 = vunpack.c.h.b16 %v2938
    %v3614 = vunpack.c.l.b16 %v2939
    %v3615 = vunpack.c.h.b16 %v2939
    %v3616 = vunpack.c.l.b16 %v2940
    %v3617 = vunpack.c.h.b16 %v2940
    %v3618 = vunpack.c.l.b16 %v2941
    %v3619 = vunpack.c.h.b16 %v2941
    %v3620 = vunpack.c.l.b16 %v2942
    %v3621 = vunpack.c.h.b16 %v2942
    %v3622 = vunpack.c.l.b16 %v2943
    %v3623 = vunpack.c.h.b16 %v2943
    %v3624 = vunpack.c.l.b16 %v2944
    %v3625 = vunpack.c.h.b16 %v2944
    %v3626 = vunpack.c.l.b16 %v2945
    %v3627 = vunpack.c.h.b16 %v2945
    %v3628 = vunpack.c.l.b16 %v2946
    %v3629 = vunpack.c.h.b16 %v2946
    %v3630 = vunpack.c.l.b16 %v2947
    %v3631 = vunpack.c.h.b16 %v2947
    %v3632 = vunpack.c.l.b16 %v2948
    %v3633 = vunpack.c.h.b16 %v2948
    %v3634 = vunpack.c.l.b16 %v2949
    %v3635 = vunpack.c.h.b16 %v2949
    %v3636 = vunpack.c.l.b16 %v2950
    %v3637 = vunpack.c.h.b16 %v2950
    %v3638 = vunpack.c.l.b16 %v2951
    %v3639 = vunpack.c.h.b16 %v2951
    %v3640 = vunpack.c.l.b16 %v2952
    %v3641 = vunpack.c.h.b16 %v2952
    %v3642 = vunpack.c.l.b16 %v2953
    %v3643 = vunpack.c.h.b16 %v2953
    %v3644 = vunpack.c.l.b16 %v2954
    %v3645 = vunpack.c.h.b16 %v2954
    %v3646 = vunpack.c.l.b16 %v2955
    %v3647 = vunpack.c.h.b16 %v2955
    %v3648 = vunpack.c.l.b16 %v2956
    %v3649 = vunpack.c.h.b16 %v2956
    %v3650 = vunpack.c.l.b16 %v2957
    %v3651 = vunpack.c.h.b16 %v2957
    %v3652 = vunpack.c.l.b16 %v2958
    %v3653 = vunpack.c.h.b16 %v2958
    %v3654 = vunpack.c.l.b16 %v2959
    %v3655 = vunpack.c.h.b16 %v2959
    %v3656 = vunpack.c.l.b16 %v2960
    %v3657 = vunpack.c.h.b16 %v2960
    %v3658 = vunpack.c.l.b16 %v2961
    %v3659 = vunpack.c.h.b16 %v2961
    %v3660 = vunpack.c.l.b16 %v2962
    %v3661 = vunpack.c.h.b16 %v2962
    %v3662 = vunpack.c.l.b16 %v2963
    %v3663 = vunpack.c.h.b16 %v2963
    %v3664 = vunpack.c.l.b16 %v2964
    %v3665 = vunpack.c.h.b16 %v2964
    %v3666 = vunpack.c.l.b16 %v2965
    %v3667 = vunpack.c.h.b16 %v2965
    %v3668 = vunpack.c.l.b16 %v2966
    %v3669 = vunpack.c.h.b16 %v2966
    %v3670 = vunpack.c.l.b16 %v2967
    %v3671 = vunpack.c.h.b16 %v2967
    %v3672 = vunpack.c.l.b16 %v2968
    %v3673 = vunpack.c.h.b16 %v2968
    %v3674 = vunpack.c.l.b16 %v2969
    %v3675 = vunpack.c.h.b16 %v2969
    %v3676 = vunpack.c.l.b16 %v2970
    %v3677 = vunpack.c.h.b16 %v2970
    %v3678 = vunpack.c.l.b16 %v2971
    %v3679 = vunpack.c.h.b16 %v2971
    %v3680 = vunpack.c.l.b16 %v2972
    %v3681 = vunpack.c.h.b16 %v2972
    %v3682 = vunpack.c.l.b16 %v2973
    %v3683 = vunpack.c.h.b16 %v2973
    %v3684 = vunpack.c.l.b16 %v2974
    %v3685 = vunpack.c.h.b16 %v2974
    %v3686 = vunpack.c.l.b16 %v2975
    %v3687 = vunpack.c.h.b16 %v2975
    %v3688 = vunpack.c.l.b16 %v2976
    %v3689 = vunpack.c.h.b16 %v2976
    %v3690 = vunpack.c.l.b16 %v2977
    %v3691 = vunpack.c.h.b16 %v2977
    %v3692 = vunpack.c.l.b16 %v2978
    %v3693 = vunpack.c.h.b16 %v2978
    %v3694 = vunpack.c.l.b16 %v2979
    %v3695 = vunpack.c.h.b16 %v2979
    %v3696 = vunpack.c.l.b16 %v2980
    %v3697 = vunpack.c.h.b16 %v2980
    %v3698 = vunpack.c.l.b16 %v2981
    %v3699 = vunpack.c.h.b16 %v2981
    %v3700 = vunpack.c.l.b16 %v2982
    %v3701 = vunpack.c.h.b16 %v2982
    %v3702 = vunpack.c.l.b16 %v2983
    %v3703 = vunpack.c.h.b16 %v2983
    %v3704 = vunpack.c.l.b16 %v2984
    %v3705 = vunpack.c.h.b16 %v2984
    %v3706 = vunpack.c.l.b16 %v2985
    %v3707 = vunpack.c.h.b16 %v2985
    %v3708 = vunpack.c.l.b16 %v2986
    %v3709 = vunpack.c.h.b16 %v2986
    %v3710 = vunpack.c.l.b16 %v2987
    %v3711 = vunpack.c.h.b16 %v2987
    %v3712 = vunpack.c.l.b16 %v2988
    %v3713 = vunpack.c.h.b16 %v2988
    %v3714 = vunpack.c.l.b16 %v2989
    %v3715 = vunpack.c.h.b16 %v2989
    %v3716 = vunpack.c.l.b16 %v2990
    %v3717 = vunpack.c.h.b16 %v2990
    %v3718 = vunpack.c.l.b16 %v2991
    %v3719 = vunpack.c.h.b16 %v2991
    %v3720 = vunpack.c.l.b16 %v2992
    %v3721 = vunpack.c.h.b16 %v2992
    %v3722 = vunpack.c.l.b16 %v2993
    %v3723 = vunpack.c.h.b16 %v2993
    %v3724 = vunpack.c.l.b16 %v2994
    %v3725 = vunpack.c.h.b16 %v2994
    %v3726 = vunpack.c.l.b16 %v2995
    %v3727 = vunpack.c.h.b16 %v2995
    %v3728 = vunpack.c.l.b16 %v2996
    %v3729 = vunpack.c.h.b16 %v2996
    %v3730 = vunpack.c.l.b16 %v2997
    %v3731 = vunpack.c.h.b16 %v2997
    %v3732 = vunpack.c.l.b16 %v2998
    %v3733 = vunpack.c.h.b16 %v2998
    %v3734 = vunpack.c.l.b16 %v2999
    %v3735 = vunpack.c.h.b16 %v2999
    %v3736 = vunpack.c.l.b16 %v3000
    %v3737 = vunpack.c.h.b16 %v3000
    %v3738 = vunpack.c.l.b16 %v3001
    %v3739 = vunpack.c.h.b16 %v3001
    %v3740 = vunpack.c.l.b16 %v3002
    %v3741 = vunpack.c.h.b16 %v3002
    %v3742 = vunpack.c.l.b16 %v3003
    %v3743 = vunpack.c.h.b16 %v3003
    %v3744 = vunpack.c.l.b16 %v3004
    %v3745 = vunpack.c.h.b16 %v3004
    %v3746 = vunpack.c.l.b16 %v3005
    %v3747 = vunpack.c.h.b16 %v3005
    %v3748 = vunpack.c.l.b16 %v3006
    %v3749 = vunpack.c.h.b16 %v3006
    %v3750 = vunpack.c.l.b16 %v3007
    %v3751 = vunpack.c.h.b16 %v3007
    %v3752 = vunpack.c.l.b16 %v3008
    %v3753 = vunpack.c.h.b16 %v3008
    %v3754 = vunpack.c.l.b16 %v3009
    %v3755 = vunpack.c.h.b16 %v3009
    %v3756 = vunpack.c.l.b16 %v3010
    %v3757 = vunpack.c.h.b16 %v3010
    %v3758 = vunpack.c.l.b16 %v3011
    %v3759 = vunpack.c.h.b16 %v3011
    %v3760 = vunpack.c.l.b16 %v3012
    %v3761 = vunpack.c.h.b16 %v3012
    %v3762 = vunpack.c.l.b16 %v3013
    %v3763 = vunpack.c.h.b16 %v3013
    %v3764 = vunpack.c.l.b16 %v3014
    %v3765 = vunpack.c.h.b16 %v3014
    %v3766 = vunpack.c.l.b16 %v3015
    %v3767 = vunpack.c.h.b16 %v3015
    %v3768 = vunpack.c.l.b16 %v3016
    %v3769 = vunpack.c.h.b16 %v3016
    %v3770 = vunpack.c.l.b16 %v3017
    %v3771 = vunpack.c.h.b16 %v3017
    %v3772 = vunpack.c.l.b16 %v3018
    %v3773 = vunpack.c.h.b16 %v3018
    %v3774 = vunpack.c.l.b16 %v3019
    %v3775 = vunpack.c.h.b16 %v3019
    %v3776 = vunpack.c.l.b16 %v3020
    %v3777 = vunpack.c.h.b16 %v3020
    %v3778 = vunpack.c.l.b16 %v3021
    %v3779 = vunpack.c.h.b16 %v3021
    %v3780 = vunpack.c.l.b16 %v3022
    %v3781 = vunpack.c.h.b16 %v3022
    %v3782 = vunpack.c.l.b16 %v3023
    %v3783 = vunpack.c.h.b16 %v3023
    %v3784 = vunpack.c.l.b16 %v3024
    %v3785 = vunpack.c.h.b16 %v3024
    %v3786 = vunpack.c.l.b16 %v3025
    %v3787 = vunpack.c.h.b16 %v3025
    %v3788 = vunpack.c.l.b16 %v3026
    %v3789 = vunpack.c.h.b16 %v3026
    %v3790 = vunpack.c.l.b16 %v3027
    %v3791 = vunpack.c.h.b16 %v3027
    %v3792 = vunpack.c.l.b16 %v3028
    %v3793 = vunpack.c.h.b16 %v3028
    %v3794 = vunpack.c.l.b16 %v3029
    %v3795 = vunpack.c.h.b16 %v3029
    %v3796 = vunpack.c.l.b16 %v3030
    %v3797 = vunpack.c.h.b16 %v3030
    %v3798 = vunpack.c.l.b16 %v3031
    %v3799 = vunpack.c.h.b16 %v3031
    %v3800 = vunpack.c.l.b16 %v3032
    %v3801 = vunpack.c.h.b16 %v3032
    %v3802 = vunpack.c.l.b16 %v3033
    %v3803 = vunpack.c.h.b16 %v3033
    %v3804 = vunpack.c.l.b16 %v3034
    %v3805 = vunpack.c.h.b16 %v3034
    %v3806 = vunpack.c.l.b16 %v3035
    %v3807 = vunpack.c.h.b16 %v3035
    %v3808 = vunpack.c.l.b16 %v3036
    %v3809 = vunpack.c.h.b16 %v3036
    %v3810 = vunpack.c.l.b16 %v3037
    %v3811 = vunpack.c.h.b16 %v3037
    %v3812 = vunpack.c.l.b16 %v3038
    %v3813 = vunpack.c.h.b16 %v3038
    %v3814 = vunpack.c.l.b16 %v3039
    %v3815 = vunpack.c.h.b16 %v3039
    %v3816 = vunpack.c.l.b16 %v3040
    %v3817 = vunpack.c.h.b16 %v3040
    %v3818 = vunpack.c.l.b16 %v3041
    %v3819 = vunpack.c.h.b16 %v3041
    %v3820 = vunpack.c.l.b16 %v3042
    %v3821 = vunpack.c.h.b16 %v3042
    %v3822 = vunpack.c.l.b16 %v3043
    %v3823 = vunpack.c.h.b16 %v3043
    %v3824 = vunpack.c.l.b16 %v3044
    %v3825 = vunpack.c.h.b16 %v3044
    %v3826 = vunpack.c.l.b16 %v3045
    %v3827 = vunpack.c.h.b16 %v3045
    %v3828 = vunpack.c.l.b16 %v3046
    %v3829 = vunpack.c.h.b16 %v3046
    %v3830 = vunpack.c.l.b16 %v3047
    %v3831 = vunpack.c.h.b16 %v3047
    %v3832 = vunpack.c.l.b16 %v3048
    %v3833 = vunpack.c.h.b16 %v3048
    %v3834 = vunpack.c.l.b16 %v3049
    %v3835 = vunpack.c.h.b16 %v3049
    %v3836 = vunpack.c.l.b16 %v3050
    %v3837 = vunpack.c.h.b16 %v3050
    %v3838 = vunpack.c.l.b16 %v3051
    %v3839 = vunpack.c.h.b16 %v3051
    %v3840 = vunpack.c.l.b16 %v3052
    %v3841 = vunpack.c.h.b16 %v3052
    %v3842 = vunpack.c.l.b16 %v3053
    %v3843 = vunpack.c.h.b16 %v3053
    %v3844 = vpack.c.b16 %v3336, %v3332
    %v3845 = vpack.c.b16 %v3337, %v3333
    %v3846 = vpack.c.b16 %v3338, %v3334
    %v3847 = vpack.c.b16 %v3339, %v3335
    %v3848 = vpack.c.b16 %v3344, %v3340
    %v3849 = vpack.c.b16 %v3345, %v3341
    %v3850 = vpack.c.b16 %v3346, %v3342
    %v3851 = vpack.c.b16 %v3347, %v3343
    %v3852 = vpack.c.b16 %v3352, %v3348
    %v3853 = vpack.c.b16 %v3353, %v3349
    %v3854 = vpack.c.b16 %v3354, %v3350
    %v3855 = vpack.c.b16 %v3355, %v3351
    %v3856 = vpack.c.b16 %v3360, %v3356
    %v3857 = vpack.c.b16 %v3361, %v3357
    %v3858 = vpack.c.b16 %v3362, %v3358
    %v3859 = vpack.c.b16 %v3363, %v3359
    %v3860 = vpack.c.b16 %v3368, %v3364
    %v3861 = vpack.c.b16 %v3369, %v3365
    %v3862 = vpack.c.b16 %v3370, %v3366
    %v3863 = vpack.c.b16 %v3371, %v3367
    %v3864 = vpack.c.b16 %v3376, %v3372
    %v3865 = vpack.c.b16 %v3377, %v3373
    %v3866 = vpack.c.b16 %v3378, %v3374
    %v3867 = vpack.c.b16 %v3379, %v3375
    %v3868 = vpack.c.b16 %v3384, %v3380
    %v3869 = vpack.c.b16 %v3385, %v3381
    %v3870 = vpack.c.b16 %v3386, %v3382
    %v3871 = vpack.c.b16 %v3387, %v3383
    %v3872 = vpack.c.b16 %v3392, %v3388
    %v3873 = vpack.c.b16 %v3393, %v3389
    %v3874 = vpack.c.b16 %v3394, %v3390
    %v3875 = vpack.c.b16 %v3395, %v3391
    %v3876 = vpack.c.b16 %v3400, %v3396
    %v3877 = vpack.c.b16 %v3401, %v3397
    %v3878 = vpack.c.b16 %v3402, %v3398
    %v3879 = vpack.c.b16 %v3403, %v3399
    %v3880 = vpack.c.b16 %v3408, %v3404
    %v3881 = vpack.c.b16 %v3409, %v3405
    %v3882 = vpack.c.b16 %v3410, %v3406
    %v3883 = vpack.c.b16 %v3411, %v3407
    %v3884 = vpack.c.b16 %v3416, %v3412
    %v3885 = vpack.c.b16 %v3417, %v3413
    %v3886 = vpack.c.b16 %v3418, %v3414
    %v3887 = vpack.c.b16 %v3419, %v3415
    %v3888 = vpack.c.b16 %v3424, %v3420
    %v3889 = vpack.c.b16 %v3425, %v3421
    %v3890 = vpack.c.b16 %v3426, %v3422
    %v3891 = vpack.c.b16 %v3427, %v3423
    %v3892 = vpack.c.b16 %v3432, %v3428
    %v3893 = vpack.c.b16 %v3433, %v3429
    %v3894 = vpack.c.b16 %v3434, %v3430
    %v3895 = vpack.c.b16 %v3435, %v3431
    %v3896 = vpack.c.b16 %v3440, %v3436
    %v3897 = vpack.c.b16 %v3441, %v3437
    %v3898 = vpack.c.b16 %v3442, %v3438
    %v3899 = vpack.c.b16 %v3443, %v3439
    %v3900 = vpack.c.b16 %v3448, %v3444
    %v3901 = vpack.c.b16 %v3449, %v3445
    %v3902 = vpack.c.b16 %v3450, %v3446
    %v3903 = vpack.c.b16 %v3451, %v3447
    %v3904 = vpack.c.b16 %v3456, %v3452
    %v3905 = vpack.c.b16 %v3457, %v3453
    %v3906 = vpack.c.b16 %v3458, %v3454
    %v3907 = vpack.c.b16 %v3459, %v3455
    %v3908 = vpack.c.b16 %v3464, %v3460
    %v3909 = vpack.c.b16 %v3465, %v3461
    %v3910 = vpack.c.b16 %v3466, %v3462
    %v3911 = vpack.c.b16 %v3467, %v3463
    %v3912 = vpack.c.b16 %v3472, %v3468
    %v3913 = vpack.c.b16 %v3473, %v3469
    %v3914 = vpack.c.b16 %v3474, %v3470
    %v3915 = vpack.c.b16 %v3475, %v3471
    %v3916 = vpack.c.b16 %v3480, %v3476
    %v3917 = vpack.c.b16 %v3481, %v3477
    %v3918 = vpack.c.b16 %v3482, %v3478
    %v3919 = vpack.c.b16 %v3483, %v3479
    %v3920 = vpack.c.b16 %v3488, %v3484
    %v3921 = vpack.c.b16 %v3489, %v3485
    %v3922 = vpack.c.b16 %v3490, %v3486
    %v3923 = vpack.c.b16 %v3491, %v3487
    %v3924 = vpack.c.b16 %v3496, %v3492
    %v3925 = vpack.c.b16 %v3497, %v3493
    %v3926 = vpack.c.b16 %v3498, %v3494
    %v3927 = vpack.c.b16 %v3499, %v3495
    %v3928 = vpack.c.b16 %v3504, %v3500
    %v3929 = vpack.c.b16 %v3505, %v3501
    %v3930 = vpack.c.b16 %v3506, %v3502
    %v3931 = vpack.c.b16 %v3507, %v3503
    %v3932 = vpack.c.b16 %v3512, %v3508
    %v3933 = vpack.c.b16 %v3513, %v3509
    %v3934 = vpack.c.b16 %v3514, %v3510
    %v3935 = vpack.c.b16 %v3515, %v3511
    %v3936 = vpack.c.b16 %v3520, %v3516
    %v3937 = vpack.c.b16 %v3521, %v3517
    %v3938 = vpack.c.b16 %v3522, %v3518
    %v3939 = vpack.c.b16 %v3523, %v3519
    %v3940 = vpack.c.b16 %v3528, %v3524
    %v3941 = vpack.c.b16 %v3529, %v3525
    %v3942 = vpack.c.b16 %v3530, %v3526
    %v3943 = vpack.c.b16 %v3531, %v3527
    %v3944 = vpack.c.b16 %v3536, %v3532
    %v3945 = vpack.c.b16 %v3537, %v3533
    %v3946 = vpack.c.b16 %v3538, %v3534
    %v3947 = vpack.c.b16 %v3539, %v3535
    %v3948 = vpack.c.b16 %v3544, %v3540
    %v3949 = vpack.c.b16 %v3545, %v3541
    %v3950 = vpack.c.b16 %v3546, %v3542
    %v3951 = vpack.c.b16 %v3547, %v3543
    %v3952 = vpack.c.b16 %v3552, %v3548
    %v3953 = vpack.c.b16 %v3553, %v3549
    %v3954 = vpack.c.b16 %v3554, %v3550
    %v3955 = vpack.c.b16 %v3555, %v3551
    %v3956 = vpack.c.b16 %v3560, %v3556
    %v3957 = vpack.c.b16 %v3561, %v3557
    %v3958 = vpack.c.b16 %v3562, %v3558
    %v3959 = vpack.c.b16 %v3563, %v3559
    %v3960 = vpack.c.b16 %v3568, %v3564
    %v3961 = vpack.c.b16 %v3569, %v3565
    %v3962 = vpack.c.b16 %v3570, %v3566
    %v3963 = vpack.c.b16 %v3571, %v3567
    %v3964 = vpack.c.b16 %v3576, %v3572
    %v3965 = vpack.c.b16 %v3577, %v3573
    %v3966 = vpack.c.b16 %v3578, %v3574
    %v3967 = vpack.c.b16 %v3579, %v3575
    %v3968 = vpack.c.b16 %v3584, %v3580
    %v3969 = vpack.c.b16 %v3585, %v3581
    %v3970 = vpack.c.b16 %v3586, %v3582
    %v3971 = vpack.c.b16 %v3587, %v3583
    %v3972 = vpack.c.b16 %v3592, %v3588
    %v3973 = vpack.c.b16 %v3593, %v3589
    %v3974 = vpack.c.b16 %v3594, %v3590
    %v3975 = vpack.c.b16 %v3595, %v3591
    %v3976 = vpack.c.b16 %v3600, %v3596
    %v3977 = vpack.c.b16 %v3601, %v3597
    %v3978 = vpack.c.b16 %v3602, %v3598
    %v3979 = vpack.c.b16 %v3603, %v3599
    %v3980 = vpack.c.b16 %v3608, %v3604
    %v3981 = vpack.c.b16 %v3609, %v3605
    %v3982 = vpack.c.b16 %v3610, %v3606
    %v3983 = vpack.c.b16 %v3611, %v3607
    %v3984 = vpack.c.b16 %v3616, %v3612
    %v3985 = vpack.c.b16 %v3617, %v3613
    %v3986 = vpack.c.b16 %v3618, %v3614
    %v3987 = vpack.c.b16 %v3619, %v3615
    %v3988 = vpack.c.b16 %v3624, %v3620
    %v3989 = vpack.c.b16 %v3625, %v3621
    %v3990 = vpack.c.b16 %v3626, %v3622
    %v3991 = vpack.c.b16 %v3627, %v3623
    %v3992 = vpack.c.b16 %v3632, %v3628
    %v3993 = vpack.c.b16 %v3633, %v3629
    %v3994 = vpack.c.b16 %v3634, %v3630
    %v3995 = vpack.c.b16 %v3635, %v3631
    %v3996 = vpack.c.b16 %v3640, %v3636
    %v3997 = vpack.c.b16 %v3641, %v3637
    %v3998 = vpack.c.b16 %v3642, %v3638
    %v3999 = vpack.c.b16 %v3643, %v3639
    %v4000 = vpack.c.b16 %v3648, %v3644
    %v4001 = vpack.c.b16 %v3649, %v3645
    %v4002 = vpack.c.b16 %v3650, %v3646
    %v4003 = vpack.c.b16 %v3651, %v3647
    %v4004 = vpack.c.b16 %v3656, %v3652
    %v4005 = vpack.c.b16 %v3657, %v3653
    %v4006 = vpack.c.b16 %v3658, %v3654
    %v4007 = vpack.c.b16 %v3659, %v3655
    %v4008 = vpack.c.b16 %v3664, %v3660
    %v4009 = vpack.c.b16 %v3665, %v3661
    %v4010 = vpack.c.b16 %v3666, %v3662
    %v4011 = vpack.c.b16 %v3667, %v3663
    %v4012 = vpack.c.b16 %v3672, %v3668
    %v4013 = vpack.c.b16 %v3673, %v3669
    %v4014 = vpack.c.b16 %v3674, %v3670
    %v4015 = vpack.c.b16 %v3675, %v3671
    %v4016 = vpack.c.b16 %v3680, %v3676
    %v4017 = vpack.c.b16 %v3681, %v3677
    %v4018 = vpack.c.b16 %v3682, %v3678
    %v4019 = vpack.c.b16 %v3683, %v3679
    %v4020 = vpack.c.b16 %v3688, %v3684
    %v4021 = vpack.c.b16 %v3689, %v3685
    %v4022 = vpack.c.b16 %v3690, %v3686
    %v4023 = vpack.c.b16 %v3691, %v3687
    %v4024 = vpack.c.b16 %v3696, %v3692
    %v4025 = vpack.c.b16 %v3697, %v3693
    %v4026 = vpack.c.b16 %v3698, %v3694
    %v4027 = vpack.c.b16 %v3699, %v3695
    %v4028 = vpack.c.b16 %v3704, %v3700
    %v4029 = vpack.c.b16 %v3705, %v3701
    %v4030 = vpack.c.b16 %v3706, %v3702
    %v4031 = vpack.c.b16 %v3707, %v3703
    %v4032 = vpack.c.b16 %v3712, %v3708
    %v4033 = vpack.c.b16 %v3713, %v3709
    %v4034 = vpack.c.b16 %v3714, %v3710
    %v4035 = vpack.c.b16 %v3715, %v3711
    %v4036 = vpack.c.b16 %v3720, %v3716
    %v4037 = vpack.c.b16 %v3721, %v3717
    %v4038 = vpack.c.b16 %v3722, %v3718
    %v4039 = vpack.c.b16 %v3723, %v3719
    %v4040 = vpack.c.b16 %v3728, %v3724
    %v4041 = vpack.c.b16 %v3729, %v3725
    %v4042 = vpack.c.b16 %v3730, %v3726
    %v4043 = vpack.c.b16 %v3731, %v3727
    %v4044 = vpack.c.b16 %v3736, %v3732
    %v4045 = vpack.c.b16 %v3737, %v3733
    %v4046 = vpack.c.b16 %v3738, %v3734
    %v4047 = vpack.c.b16 %v3739, %v3735
    %v4048 = vpack.c.b16 %v3744, %v3740
    %v4049 = vpack.c.b16 %v3745, %v3741
    %v4050 = vpack.c.b16 %v3746, %v3742
    %v4051 = vpack.c.b16 %v3747, %v3743
    %v4052 = vpack.c.b16 %v3752, %v3748
    %v4053 = vpack.c.b16 %v3753, %v3749
    %v4054 = vpack.c.b16 %v3754, %v3750
    %v4055 = vpack.c.b16 %v3755, %v3751
    %v4056 = vpack.c.b16 %v3760, %v3756
    %v4057 = vpack.c.b16 %v3761, %v3757
    %v4058 = vpack.c.b16 %v3762, %v3758
    %v4059 = vpack.c.b16 %v3763, %v3759
    %v4060 = vpack.c.b16 %v3768, %v3764
    %v4061 = vpack.c.b16 %v3769, %v3765
    %v4062 = vpack.c.b16 %v3770, %v3766
    %v4063 = vpack.c.b16 %v3771, %v3767
    %v4064 = vpack.c.b16 %v3776, %v3772
    %v4065 = vpack.c.b16 %v3777, %v3773
    %v4066 = vpack.c.b16 %v3778, %v3774
    %v4067 = vpack.c.b16 %v3779, %v3775
    %v4068 = vpack.c.b16 %v3784, %v3780
    %v4069 = vpack.c.b16 %v3785, %v3781
    %v4070 = vpack.c.b16 %v3786, %v3782
    %v4071 = vpack.c.b16 %v3787, %v3783
    %v4072 = vpack.c.b16 %v3792, %v3788
    %v4073 = vpack.c.b16 %v3793, %v3789
    %v4074 = vpack.c.b16 %v3794, %v3790
    %v4075 = vpack.c.b16 %v3795, %v3791
    %v4076 = vpack.c.b16 %v3800, %v3796
    %v4077 = vpack.c.b16 %v3801, %v3797
    %v4078 = vpack.c.b16 %v3802, %v3798
    %v4079 = vpack.c.b16 %v3803, %v3799
    %v4080 = vpack.c.b16 %v3808, %v3804
    %v4081 = vpack.c.b16 %v3809, %v3805
    %v4082 = vpack.c.b16 %v3810, %v3806
    %v4083 = vpack.c.b16 %v3811, %v3807
    %v4084 = vpack.c.b16 %v3816, %v3812
    %v4085 = vpack.c.b16 %v3817, %v3813
    %v4086 = vpack.c.b16 %v3818, %v3814
    %v4087 = vpack.c.b16 %v3819, %v3815
    %v4088 = vpack.c.b16 %v3824, %v3820
    %v4089 = vpack.c.b16 %v3825, %v3821
    %v4090 = vpack.c.b16 %v3826, %v3822
    %v4091 = vpack.c.b16 %v3827, %v3823
    %v4092 = vpack.c.b16 %v3832, %v3828
    %v4093 = vpack.c.b16 %v3833, %v3829
    %v4094 = vpack.c.b16 %v3834, %v3830
    %v4095 = vpack.c.b16 %v3835, %v3831
    %v4096 = vpack.c.b16 %v3840, %v3836
    %v4097 = vpack.c.b16 %v3841, %v3837
    %v4098 = vpack.c.b16 %v3842, %v3838
    %v4099 = vpack.c.b16 %v3843, %v3839
    %4356 = vmatprep.subr.bf16.mxu0 %v3845
    %4357 = vmatpush1.bf16.msra.mxu0 %v3844
    %4358 = vmatprep.subr.bf16.mxu0 %v3849
    %4359 = vmatpush1.bf16.msra.mxu0 %v3848
    %4360 = vmatprep.subr.bf16.mxu0 %v3853
    %4361 = vmatpush1.bf16.msra.mxu0 %v3852
    %4362 = vmatprep.subr.bf16.mxu0 %v3857
    %4363 = vmatpush1.bf16.msra.mxu0 %v3856
    %4364 = vmatprep.subr.bf16.mxu0 %v3861
    %4365 = vmatpush1.bf16.msra.mxu0 %v3860
    %4366 = vmatprep.subr.bf16.mxu0 %v3865
    %4367 = vmatpush1.bf16.msra.mxu0 %v3864
    %4368 = vmatprep.subr.bf16.mxu0 %v3869
    %4369 = vmatpush1.bf16.msra.mxu0 %v3868
    %4370 = vmatprep.subr.bf16.mxu0 %v3873
    %4371 = vmatpush1.bf16.msra.mxu0 %v3872
    %4372 = vmatprep.subr.bf16.mxu0 %v3877
    %4373 = vmatpush1.bf16.msra.mxu0 %v3876
    %4374 = vmatprep.subr.bf16.mxu0 %v3881
    %4375 = vmatpush1.bf16.msra.mxu0 %v3880
    %4376 = vmatprep.subr.bf16.mxu0 %v3885
    %4377 = vmatpush1.bf16.msra.mxu0 %v3884
    %4378 = vmatprep.subr.bf16.mxu0 %v3889
    %4379 = vmatpush1.bf16.msra.mxu0 %v3888
    %4380 = vmatprep.subr.bf16.mxu0 %v3893
    %4381 = vmatpush1.bf16.msra.mxu0 %v3892
    %4382 = vmatprep.subr.bf16.mxu0 %v3897
    %4383 = vmatpush1.bf16.msra.mxu0 %v3896
    %4384 = vmatprep.subr.bf16.mxu0 %v3901
    %4385 = vmatpush1.bf16.msra.mxu0 %v3900
    %4386 = vmatprep.subr.bf16.mxu0 %v3905
    %4387 = vmatpush1.bf16.msra.mxu0 %v3904
    %4388 = vmatprep.mubr.bf16.mxu0 %v2791
    %4389 = vmatmul.mubr.bf16.gmra.mrb[0].mxu0 %v2790
    %v4390 = vpop.f32.mrb[0].mxu0
    %v4391 = vadd.f32 %v3059, %v4390
    %v4392 = vpop.f32.mrb[0].mxu0
    %v4393 = vadd.f32 %v3063, %v4392
    %v4394 = vpop.f32.mrb[0].mxu0
    %v4395 = vpop.f32.mrb[0].mxu0
    %4396 = vdwg.mxu0
    %4397 = vmatprep.subr.bf16.mxu0 %v3909
    %4398 = vmatpush1.bf16.msra.mxu0 %v3908
    %4399 = vmatprep.subr.bf16.mxu0 %v3913
    %4400 = vmatpush1.bf16.msra.mxu0 %v3912
    %4401 = vmatprep.subr.bf16.mxu0 %v3917
    %4402 = vmatpush1.bf16.msra.mxu0 %v3916
    %4403 = vmatprep.subr.bf16.mxu0 %v3921
    %4404 = vmatpush1.bf16.msra.mxu0 %v3920
    %4405 = vmatprep.subr.bf16.mxu0 %v3925
    %4406 = vmatpush1.bf16.msra.mxu0 %v3924
    %4407 = vmatprep.subr.bf16.mxu0 %v3929
    %4408 = vmatpush1.bf16.msra.mxu0 %v3928
    %4409 = vmatprep.subr.bf16.mxu0 %v3933
    %4410 = vmatpush1.bf16.msra.mxu0 %v3932
    %4411 = vmatprep.subr.bf16.mxu0 %v3937
    %4412 = vmatpush1.bf16.msra.mxu0 %v3936
    %4413 = vmatprep.subr.bf16.mxu0 %v3941
    %4414 = vmatpush1.bf16.msra.mxu0 %v3940
    %4415 = vmatprep.subr.bf16.mxu0 %v3945
    %4416 = vmatpush1.bf16.msra.mxu0 %v3944
    %4417 = vmatprep.subr.bf16.mxu0 %v3949
    %4418 = vmatpush1.bf16.msra.mxu0 %v3948
    %4419 = vmatprep.subr.bf16.mxu0 %v3953
    %4420 = vmatpush1.bf16.msra.mxu0 %v3952
    %4421 = vmatprep.subr.bf16.mxu0 %v3957
    %4422 = vmatpush1.bf16.msra.mxu0 %v3956
    %4423 = vmatprep.subr.bf16.mxu0 %v3961
    %4424 = vmatpush1.bf16.msra.mxu0 %v3960
    %4425 = vmatprep.subr.bf16.mxu0 %v3965
    %4426 = vmatpush1.bf16.msra.mxu0 %v3964
    %4427 = vmatprep.subr.bf16.mxu0 %v3969
    %4428 = vmatpush1.bf16.msra.mxu0 %v3968
    %4429 = vmatprep.mubr.bf16.mxu0 %v2793
    %4430 = vmatmul.mubr.bf16.gmra.mrb[0].mxu0 %v2792
    %v4431 = vpop.f32.mrb[0].mxu0
    %v4432 = vadd.f32 %v4391, %v4431
    %v4433 = vpop.f32.mrb[0].mxu0
    %v4434 = vadd.f32 %v4393, %v4433
    %v4435 = vpop.f32.mrb[0].mxu0
    %v4436 = vpop.f32.mrb[0].mxu0
    %4437 = vdwg.mxu0
    %4438 = vmatprep.subr.bf16.mxu0 %v3973
    %4439 = vmatpush1.bf16.msra.mxu0 %v3972
    %4440 = vmatprep.subr.bf16.mxu0 %v3977
    %4441 = vmatpush1.bf16.msra.mxu0 %v3976
    %4442 = vmatprep.subr.bf16.mxu0 %v3981
    %4443 = vmatpush1.bf16.msra.mxu0 %v3980
    %4444 = vmatprep.subr.bf16.mxu0 %v3985
    %4445 = vmatpush1.bf16.msra.mxu0 %v3984
    %4446 = vmatprep.subr.bf16.mxu0 %v3989
    %4447 = vmatpush1.bf16.msra.mxu0 %v3988
    %4448 = vmatprep.subr.bf16.mxu0 %v3993
    %4449 = vmatpush1.bf16.msra.mxu0 %v3992
    %4450 = vmatprep.subr.bf16.mxu0 %v3997
    %4451 = vmatpush1.bf16.msra.mxu0 %v3996
    %4452 = vmatprep.subr.bf16.mxu0 %v4001
    %4453 = vmatpush1.bf16.msra.mxu0 %v4000
    %4454 = vmatprep.subr.bf16.mxu0 %v4005
    %4455 = vmatpush1.bf16.msra.mxu0 %v4004
    %4456 = vmatprep.subr.bf16.mxu0 %v4009
    %4457 = vmatpush1.bf16.msra.mxu0 %v4008
    %4458 = vmatprep.subr.bf16.mxu0 %v4013
    %4459 = vmatpush1.bf16.msra.mxu0 %v4012
    %4460 = vmatprep.subr.bf16.mxu0 %v4017
    %4461 = vmatpush1.bf16.msra.mxu0 %v4016
    %4462 = vmatprep.subr.bf16.mxu0 %v4021
    %4463 = vmatpush1.bf16.msra.mxu0 %v4020
    %4464 = vmatprep.subr.bf16.mxu0 %v4025
    %4465 = vmatpush1.bf16.msra.mxu0 %v4024
    %4466 = vmatprep.subr.bf16.mxu0 %v4029
    %4467 = vmatpush1.bf16.msra.mxu0 %v4028
    %4468 = vmatprep.subr.bf16.mxu0 %v4033
    %4469 = vmatpush1.bf16.msra.mxu0 %v4032
    %4470 = vmatprep.mubr.bf16.mxu0 %v2795
    %4471 = vmatmul.mubr.bf16.gmra.mrb[0].mxu0 %v2794
    %v4472 = vpop.f32.mrb[0].mxu0
    %v4473 = vadd.f32 %v4432, %v4472
    %v4474 = vpop.f32.mrb[0].mxu0
    %v4475 = vadd.f32 %v4434, %v4474
    %v4476 = vpop.f32.mrb[0].mxu0
    %v4477 = vpop.f32.mrb[0].mxu0
    %4478 = vdwg.mxu0
    %4479 = vmatprep.subr.bf16.mxu0 %v4037
    %4480 = vmatpush1.bf16.msra.mxu0 %v4036
    %4481 = vmatprep.subr.bf16.mxu0 %v4041
    %4482 = vmatpush1.bf16.msra.mxu0 %v4040
    %4483 = vmatprep.subr.bf16.mxu0 %v4045
    %4484 = vmatpush1.bf16.msra.mxu0 %v4044
    %4485 = vmatprep.subr.bf16.mxu0 %v4049
    %4486 = vmatpush1.bf16.msra.mxu0 %v4048
    %4487 = vmatprep.subr.bf16.mxu0 %v4053
    %4488 = vmatpush1.bf16.msra.mxu0 %v4052
    %4489 = vmatprep.subr.bf16.mxu0 %v4057
    %4490 = vmatpush1.bf16.msra.mxu0 %v4056
    %4491 = vmatprep.subr.bf16.mxu0 %v4061
    %4492 = vmatpush1.bf16.msra.mxu0 %v4060
    %4493 = vmatprep.subr.bf16.mxu0 %v4065
    %4494 = vmatpush1.bf16.msra.mxu0 %v4064
    %4495 = vmatprep.subr.bf16.mxu0 %v4069
    %4496 = vmatpush1.bf16.msra.mxu0 %v4068
    %4497 = vmatprep.subr.bf16.mxu0 %v4073
    %4498 = vmatpush1.bf16.msra.mxu0 %v4072
    %4499 = vmatprep.subr.bf16.mxu0 %v4077
    %4500 = vmatpush1.bf16.msra.mxu0 %v4076
    %4501 = vmatprep.subr.bf16.mxu0 %v4081
    %4502 = vmatpush1.bf16.msra.mxu0 %v4080
    %4503 = vmatprep.subr.bf16.mxu0 %v4085
    %4504 = vmatpush1.bf16.msra.mxu0 %v4084
    %4505 = vmatprep.subr.bf16.mxu0 %v4089
    %4506 = vmatpush1.bf16.msra.mxu0 %v4088
    %4507 = vmatprep.subr.bf16.mxu0 %v4093
    %4508 = vmatpush1.bf16.msra.mxu0 %v4092
    %4509 = vmatprep.subr.bf16.mxu0 %v4097
    %4510 = vmatpush1.bf16.msra.mxu0 %v4096
    %4511 = vmatprep.mubr.bf16.mxu0 %v2797
    %4512 = vmatmul.mubr.bf16.gmra.mrb[0].mxu0 %v2796
    %v4513 = vpop.f32.mrb[0].mxu0
    %v4514 = vadd.f32 %v4473, %v4513
    %v4515 = vpop.f32.mrb[0].mxu0
    %v4516 = vadd.f32 %v4475, %v4515
    %v4517 = vpop.f32.mrb[0].mxu0
    %v4518 = vpop.f32.mrb[0].mxu0
    %4519 = vdwg.mxu0
    %4520 = vmatprep.subr.bf16.mxu0 %v3847
    %4521 = vmatpush1.bf16.msra.mxu0 %v3846
    %4522 = vmatprep.subr.bf16.mxu0 %v3851
    %4523 = vmatpush1.bf16.msra.mxu0 %v3850
    %4524 = vmatprep.subr.bf16.mxu0 %v3855
    %4525 = vmatpush1.bf16.msra.mxu0 %v3854
    %4526 = vmatprep.subr.bf16.mxu0 %v3859
    %4527 = vmatpush1.bf16.msra.mxu0 %v3858
    %4528 = vmatprep.subr.bf16.mxu0 %v3863
    %4529 = vmatpush1.bf16.msra.mxu0 %v3862
    %4530 = vmatprep.subr.bf16.mxu0 %v3867
    %4531 = vmatpush1.bf16.msra.mxu0 %v3866
    %4532 = vmatprep.subr.bf16.mxu0 %v3871
    %4533 = vmatpush1.bf16.msra.mxu0 %v3870
    %4534 = vmatprep.subr.bf16.mxu0 %v3875
    %4535 = vmatpush1.bf16.msra.mxu0 %v3874
    %4536 = vmatprep.subr.bf16.mxu0 %v3879
    %4537 = vmatpush1.bf16.msra.mxu0 %v3878
    %4538 = vmatprep.subr.bf16.mxu0 %v3883
    %4539 = vmatpush1.bf16.msra.mxu0 %v3882
    %4540 = vmatprep.subr.bf16.mxu0 %v3887
    %4541 = vmatpush1.bf16.msra.mxu0 %v3886
    %4542 = vmatprep.subr.bf16.mxu0 %v3891
    %4543 = vmatpush1.bf16.msra.mxu0 %v3890
    %4544 = vmatprep.subr.bf16.mxu0 %v3895
    %4545 = vmatpush1.bf16.msra.mxu0 %v3894
    %4546 = vmatprep.subr.bf16.mxu0 %v3899
    %4547 = vmatpush1.bf16.msra.mxu0 %v3898
    %4548 = vmatprep.subr.bf16.mxu0 %v3903
    %4549 = vmatpush1.bf16.msra.mxu0 %v3902
    %4550 = vmatprep.subr.bf16.mxu0 %v3907
    %4551 = vmatpush1.bf16.msra.mxu0 %v3906
    %4552 = vmatprep.mubr.bf16.mxu0 %v2791
    %4553 = vmatmul.mubr.bf16.gmra.mrb[0].mxu0 %v2790
    %v4554 = vpop.f32.mrb[0].mxu0
    %v4555 = vadd.f32 %v3067, %v4554
    %v4556 = vpop.f32.mrb[0].mxu0
    %v4557 = vadd.f32 %v3071, %v4556
    %v4558 = vpop.f32.mrb[0].mxu0
    %v4559 = vpop.f32.mrb[0].mxu0
    %4560 = vdwg.mxu0
    %4561 = vmatprep.subr.bf16.mxu0 %v3911
    %4562 = vmatpush1.bf16.msra.mxu0 %v3910
    %4563 = vmatprep.subr.bf16.mxu0 %v3915
    %4564 = vmatpush1.bf16.msra.mxu0 %v3914
    %4565 = vmatprep.subr.bf16.mxu0 %v3919
    %4566 = vmatpush1.bf16.msra.mxu0 %v3918
    %4567 = vmatprep.subr.bf16.mxu0 %v3923
    %4568 = vmatpush1.bf16.msra.mxu0 %v3922
    %4569 = vmatprep.subr.bf16.mxu0 %v3927
    %4570 = vmatpush1.bf16.msra.mxu0 %v3926
    %4571 = vmatprep.subr.bf16.mxu0 %v3931
    %4572 = vmatpush1.bf16.msra.mxu0 %v3930
    %4573 = vmatprep.subr.bf16.mxu0 %v3935
    %4574 = vmatpush1.bf16.msra.mxu0 %v3934
    %4575 = vmatprep.subr.bf16.mxu0 %v3939
    %4576 = vmatpush1.bf16.msra.mxu0 %v3938
    %4577 = vmatprep.subr.bf16.mxu0 %v3943
    %4578 = vmatpush1.bf16.msra.mxu0 %v3942
    %4579 = vmatprep.subr.bf16.mxu0 %v3947
    %4580 = vmatpush1.bf16.msra.mxu0 %v3946
    %4581 = vmatprep.subr.bf16.mxu0 %v3951
    %4582 = vmatpush1.bf16.msra.mxu0 %v3950
    %4583 = vmatprep.subr.bf16.mxu0 %v3955
    %4584 = vmatpush1.bf16.msra.mxu0 %v3954
    %4585 = vmatprep.subr.bf16.mxu0 %v3959
    %4586 = vmatpush1.bf16.msra.mxu0 %v3958
    %4587 = vmatprep.subr.bf16.mxu0 %v3963
    %4588 = vmatpush1.bf16.msra.mxu0 %v3962
    %4589 = vmatprep.subr.bf16.mxu0 %v3967
    %4590 = vmatpush1.bf16.msra.mxu0 %v3966
    %4591 = vmatprep.subr.bf16.mxu0 %v3971
    %4592 = vmatpush1.bf16.msra.mxu0 %v3970
    %4593 = vmatprep.mubr.bf16.mxu0 %v2793
    %4594 = vmatmul.mubr.bf16.gmra.mrb[0].mxu0 %v2792
    %v4595 = vpop.f32.mrb[0].mxu0
    %v4596 = vadd.f32 %v4555, %v4595
    %v4597 = vpop.f32.mrb[0].mxu0
    %v4598 = vadd.f32 %v4557, %v4597
    %v4599 = vpop.f32.mrb[0].mxu0
    %v4600 = vpop.f32.mrb[0].mxu0
    %4601 = vdwg.mxu0
    %4602 = vmatprep.subr.bf16.mxu0 %v3975
    %4603 = vmatpush1.bf16.msra.mxu0 %v3974
    %4604 = vmatprep.subr.bf16.mxu0 %v3979
    %4605 = vmatpush1.bf16.msra.mxu0 %v3978
    %4606 = vmatprep.subr.bf16.mxu0 %v3983
    %4607 = vmatpush1.bf16.msra.mxu0 %v3982
    %4608 = vmatprep.subr.bf16.mxu0 %v3987
    %4609 = vmatpush1.bf16.msra.mxu0 %v3986
    %4610 = vmatprep.subr.bf16.mxu0 %v3991
    %4611 = vmatpush1.bf16.msra.mxu0 %v3990
    %4612 = vmatprep.subr.bf16.mxu0 %v3995
    %4613 = vmatpush1.bf16.msra.mxu0 %v3994
    %4614 = vmatprep.subr.bf16.mxu0 %v3999
    %4615 = vmatpush1.bf16.msra.mxu0 %v3998
    %4616 = vmatprep.subr.bf16.mxu0 %v4003
    %4617 = vmatpush1.bf16.msra.mxu0 %v4002
    %4618 = vmatprep.subr.bf16.mxu0 %v4007
    %4619 = vmatpush1.bf16.msra.mxu0 %v4006
    %4620 = vmatprep.subr.bf16.mxu0 %v4011
    %4621 = vmatpush1.bf16.msra.mxu0 %v4010
    %4622 = vmatprep.subr.bf16.mxu0 %v4015
    %4623 = vmatpush1.bf16.msra.mxu0 %v4014
    %4624 = vmatprep.subr.bf16.mxu0 %v4019
    %4625 = vmatpush1.bf16.msra.mxu0 %v4018
    %4626 = vmatprep.subr.bf16.mxu0 %v4023
    %4627 = vmatpush1.bf16.msra.mxu0 %v4022
    %4628 = vmatprep.subr.bf16.mxu0 %v4027
    %4629 = vmatpush1.bf16.msra.mxu0 %v4026
    %4630 = vmatprep.subr.bf16.mxu0 %v4031
    %4631 = vmatpush1.bf16.msra.mxu0 %v4030
    %4632 = vmatprep.subr.bf16.mxu0 %v4035
    %4633 = vmatpush1.bf16.msra.mxu0 %v4034
    %4634 = vmatprep.mubr.bf16.mxu0 %v2795
    %4635 = vmatmul.mubr.bf16.gmra.mrb[0].mxu0 %v2794
    %v4636 = vpop.f32.mrb[0].mxu0
    %v4637 = vadd.f32 %v4596, %v4636
    %v4638 = vpop.f32.mrb[0].mxu0
    %v4639 = vadd.f32 %v4598, %v4638
    %v4640 = vpop.f32.mrb[0].mxu0
    %v4641 = vpop.f32.mrb[0].mxu0
    %4642 = vdwg.mxu0
    %4643 = vmatprep.subr.bf16.mxu0 %v4039
    %4644 = vmatpush1.bf16.msra.mxu0 %v4038
    %4645 = vmatprep.subr.bf16.mxu0 %v4043
    %4646 = vmatpush1.bf16.msra.mxu0 %v4042
    %4647 = vmatprep.subr.bf16.mxu0 %v4047
    %4648 = vmatpush1.bf16.msra.mxu0 %v4046
    %4649 = vmatprep.subr.bf16.mxu0 %v4051
    %4650 = vmatpush1.bf16.msra.mxu0 %v4050
    %4651 = vmatprep.subr.bf16.mxu0 %v4055
    %4652 = vmatpush1.bf16.msra.mxu0 %v4054
    %4653 = vmatprep.subr.bf16.mxu0 %v4059
    %4654 = vmatpush1.bf16.msra.mxu0 %v4058
    %4655 = vmatprep.subr.bf16.mxu0 %v4063
    %4656 = vmatpush1.bf16.msra.mxu0 %v4062
    %4657 = vmatprep.subr.bf16.mxu0 %v4067
    %4658 = vmatpush1.bf16.msra.mxu0 %v4066
    %4659 = vmatprep.subr.bf16.mxu0 %v4071
    %4660 = vmatpush1.bf16.msra.mxu0 %v4070
    %4661 = vmatprep.subr.bf16.mxu0 %v4075
    %4662 = vmatpush1.bf16.msra.mxu0 %v4074
    %4663 = vmatprep.subr.bf16.mxu0 %v4079
    %4664 = vmatpush1.bf16.msra.mxu0 %v4078
    %4665 = vmatprep.subr.bf16.mxu0 %v4083
    %4666 = vmatpush1.bf16.msra.mxu0 %v4082
    %4667 = vmatprep.subr.bf16.mxu0 %v4087
    %4668 = vmatpush1.bf16.msra.mxu0 %v4086
    %4669 = vmatprep.subr.bf16.mxu0 %v4091
    %4670 = vmatpush1.bf16.msra.mxu0 %v4090
    %4671 = vmatprep.subr.bf16.mxu0 %v4095
    %4672 = vmatpush1.bf16.msra.mxu0 %v4094
    %4673 = vmatprep.subr.bf16.mxu0 %v4099
    %4674 = vmatpush1.bf16.msra.mxu0 %v4098
    %4675 = vmatprep.mubr.bf16.mxu0 %v2797
    %4676 = vmatmul.mubr.bf16.gmra.mrb[0].mxu0 %v2796
    %v4677 = vpop.f32.mrb[0].mxu0
    %v4678 = vadd.f32 %v4637, %v4677
    %v4679 = vpop.f32.mrb[0].mxu0
    %v4680 = vadd.f32 %v4639, %v4679
    %v4681 = vpop.f32.mrb[0].mxu0
    %v4682 = vpop.f32.mrb[0].mxu0
    %4683 = vdwg.mxu0
    %4684 = vst [vmem:[%s9] sm:$0xff] %v4514
    %4685 = vst [vmem:[%s9 + $0x8] sm:$0xff] %v4516
    %4686 = vst [vmem:[%s9 + $0x10] sm:$0xff] %v4678
    %4687 = vst [vmem:[%s9 + $0x18] sm:$0xff] %v4680
    // Predicated region
    $region54: #{generator_forward.1} parent=1 // pred_check
      _
    $region55: #{generator_forward.1} parent=1 // pred_check_branch
      %4689 = sbr.rel (0) target = $region57
    $region56: #{generator_forward.1} parent=1 // pred_region
      _
    $region57: #{generator_forward.1} parent=1 // pred_fallthru
      _
    // Predicated region
    $region58: #{generator_forward.1} parent=1 // pred_check
      _
    $region59: #{generator_forward.1} parent=1 // pred_check_branch
      %4691 = sbr.rel (0) target = $region61
    $region60: #{generator_forward.1} parent=1 // pred_region
      _
    $region61: #{generator_forward.1} parent=1 // pred_fallthru
      _
    %4692 = vsyncpa [#allocation3], 1
    %4693 = vsyncpa [#allocation5], 1
    %4694 = vsyncpa [#allocation8], 1

</llo_original>
